<compile_context>
chip_gen: v5e
topology: v5e:2x2
jax: 0.10.0
libtpu: 0.0.40
codegen_flags: <defaults>
</compile_context>

<pallas_src>
import functools

import jax
import jax.numpy as jnp
from jax.experimental import pallas as pl
from jax.experimental.pallas import tpu as pltpu


def _conv_norm_lrelu_kernel(x_ref, w_ref, g_ref, b_ref, o_ref, acc_ref,
                            *, H, W, KH, KW, eps, neg_slope):
    # x_ref:   (1, Hp, Wp, Cin)   reflection-padded input (one image), native dtype
    # w_ref:   (KH*KW, Cin, Cp)   per-tap conv weights, Cout zero-padded to Cp (lane-dense)
    # g_ref:   (1, 1, Cp)         instance-norm gamma (f32)
    # b_ref:   (1, 1, Cp)         instance-norm beta  (f32)
    # o_ref:   (1, H, W, Cp)      output tile (lane-dense last dim)
    # acc_ref: (H, W, Cp) f32     VMEM scratch conv accumulator
    x = x_ref[0]                                    # (Hp, Wp, Cin)

    # 3x3 conv (stride 1) = 9 shifted (H,W,Cin)x(Cin,Cp) MXU contractions,
    # accumulated in f32 in VMEM scratch. No operand up-casts.
    for dy in range(KH):
        for dx in range(KW):
            t = dy * KW + dx
            contrib = jnp.einsum("hwc,cd->hwd",
                                 x[dy:dy + H, dx:dx + W, :], w_ref[t],
                                 preferred_element_type=jnp.float32)
            if t == 0:
                acc_ref[...] = contrib              # first tap: assign (no zero-fill sweep)
            else:
                acc_ref[...] += contrib

    acc = acc_ref[...]                              # (H, W, Cp) f32

    # InstanceNorm2d: per-channel stats over spatial dims, single pass (E[x], E[x^2]),
    # biased variance, eps, affine. Matches PyTorch semantics.
    inv_n = 1.0 / (H * W)
    s1 = jnp.sum(acc, axis=(0, 1), keepdims=True)           # (1, 1, Cp)
    s2 = jnp.sum(acc * acc, axis=(0, 1), keepdims=True)     # (1, 1, Cp)
    mean = s1 * inv_n
    var = s2 * inv_n - mean * mean
    scale = g_ref[...] * jax.lax.rsqrt(var + eps)            # (1, 1, Cp)
    shift = b_ref[...] - mean * scale
    y = acc * scale + shift

    # LeakyReLU(0.2)
    y = jnp.where(y >= 0, y, neg_slope * y)
    o_ref[0] = y.astype(o_ref.dtype)


def conv_norm_lrelu(x_nchw, weight_oihw, gamma, beta,
                    *, padding=1, eps=1e-5, neg_slope=0.2):
    """Forward pass of ConvNormLReLU. x_nchw: (N, Cin, H, W). Returns (N, Cout, H, W)."""
    N, Cin, H, W = x_nchw.shape
    Cout, Cin_w, KH, KW = weight_oihw.shape
    assert Cin == Cin_w, "groups=1 conv expected"
    assert 2 * padding == KH - 1 == KW - 1, "same-size output expected (e.g. 3x3, pad=1)"

    LANE = 128
    Cp = ((Cout + LANE - 1) // LANE) * LANE          # lane-dense padded channel count

    # Glue (plain JAX): layout transposes, reflection pad, per-tap weights, channel pad.
    x_nhwc = jnp.transpose(x_nchw, (0, 2, 3, 1))
    x_pad = jnp.pad(x_nhwc,
                    ((0, 0), (padding, padding), (padding, padding), (0, 0)),
                    mode="reflect")

    w_tap = jnp.transpose(weight_oihw, (2, 3, 1, 0)).reshape(KH * KW, Cin, Cout)
    w_tap = jnp.pad(w_tap, ((0, 0), (0, 0), (0, Cp - Cout))).astype(x_nchw.dtype)
    g_pad = jnp.pad(gamma.reshape(1, 1, Cout).astype(jnp.float32),
                    ((0, 0), (0, 0), (0, Cp - Cout)))
    b_pad = jnp.pad(beta.reshape(1, 1, Cout).astype(jnp.float32),
                    ((0, 0), (0, 0), (0, Cp - Cout)))

    Hp, Wp = H + 2 * padding, W + 2 * padding

    kernel = functools.partial(_conv_norm_lrelu_kernel,
                               H=H, W=W, KH=KH, KW=KW, eps=eps, neg_slope=neg_slope)

    out = pl.pallas_call(
        kernel,
        out_shape=jax.ShapeDtypeStruct((N, H, W, Cp), x_nchw.dtype),
        grid_spec=pltpu.PrefetchScalarGridSpec(
            num_scalar_prefetch=0,
            grid=(N,),  # one grid step per image (instance-norm stats need the whole image)
            in_specs=[
                pl.BlockSpec((1, Hp, Wp, Cin), lambda n: (n, 0, 0, 0)),
                pl.BlockSpec((KH * KW, Cin, Cp), lambda n: (0, 0, 0)),
                pl.BlockSpec((1, 1, Cp), lambda n: (0, 0, 0)),
                pl.BlockSpec((1, 1, Cp), lambda n: (0, 0, 0)),
            ],
            out_specs=pl.BlockSpec((1, H, W, Cp), lambda n: (n, 0, 0, 0)),
            scratch_shapes=[pltpu.VMEM((H, W, Cp), jnp.float32)],
        ),
        compiler_params=pltpu.CompilerParams(
            dimension_semantics=("parallel",),        # v7x: batch splits across both TCs
            vmem_limit_bytes=48 * 1024 * 1024,        # above v5e/v6e defaults, < v7x 64 MiB
        ),
    )(x_pad, w_tap, g_pad, b_pad)

    out = out[..., :Cout]                             # drop padded channels
    return jnp.transpose(out, (0, 3, 1, 2))           # back to NCHW


def _reference(x_nchw, weight_oihw, gamma, beta, *, padding=1, eps=1e-5, neg_slope=0.2):
    """Pure-JAX reference matching PyTorch semantics, for sanity checking."""
    x = jnp.pad(x_nchw, ((0, 0), (0, 0), (padding, padding), (padding, padding)),
                mode="reflect")
    y = jax.lax.conv_general_dilated(
        x.astype(jnp.float32), weight_oihw.astype(jnp.float32),
        window_strides=(1, 1), padding="VALID",
        dimension_numbers=("NCHW", "OIHW", "NCHW"))
    mean = jnp.mean(y, axis=(2, 3), keepdims=True)
    var = jnp.mean((y - mean) ** 2, axis=(2, 3), keepdims=True)
    y = (y - mean) * jax.lax.rsqrt(var + eps)
    y = y * gamma.reshape(1, -1, 1, 1) + beta.reshape(1, -1, 1, 1)
    return jnp.where(y >= 0, y, neg_slope * y).astype(x_nchw.dtype)


if __name__ == "__main__":
    # Small shapes consistent with the module: batch=2, in_ch=4, out_ch=8, 16x16 spatial.
    N, Cin, Cout, H, W, K = 2, 4, 8, 16, 16, 3

    key = jax.random.PRNGKey(0)
    kx, kw, kg, kb = jax.random.split(key, 4)
    x = jax.random.normal(kx, (N, Cin, H, W), dtype=jnp.float32)
    weight = jax.random.normal(kw, (Cout, Cin, K, K), dtype=jnp.float32) * 0.1
    gamma = 1.0 + 0.1 * jax.random.normal(kg, (Cout,), dtype=jnp.float32)
    beta = 0.1 * jax.random.normal(kb, (Cout,), dtype=jnp.float32)

    out = jax.block_until_ready(conv_norm_lrelu(x, weight, gamma, beta))
    ref = jax.block_until_ready(_reference(x, weight, gamma, beta))

    assert out.shape == (N, Cout, H, W)
    assert jnp.allclose(out, ref, atol=3e-4, rtol=3e-4), "mismatch vs reference"

    print("KERNEL_OK")
</pallas_src>

<mosaic_0001>
module attributes {stable_mosaic.version = 11 : i64} {
  func.func @_conv_norm_lrelu_kernel(%arg0: i32, %arg1: memref<1x18x18x4xf32, #tpu.memory_space<vmem>>, %arg2: memref<9x4x128xf32, #tpu.memory_space<vmem>>, %arg3: memref<1x1x128xf32, #tpu.memory_space<vmem>>, %arg4: memref<1x1x128xf32, #tpu.memory_space<vmem>>, %arg5: memref<1x16x16x128xf32, #tpu.memory_space<vmem>>, %arg6: memref<16x16x128xf32, #tpu.memory_space<vmem>>) attributes {dimension_semantics = [#tpu.dimension_semantics<parallel>], iteration_bounds = array<i64: 2>, scalar_prefetch = 0 : i64, scratch_operands = 1 : i64, tpu.core_type = #tpu.core_type<tc>, window_params = [{transform_indices = @transform_0, window_bounds = array<i64: 1, 18, 18, 4>}, {pipeline_mode = #tpu.pipeline_mode<synchronous>, transform_indices = @transform_1, window_bounds = array<i64: 9, 4, 128>}, {pipeline_mode = #tpu.pipeline_mode<synchronous>, transform_indices = @transform_2, window_bounds = array<i64: 1, 1, 128>}, {pipeline_mode = #tpu.pipeline_mode<synchronous>, transform_indices = @transform_3, window_bounds = array<i64: 1, 1, 128>}, {transform_indices = @transform_4, window_bounds = array<i64: 1, 16, 16, 128>}]} {
    %c0 = arith.constant 0 : index
    %c0_0 = arith.constant 0 : index
    %c0_1 = arith.constant 0 : index
    %c0_2 = arith.constant 0 : index
    %0 = vector.load %arg1[%c0, %c0_0, %c0_1, %c0_2] : memref<1x18x18x4xf32, #tpu.memory_space<vmem>>, vector<1x18x18x4xf32>
    %1 = vector.shape_cast %0 : vector<1x18x18x4xf32> to vector<18x18x4xf32>
    %2 = vector.extract_strided_slice %1 {offsets = [0, 0, 0], sizes = [16, 16, 4], strides = [1, 1, 1]} : vector<18x18x4xf32> to vector<16x16x4xf32>
    %c0_3 = arith.constant 0 : index
    %c0_4 = arith.constant 0 : index
    %c0_5 = arith.constant 0 : index
    %3 = vector.load %arg2[%c0_3, %c0_4, %c0_5] : memref<9x4x128xf32, #tpu.memory_space<vmem>>, vector<1x4x128xf32>
    %4 = vector.shape_cast %3 : vector<1x4x128xf32> to vector<4x128xf32>
    "tpu.trace_start"() <{level = 10 : i32, message = "hwc,cd->hwd"}> : () -> ()
    %cst = arith.constant dense<0.000000e+00> : vector<16x16x128xf32>
    %5 = tpu.matmul %2, %4, %cst {dimension_numbers = #tpu.dot_dimension_numbers<[2], [0], [0, 1], [1], [0, 0, 0, 1, 1, 1], [], []>} : vector<16x16x4xf32>, vector<4x128xf32>, vector<16x16x128xf32> -> vector<16x16x128xf32>
    "tpu.trace_stop"() : () -> ()
    %c0_6 = arith.constant 0 : index
    %c0_7 = arith.constant 0 : index
    %c0_8 = arith.constant 0 : index
    %6 = vector.load %arg6[%c0_6, %c0_7, %c0_8] : memref<16x16x128xf32, #tpu.memory_space<vmem>>, vector<16x16x128xf32>
    tpu.vector_store %arg6[%c0_6, %c0_7, %c0_8], %5 {strides = array<i32>} : memref<16x16x128xf32, #tpu.memory_space<vmem>>, vector<16x16x128xf32>,
    %7 = vector.extract_strided_slice %1 {offsets = [0, 1, 0], sizes = [16, 16, 4], strides = [1, 1, 1]} : vector<18x18x4xf32> to vector<16x16x4xf32>
    %c1 = arith.constant 1 : index
    %c0_9 = arith.constant 0 : index
    %c0_10 = arith.constant 0 : index
    %8 = vector.load %arg2[%c1, %c0_9, %c0_10] : memref<9x4x128xf32, #tpu.memory_space<vmem>>, vector<1x4x128xf32>
    %9 = vector.shape_cast %8 : vector<1x4x128xf32> to vector<4x128xf32>
    "tpu.trace_start"() <{level = 10 : i32, message = "hwc,cd->hwd"}> : () -> ()
    %cst_11 = arith.constant dense<0.000000e+00> : vector<16x16x128xf32>
    %10 = tpu.matmul %7, %9, %cst_11 {dimension_numbers = #tpu.dot_dimension_numbers<[2], [0], [0, 1], [1], [0, 0, 0, 1, 1, 1], [], []>} : vector<16x16x4xf32>, vector<4x128xf32>, vector<16x16x128xf32> -> vector<16x16x128xf32>
    "tpu.trace_stop"() : () -> ()
    %c0_12 = arith.constant 0 : index
    %c0_13 = arith.constant 0 : index
    %c0_14 = arith.constant 0 : index
    %11 = vector.load %arg6[%c0_12, %c0_13, %c0_14] : memref<16x16x128xf32, #tpu.memory_space<vmem>>, vector<16x16x128xf32>
    %12 = arith.addf %11, %10 : vector<16x16x128xf32>
    %c0_15 = arith.constant 0 : index
    %c0_16 = arith.constant 0 : index
    %c0_17 = arith.constant 0 : index
    %13 = vector.load %arg6[%c0_15, %c0_16, %c0_17] : memref<16x16x128xf32, #tpu.memory_space<vmem>>, vector<16x16x128xf32>
    tpu.vector_store %arg6[%c0_15, %c0_16, %c0_17], %12 {strides = array<i32>} : memref<16x16x128xf32, #tpu.memory_space<vmem>>, vector<16x16x128xf32>,
    %14 = vector.extract_strided_slice %1 {offsets = [0, 2, 0], sizes = [16, 16, 4], strides = [1, 1, 1]} : vector<18x18x4xf32> to vector<16x16x4xf32>
    %c2 = arith.constant 2 : index
    %c0_18 = arith.constant 0 : index
    %c0_19 = arith.constant 0 : index
    %15 = vector.load %arg2[%c2, %c0_18, %c0_19] : memref<9x4x128xf32, #tpu.memory_space<vmem>>, vector<1x4x128xf32>
    %16 = vector.shape_cast %15 : vector<1x4x128xf32> to vector<4x128xf32>
    "tpu.trace_start"() <{level = 10 : i32, message = "hwc,cd->hwd"}> : () -> ()
    %cst_20 = arith.constant dense<0.000000e+00> : vector<16x16x128xf32>
    %17 = tpu.matmul %14, %16, %cst_20 {dimension_numbers = #tpu.dot_dimension_numbers<[2], [0], [0, 1], [1], [0, 0, 0, 1, 1, 1], [], []>} : vector<16x16x4xf32>, vector<4x128xf32>, vector<16x16x128xf32> -> vector<16x16x128xf32>
    "tpu.trace_stop"() : () -> ()
    %c0_21 = arith.constant 0 : index
    %c0_22 = arith.constant 0 : index
    %c0_23 = arith.constant 0 : index
    %18 = vector.load %arg6[%c0_21, %c0_22, %c0_23] : memref<16x16x128xf32, #tpu.memory_space<vmem>>, vector<16x16x128xf32>
    %19 = arith.addf %18, %17 : vector<16x16x128xf32>
    %c0_24 = arith.constant 0 : index
    %c0_25 = arith.constant 0 : index
    %c0_26 = arith.constant 0 : index
    %20 = vector.load %arg6[%c0_24, %c0_25, %c0_26] : memref<16x16x128xf32, #tpu.memory_space<vmem>>, vector<16x16x128xf32>
    tpu.vector_store %arg6[%c0_24, %c0_25, %c0_26], %19 {strides = array<i32>} : memref<16x16x128xf32, #tpu.memory_space<vmem>>, vector<16x16x128xf32>,
    %21 = vector.extract_strided_slice %1 {offsets = [1, 0, 0], sizes = [16, 16, 4], strides = [1, 1, 1]} : vector<18x18x4xf32> to vector<16x16x4xf32>
    %c3 = arith.constant 3 : index
    %c0_27 = arith.constant 0 : index
    %c0_28 = arith.constant 0 : index
    %22 = vector.load %arg2[%c3, %c0_27, %c0_28] : memref<9x4x128xf32, #tpu.memory_space<vmem>>, vector<1x4x128xf32>
    %23 = vector.shape_cast %22 : vector<1x4x128xf32> to vector<4x128xf32>
    "tpu.trace_start"() <{level = 10 : i32, message = "hwc,cd->hwd"}> : () -> ()
    %cst_29 = arith.constant dense<0.000000e+00> : vector<16x16x128xf32>
    %24 = tpu.matmul %21, %23, %cst_29 {dimension_numbers = #tpu.dot_dimension_numbers<[2], [0], [0, 1], [1], [0, 0, 0, 1, 1, 1], [], []>} : vector<16x16x4xf32>, vector<4x128xf32>, vector<16x16x128xf32> -> vector<16x16x128xf32>
    "tpu.trace_stop"() : () -> ()
    %c0_30 = arith.constant 0 : index
    %c0_31 = arith.constant 0 : index
    %c0_32 = arith.constant 0 : index
    %25 = vector.load %arg6[%c0_30, %c0_31, %c0_32] : memref<16x16x128xf32, #tpu.memory_space<vmem>>, vector<16x16x128xf32>
    %26 = arith.addf %25, %24 : vector<16x16x128xf32>
    %c0_33 = arith.constant 0 : index
    %c0_34 = arith.constant 0 : index
    %c0_35 = arith.constant 0 : index
    %27 = vector.load %arg6[%c0_33, %c0_34, %c0_35] : memref<16x16x128xf32, #tpu.memory_space<vmem>>, vector<16x16x128xf32>
    tpu.vector_store %arg6[%c0_33, %c0_34, %c0_35], %26 {strides = array<i32>} : memref<16x16x128xf32, #tpu.memory_space<vmem>>, vector<16x16x128xf32>,
    %28 = vector.extract_strided_slice %1 {offsets = [1, 1, 0], sizes = [16, 16, 4], strides = [1, 1, 1]} : vector<18x18x4xf32> to vector<16x16x4xf32>
    %c4 = arith.constant 4 : index
    %c0_36 = arith.constant 0 : index
    %c0_37 = arith.constant 0 : index
    %29 = vector.load %arg2[%c4, %c0_36, %c0_37] : memref<9x4x128xf32, #tpu.memory_space<vmem>>, vector<1x4x128xf32>
    %30 = vector.shape_cast %29 : vector<1x4x128xf32> to vector<4x128xf32>
    "tpu.trace_start"() <{level = 10 : i32, message = "hwc,cd->hwd"}> : () -> ()
    %cst_38 = arith.constant dense<0.000000e+00> : vector<16x16x128xf32>
    %31 = tpu.matmul %28, %30, %cst_38 {dimension_numbers = #tpu.dot_dimension_numbers<[2], [0], [0, 1], [1], [0, 0, 0, 1, 1, 1], [], []>} : vector<16x16x4xf32>, vector<4x128xf32>, vector<16x16x128xf32> -> vector<16x16x128xf32>
    "tpu.trace_stop"() : () -> ()
    %c0_39 = arith.constant 0 : index
    %c0_40 = arith.constant 0 : index
    %c0_41 = arith.constant 0 : index
    %32 = vector.load %arg6[%c0_39, %c0_40, %c0_41] : memref<16x16x128xf32, #tpu.memory_space<vmem>>, vector<16x16x128xf32>
    %33 = arith.addf %32, %31 : vector<16x16x128xf32>
    %c0_42 = arith.constant 0 : index
    %c0_43 = arith.constant 0 : index
    %c0_44 = arith.constant 0 : index
    %34 = vector.load %arg6[%c0_42, %c0_43, %c0_44] : memref<16x16x128xf32, #tpu.memory_space<vmem>>, vector<16x16x128xf32>
    tpu.vector_store %arg6[%c0_42, %c0_43, %c0_44], %33 {strides = array<i32>} : memref<16x16x128xf32, #tpu.memory_space<vmem>>, vector<16x16x128xf32>,
    %35 = vector.extract_strided_slice %1 {offsets = [1, 2, 0], sizes = [16, 16, 4], strides = [1, 1, 1]} : vector<18x18x4xf32> to vector<16x16x4xf32>
    %c5 = arith.constant 5 : index
    %c0_45 = arith.constant 0 : index
    %c0_46 = arith.constant 0 : index
    %36 = vector.load %arg2[%c5, %c0_45, %c0_46] : memref<9x4x128xf32, #tpu.memory_space<vmem>>, vector<1x4x128xf32>
    %37 = vector.shape_cast %36 : vector<1x4x128xf32> to vector<4x128xf32>
    "tpu.trace_start"() <{level = 10 : i32, message = "hwc,cd->hwd"}> : () -> ()
    %cst_47 = arith.constant dense<0.000000e+00> : vector<16x16x128xf32>
    %38 = tpu.matmul %35, %37, %cst_47 {dimension_numbers = #tpu.dot_dimension_numbers<[2], [0], [0, 1], [1], [0, 0, 0, 1, 1, 1], [], []>} : vector<16x16x4xf32>, vector<4x128xf32>, vector<16x16x128xf32> -> vector<16x16x128xf32>
    "tpu.trace_stop"() : () -> ()
    %c0_48 = arith.constant 0 : index
    %c0_49 = arith.constant 0 : index
    %c0_50 = arith.constant 0 : index
    %39 = vector.load %arg6[%c0_48, %c0_49, %c0_50] : memref<16x16x128xf32, #tpu.memory_space<vmem>>, vector<16x16x128xf32>
    %40 = arith.addf %39, %38 : vector<16x16x128xf32>
    %c0_51 = arith.constant 0 : index
    %c0_52 = arith.constant 0 : index
    %c0_53 = arith.constant 0 : index
    %41 = vector.load %arg6[%c0_51, %c0_52, %c0_53] : memref<16x16x128xf32, #tpu.memory_space<vmem>>, vector<16x16x128xf32>
    tpu.vector_store %arg6[%c0_51, %c0_52, %c0_53], %40 {strides = array<i32>} : memref<16x16x128xf32, #tpu.memory_space<vmem>>, vector<16x16x128xf32>,
    %42 = vector.extract_strided_slice %1 {offsets = [2, 0, 0], sizes = [16, 16, 4], strides = [1, 1, 1]} : vector<18x18x4xf32> to vector<16x16x4xf32>
    %c6 = arith.constant 6 : index
    %c0_54 = arith.constant 0 : index
    %c0_55 = arith.constant 0 : index
    %43 = vector.load %arg2[%c6, %c0_54, %c0_55] : memref<9x4x128xf32, #tpu.memory_space<vmem>>, vector<1x4x128xf32>
    %44 = vector.shape_cast %43 : vector<1x4x128xf32> to vector<4x128xf32>
    "tpu.trace_start"() <{level = 10 : i32, message = "hwc,cd->hwd"}> : () -> ()
    %cst_56 = arith.constant dense<0.000000e+00> : vector<16x16x128xf32>
    %45 = tpu.matmul %42, %44, %cst_56 {dimension_numbers = #tpu.dot_dimension_numbers<[2], [0], [0, 1], [1], [0, 0, 0, 1, 1, 1], [], []>} : vector<16x16x4xf32>, vector<4x128xf32>, vector<16x16x128xf32> -> vector<16x16x128xf32>
    "tpu.trace_stop"() : () -> ()
    %c0_57 = arith.constant 0 : index
    %c0_58 = arith.constant 0 : index
    %c0_59 = arith.constant 0 : index
    %46 = vector.load %arg6[%c0_57, %c0_58, %c0_59] : memref<16x16x128xf32, #tpu.memory_space<vmem>>, vector<16x16x128xf32>
    %47 = arith.addf %46, %45 : vector<16x16x128xf32>
    %c0_60 = arith.constant 0 : index
    %c0_61 = arith.constant 0 : index
    %c0_62 = arith.constant 0 : index
    %48 = vector.load %arg6[%c0_60, %c0_61, %c0_62] : memref<16x16x128xf32, #tpu.memory_space<vmem>>, vector<16x16x128xf32>
    tpu.vector_store %arg6[%c0_60, %c0_61, %c0_62], %47 {strides = array<i32>} : memref<16x16x128xf32, #tpu.memory_space<vmem>>, vector<16x16x128xf32>,
    %49 = vector.extract_strided_slice %1 {offsets = [2, 1, 0], sizes = [16, 16, 4], strides = [1, 1, 1]} : vector<18x18x4xf32> to vector<16x16x4xf32>
    %c7 = arith.constant 7 : index
    %c0_63 = arith.constant 0 : index
    %c0_64 = arith.constant 0 : index
    %50 = vector.load %arg2[%c7, %c0_63, %c0_64] : memref<9x4x128xf32, #tpu.memory_space<vmem>>, vector<1x4x128xf32>
    %51 = vector.shape_cast %50 : vector<1x4x128xf32> to vector<4x128xf32>
    "tpu.trace_start"() <{level = 10 : i32, message = "hwc,cd->hwd"}> : () -> ()
    %cst_65 = arith.constant dense<0.000000e+00> : vector<16x16x128xf32>
    %52 = tpu.matmul %49, %51, %cst_65 {dimension_numbers = #tpu.dot_dimension_numbers<[2], [0], [0, 1], [1], [0, 0, 0, 1, 1, 1], [], []>} : vector<16x16x4xf32>, vector<4x128xf32>, vector<16x16x128xf32> -> vector<16x16x128xf32>
    "tpu.trace_stop"() : () -> ()
    %c0_66 = arith.constant 0 : index
    %c0_67 = arith.constant 0 : index
    %c0_68 = arith.constant 0 : index
    %53 = vector.load %arg6[%c0_66, %c0_67, %c0_68] : memref<16x16x128xf32, #tpu.memory_space<vmem>>, vector<16x16x128xf32>
    %54 = arith.addf %53, %52 : vector<16x16x128xf32>
    %c0_69 = arith.constant 0 : index
    %c0_70 = arith.constant 0 : index
    %c0_71 = arith.constant 0 : index
    %55 = vector.load %arg6[%c0_69, %c0_70, %c0_71] : memref<16x16x128xf32, #tpu.memory_space<vmem>>, vector<16x16x128xf32>
    tpu.vector_store %arg6[%c0_69, %c0_70, %c0_71], %54 {strides = array<i32>} : memref<16x16x128xf32, #tpu.memory_space<vmem>>, vector<16x16x128xf32>,
    %56 = vector.extract_strided_slice %1 {offsets = [2, 2, 0], sizes = [16, 16, 4], strides = [1, 1, 1]} : vector<18x18x4xf32> to vector<16x16x4xf32>
    %c8 = arith.constant 8 : index
    %c0_72 = arith.constant 0 : index
    %c0_73 = arith.constant 0 : index
    %57 = vector.load %arg2[%c8, %c0_72, %c0_73] : memref<9x4x128xf32, #tpu.memory_space<vmem>>, vector<1x4x128xf32>
    %58 = vector.shape_cast %57 : vector<1x4x128xf32> to vector<4x128xf32>
    "tpu.trace_start"() <{level = 10 : i32, message = "hwc,cd->hwd"}> : () -> ()
    %cst_74 = arith.constant dense<0.000000e+00> : vector<16x16x128xf32>
    %59 = tpu.matmul %56, %58, %cst_74 {dimension_numbers = #tpu.dot_dimension_numbers<[2], [0], [0, 1], [1], [0, 0, 0, 1, 1, 1], [], []>} : vector<16x16x4xf32>, vector<4x128xf32>, vector<16x16x128xf32> -> vector<16x16x128xf32>
    "tpu.trace_stop"() : () -> ()
    %c0_75 = arith.constant 0 : index
    %c0_76 = arith.constant 0 : index
    %c0_77 = arith.constant 0 : index
    %60 = vector.load %arg6[%c0_75, %c0_76, %c0_77] : memref<16x16x128xf32, #tpu.memory_space<vmem>>, vector<16x16x128xf32>
    %61 = arith.addf %60, %59 : vector<16x16x128xf32>
    %c0_78 = arith.constant 0 : index
    %c0_79 = arith.constant 0 : index
    %c0_80 = arith.constant 0 : index
    %62 = vector.load %arg6[%c0_78, %c0_79, %c0_80] : memref<16x16x128xf32, #tpu.memory_space<vmem>>, vector<16x16x128xf32>
    tpu.vector_store %arg6[%c0_78, %c0_79, %c0_80], %61 {strides = array<i32>} : memref<16x16x128xf32, #tpu.memory_space<vmem>>, vector<16x16x128xf32>,
    %c0_81 = arith.constant 0 : index
    %c0_82 = arith.constant 0 : index
    %c0_83 = arith.constant 0 : index
    %63 = vector.load %arg6[%c0_81, %c0_82, %c0_83] : memref<16x16x128xf32, #tpu.memory_space<vmem>>, vector<16x16x128xf32>
    %cst_84 = arith.constant dense<0.000000e+00> : vector<128xf32>
    %64 = vector.multi_reduction <add>, %63, %cst_84 [0, 1] : vector<16x16x128xf32> to vector<128xf32>
    %65 = vector.shape_cast %64 : vector<128xf32> to vector<1x1x128xf32>
    %66 = arith.mulf %63, %63 : vector<16x16x128xf32>
    %cst_85 = arith.constant dense<0.000000e+00> : vector<128xf32>
    %67 = vector.multi_reduction <add>, %66, %cst_85 [0, 1] : vector<16x16x128xf32> to vector<128xf32>
    %68 = vector.shape_cast %67 : vector<128xf32> to vector<1x1x128xf32>
    %cst_86 = arith.constant 3.906250e-03 : f32
    %69 = vector.broadcast %cst_86 : f32 to vector<1x1x128xf32>
    %70 = arith.mulf %65, %69 : vector<1x1x128xf32>
    %cst_87 = arith.constant 3.906250e-03 : f32
    %71 = vector.broadcast %cst_87 : f32 to vector<1x1x128xf32>
    %72 = arith.mulf %68, %71 : vector<1x1x128xf32>
    %73 = arith.mulf %70, %70 : vector<1x1x128xf32>
    %74 = arith.subf %72, %73 : vector<1x1x128xf32>
    %c0_88 = arith.constant 0 : index
    %c0_89 = arith.constant 0 : index
    %c0_90 = arith.constant 0 : index
    %75 = vector.load %arg3[%c0_88, %c0_89, %c0_90] : memref<1x1x128xf32, #tpu.memory_space<vmem>>, vector<1x1x128xf32>
    %cst_91 = arith.constant 9.99999974E-6 : f32
    %76 = vector.broadcast %cst_91 : f32 to vector<1x1x128xf32>
    %77 = arith.addf %74, %76 : vector<1x1x128xf32>
    %78 = math.rsqrt %77 : vector<1x1x128xf32>
    %79 = arith.mulf %75, %78 : vector<1x1x128xf32>
    %c0_92 = arith.constant 0 : index
    %c0_93 = arith.constant 0 : index
    %c0_94 = arith.constant 0 : index
    %80 = vector.load %arg4[%c0_92, %c0_93, %c0_94] : memref<1x1x128xf32, #tpu.memory_space<vmem>>, vector<1x1x128xf32>
    %81 = arith.mulf %70, %79 : vector<1x1x128xf32>
    %82 = arith.subf %80, %81 : vector<1x1x128xf32>
    %83 = vector.broadcast %79 : vector<1x1x128xf32> to vector<16x16x128xf32>
    %84 = arith.mulf %63, %83 : vector<16x16x128xf32>
    %85 = vector.broadcast %82 : vector<1x1x128xf32> to vector<16x16x128xf32>
    %86 = arith.addf %84, %85 : vector<16x16x128xf32>
    %cst_95 = arith.constant 0.000000e+00 : f32
    %87 = vector.broadcast %cst_95 : f32 to vector<16x16x128xf32>
    %88 = arith.cmpf oge, %86, %87 : vector<16x16x128xf32>
    %cst_96 = arith.constant 2.000000e-01 : f32
    %89 = vector.broadcast %cst_96 : f32 to vector<16x16x128xf32>
    %90 = arith.mulf %89, %86 : vector<16x16x128xf32>
    %91 = arith.select %88, %86, %90 : vector<16x16x128xi1>, vector<16x16x128xf32>
    %c0_97 = arith.constant 0 : index
    %c0_98 = arith.constant 0 : index
    %c0_99 = arith.constant 0 : index
    %c0_100 = arith.constant 0 : index
    %92 = vector.load %arg5[%c0_97, %c0_98, %c0_99, %c0_100] : memref<1x16x16x128xf32, #tpu.memory_space<vmem>>, vector<1x16x16x128xf32>
    %93 = vector.shape_cast %92 : vector<1x16x16x128xf32> to vector<16x16x128xf32>
    %94 = vector.shape_cast %91 : vector<16x16x128xf32> to vector<1x16x16x128xf32>
    tpu.vector_store %arg5[%c0_97, %c0_98, %c0_99, %c0_100], %94 {strides = array<i32>} : memref<1x16x16x128xf32, #tpu.memory_space<vmem>>, vector<1x16x16x128xf32>,
    return
  }
  func.func @transform_0(%arg0: i32) -> (i32, i32, i32, i32) {
    %c0_i32 = arith.constant 0 : i32
    %c0_i32_0 = arith.constant 0 : i32
    %c0_i32_1 = arith.constant 0 : i32
    %c0_i32_2 = arith.constant 0 : i32
    return %arg0, %c0_i32, %c0_i32_0, %c0_i32_1 : i32, i32, i32, i32
  }
  func.func @transform_1(%arg0: i32) -> (i32, i32, i32) {
    %c0_i32 = arith.constant 0 : i32
    %c0_i32_0 = arith.constant 0 : i32
    %c0_i32_1 = arith.constant 0 : i32
    %c0_i32_2 = arith.constant 0 : i32
    return %c0_i32, %c0_i32_0, %c0_i32_1 : i32, i32, i32
  }
  func.func @transform_2(%arg0: i32) -> (i32, i32, i32) {
    %c0_i32 = arith.constant 0 : i32
    %c0_i32_0 = arith.constant 0 : i32
    %c0_i32_1 = arith.constant 0 : i32
    %c0_i32_2 = arith.constant 0 : i32
    return %c0_i32, %c0_i32_0, %c0_i32_1 : i32, i32, i32
  }
  func.func @transform_3(%arg0: i32) -> (i32, i32, i32) {
    %c0_i32 = arith.constant 0 : i32
    %c0_i32_0 = arith.constant 0 : i32
    %c0_i32_1 = arith.constant 0 : i32
    %c0_i32_2 = arith.constant 0 : i32
    return %c0_i32, %c0_i32_0, %c0_i32_1 : i32, i32, i32
  }
  func.func @transform_4(%arg0: i32) -> (i32, i32, i32, i32) {
    %c0_i32 = arith.constant 0 : i32
    %c0_i32_0 = arith.constant 0 : i32
    %c0_i32_1 = arith.constant 0 : i32
    %c0_i32_2 = arith.constant 0 : i32
    return %arg0, %c0_i32, %c0_i32_0, %c0_i32_1 : i32, i32, i32, i32
  }
}

</mosaic_0001>

<llo_original>
// kernel: tpu_custom_call.1
$region0: #{tpu_custom_call.1}
  #allocation0 [shape = 'u32[]', space=smem, size = 0x4, offset = 0x4, fixed_abs, tag = 'smem constant byte address 0x4 - core index']
  #allocation1 [shape = 'u32[72,128]{1,0:T(1,128)}', space=vmem, size = 0x9000, scoped, tag = 'internal scratch']
  #allocation2 [shape = 'f32[16,16,128]{2,1,0:T(8,128)}', space=vmem, size = 0x20000, scoped, tag = 'scratch operand']
  %s0 = inlined_call_operand.vmem [shape: f32[2,18,18,4], index: 0, kind: input, shape index: {}]
  %s1 = inlined_call_operand.vmem [shape: f32[9,4,128], index: 1, kind: input, shape index: {}]
  %s2 = inlined_call_operand.vmem [shape: f32[1,1,128], index: 2, kind: input, shape index: {}]
  %s3 = inlined_call_operand.vmem [shape: f32[1,1,128], index: 3, kind: input, shape index: {}]
  %s4 = inlined_call_operand.hbm [shape: f32[2,16,16,128], index: 4, kind: output, shape index: {}]
  %s5 = sld [smem:[#allocation0]]
  $region49: #{tpu_custom_call.1} parent=0
    _
  %s7 = ssub.s32 1, %s5
  %s8 = scalar_select 0, %s7, %s5
  $region1: #{tpu_custom_call.1} parent=0
    #allocation3 [shape = 'u8[262144]{0}', space=vmem, size = 0x40000, scoped, tag = 'output window, operand 0']
    #allocation4 [shape = 's32[2]{0}', space=sflag, size = 0x8, scoped, tag = 'scoped memory for tpu_custom_call.1']
    %9 = vsyncpa [#allocation4], 0
    %s10 = scalar_lea.sflag [#allocation4], 1
    %11 = vsyncpa %s10, 0
    loop: start=0, step=1, limit=4
    $region2: #{tpu_custom_call.1} parent=1 // loop_pre_header
      _
    $region3: #{tpu_custom_call.1} parent=1 // loop_header
      %s13 = sphi 0, %s17
      %p14 = scmp.ge.s32.totalorder %s13, 4
      %s23 = sphi 0, %s25
      %s26 = sphi 0, %s23
      %s27 = sphi 0, %s26
      %s43 = sphi 0, %s27
      %s47 = sphi 0, %s47
      %s49 = sphi 0, %s47
      %s50 = sphi 0, %s49
      %s64 = sphi 0, %s50
      %s68 = sphi 0, %s68
      %s70 = sphi 0, %s68
      %s71 = sphi 0, %s70
      %s85 = sphi 0, %s71
      %s89 = sphi 0, %s89
      %s91 = sphi 0, %s89
      %s92 = sphi 0, %s91
      %s106 = sphi 0, %s92
      %s112 = sphi 0, %s114
      %s115 = sphi 0, %s112
      %s116 = sphi 0, %s115
      %s132 = sphi 0, %s116
    $region4: #{tpu_custom_call.1} parent=1 // loop_header_branch
      %16 = sbr.rel (%p14) target = $region8
    $region5: #{tpu_custom_call.1} parent=1 // loop_body
      %s18 = ssub.s32 %s13, 1
      %s19 = ssub.s32 %s13, 2
      %s20 = sadd.s32 %s13, 1
      %s21 = ssub.s32 %s13, %s20
      %p22 = scmp.eq.s32.totalorder %s21, 0
      %s24 = sadd.s32 %s23, 1
      %s25 = scalar_select %p22, %s23, %s24
      %p28 = pneg %p22
      %p29 = scmp.eq.s32.totalorder %s13, 1
      %p30 = por %p28, %p29
      %p31 = scmp.ne.s32.totalorder %s23, %s26
      %p32 = scmp.eq.s32.totalorder %s13, 0
      %p33 = por %p31, %p32
      %p34 = scmp.ne.s32.totalorder %s23, %s26
      %p35 = scmp.eq.s32.totalorder %s18, 1
      %p36 = por %p34, %p35
      %p37 = scmp.ne.s32.totalorder %s26, %s27
      %p38 = scmp.eq.s32.totalorder %s18, 0
      %p39 = por %p37, %p38
      %p40 = scmp.ne.s32.totalorder %s26, %s27
      %p41 = scmp.eq.s32.totalorder %s19, 1
      %p42 = por %p40, %p41
      %p44 = scmp.ne.s32.totalorder %s27, %s43
      %p45 = scmp.eq.s32.totalorder %s19, 0
      %p46 = por %p44, %p45
      %s48 = sadd.s32 %s47, 1
      %p51 = scmp.eq.s32.totalorder %s13, 1
      %p52 = scmp.ne.s32.totalorder %s47, %s49
      %p53 = scmp.eq.s32.totalorder %s13, 0
      %p54 = por %p52, %p53
      %p55 = scmp.ne.s32.totalorder %s47, %s49
      %p56 = scmp.eq.s32.totalorder %s18, 1
      %p57 = por %p55, %p56
      %p58 = scmp.ne.s32.totalorder %s49, %s50
      %p59 = scmp.eq.s32.totalorder %s18, 0
      %p60 = por %p58, %p59
      %p61 = scmp.ne.s32.totalorder %s49, %s50
      %p62 = scmp.eq.s32.totalorder %s19, 1
      %p63 = por %p61, %p62
      %p65 = scmp.ne.s32.totalorder %s50, %s64
      %p66 = scmp.eq.s32.totalorder %s19, 0
      %p67 = por %p65, %p66
      %s69 = sadd.s32 %s68, 1
      %p72 = scmp.eq.s32.totalorder %s13, 1
      %p73 = scmp.ne.s32.totalorder %s68, %s70
      %p74 = scmp.eq.s32.totalorder %s13, 0
      %p75 = por %p73, %p74
      %p76 = scmp.ne.s32.totalorder %s68, %s70
      %p77 = scmp.eq.s32.totalorder %s18, 1
      %p78 = por %p76, %p77
      %p79 = scmp.ne.s32.totalorder %s70, %s71
      %p80 = scmp.eq.s32.totalorder %s18, 0
      %p81 = por %p79, %p80
      %p82 = scmp.ne.s32.totalorder %s70, %s71
      %p83 = scmp.eq.s32.totalorder %s19, 1
      %p84 = por %p82, %p83
      %p86 = scmp.ne.s32.totalorder %s71, %s85
      %p87 = scmp.eq.s32.totalorder %s19, 0
      %p88 = por %p86, %p87
      %s90 = sadd.s32 %s89, 1
      %p93 = scmp.eq.s32.totalorder %s13, 1
      %p94 = scmp.ne.s32.totalorder %s89, %s91
      %p95 = scmp.eq.s32.totalorder %s13, 0
      %p96 = por %p94, %p95
      %p97 = scmp.ne.s32.totalorder %s89, %s91
      %p98 = scmp.eq.s32.totalorder %s18, 1
      %p99 = por %p97, %p98
      %p100 = scmp.ne.s32.totalorder %s91, %s92
      %p101 = scmp.eq.s32.totalorder %s18, 0
      %p102 = por %p100, %p101
      %p103 = scmp.ne.s32.totalorder %s91, %s92
      %p104 = scmp.eq.s32.totalorder %s19, 1
      %p105 = por %p103, %p104
      %p107 = scmp.ne.s32.totalorder %s92, %s106
      %p108 = scmp.eq.s32.totalorder %s19, 0
      %p109 = por %p107, %p108
      %s110 = ssub.s32 %s13, %s20
      %p111 = scmp.eq.s32.totalorder %s110, 0
      %s113 = sadd.s32 %s112, 1
      %s114 = scalar_select %p111, %s112, %s113
      %p117 = pneg %p111
      %p118 = scmp.eq.s32.totalorder %s13, 1
      %p119 = por %p117, %p118
      %p120 = scmp.ne.s32.totalorder %s112, %s115
      %p121 = scmp.eq.s32.totalorder %s13, 0
      %p122 = por %p120, %p121
      %p123 = scmp.ne.s32.totalorder %s112, %s115
      %p124 = scmp.eq.s32.totalorder %s18, 1
      %p125 = por %p123, %p124
      %p126 = scmp.ne.s32.totalorder %s115, %s116
      %p127 = scmp.eq.s32.totalorder %s18, 0
      %p128 = por %p126, %p127
      %p129 = scmp.ne.s32.totalorder %s115, %s116
      %p130 = scmp.eq.s32.totalorder %s19, 1
      %p131 = por %p129, %p130
      %p133 = scmp.ne.s32.totalorder %s116, %s132
      %p134 = scmp.eq.s32.totalorder %s19, 0
      %p135 = por %p133, %p134
      %p136 = scmp.le.s32.totalorder 1, %s13
      %p137 = scmp.lt.s32.totalorder %s13, 3
      %p138 = pnand %p136, %p137
      %p139 = pneg %p138
      // Predicated region
      $region9: #{tpu_custom_call.1} parent=5 // pred_check
        _
      $region10: #{tpu_custom_call.1} parent=5 // pred_check_branch
        %141 = sbr.rel (%p138) target = $region12
      $region11: #{tpu_custom_call.1} parent=5 // pred_region
        %s142 = ssub.s32 %s13, 1
        // Predicated region
        $region13: #{tpu_custom_call.1} parent=11 // pred_check
          %p143 = pneg %p60
        $region14: #{tpu_custom_call.1} parent=11 // pred_check_branch
          %145 = sbr.rel (%p143) target = $region16
        $region15: #{tpu_custom_call.1} parent=11 // pred_region
          _
        $region16: #{tpu_custom_call.1} parent=11 // pred_fallthru
          _
        // Predicated region
        $region17: #{tpu_custom_call.1} parent=11 // pred_check
          %p146 = pneg %p81
        $region18: #{tpu_custom_call.1} parent=11 // pred_check_branch
          %148 = sbr.rel (%p146) target = $region20
        $region19: #{tpu_custom_call.1} parent=11 // pred_region
          _
        $region20: #{tpu_custom_call.1} parent=11 // pred_fallthru
          _
        // Predicated region
        $region21: #{tpu_custom_call.1} parent=11 // pred_check
          %p149 = pneg %p102
        $region22: #{tpu_custom_call.1} parent=11 // pred_check_branch
          %151 = sbr.rel (%p149) target = $region24
        $region23: #{tpu_custom_call.1} parent=11 // pred_region
          _
        $region24: #{tpu_custom_call.1} parent=11 // pred_fallthru
          _
      $region12: #{tpu_custom_call.1} parent=5 // pred_fallthru
        _
      %p152 = scmp.lt.s32.totalorder %s13, 2
      // Predicated region
      $region25: #{tpu_custom_call.1} parent=5 // pred_check
        %p153 = pneg %p152
      $region26: #{tpu_custom_call.1} parent=5 // pred_check_branch
        %155 = sbr.rel (%p153) target = $region28
      $region27: #{tpu_custom_call.1} parent=5 // pred_region
        // Predicated region
        $region29: #{tpu_custom_call.1} parent=27 // pred_check
          %p156 = pneg %p33
        $region30: #{tpu_custom_call.1} parent=27 // pred_check_branch
          %158 = sbr.rel (%p156) target = $region32
        $region31: #{tpu_custom_call.1} parent=27 // pred_region
          %p159 = scmp.lt.s32.totalorder %s13, 1
          %s160 = scalar_select %p159, %s13, 1
          %s161 = smul.addr %s160, 54
          %s162 = smul.addr %s161, 8
          %s163 = scalar_lea.vmem %s0, %s162
        $region32: #{tpu_custom_call.1} parent=27 // pred_fallthru
          _
      $region28: #{tpu_custom_call.1} parent=5 // pred_fallthru
        _
      %p164 = scmp.le.s32.totalorder 1, %s13
      %p165 = scmp.lt.s32.totalorder %s13, 3
      %p166 = pnand %p164, %p165
      %p167 = pneg %p166
      // Predicated region
      $region33: #{tpu_custom_call.1} parent=5 // pred_check
        _
      $region34: #{tpu_custom_call.1} parent=5 // pred_check_branch
        %169 = sbr.rel (%p166) target = $region36
      $region35: #{tpu_custom_call.1} parent=5 // pred_region
        %s170 = ssub.s32 %s13, 1
        %p171 = scmp.lt.s32.totalorder %s18, 1
        %s172 = scalar_select %p171, %s18, 1
        %s173 = smul.addr %s172, 54
        %s174 = smul.addr %s173, 8
        %s175 = scalar_lea.vmem %s0, %s174
        %p176 = pneg %p39
        %p177 = pneg %p36
        %p178 = pneg %p60
        %p179 = pneg %p57
        %p180 = pneg %p81
        %p181 = pneg %p78
        %p182 = pneg %p102
        %p183 = pneg %p99
        %p184 = pneg %p128
        %p185 = pneg %p125
        %s186 = sand.u32 %s115, 1
        %s187 = scalar_lea.sflag [#allocation4], %s186
        %s188 = sand.u32 %s115, 1
        %s189 = smul.addr %s188, 256
        %s190 = scalar_lea.vmem [#allocation3], %s189
        %p191 = scmp.lt.s32.totalorder %s18, 1
        %s192 = scalar_select %p191, %s18, 1
        %s193 = smul.addr %s192, 54
        %s194 = smul.addr %s193, 8
        %s195 = scalar_lea.vmem %s0, %s194
        %v196 = vld [vmem:[%s195] sm:$0xff]
        %v197 = vld [vmem:[%s195 + $0x8] sm:$0xff]
        %v198 = vld [vmem:[%s195 + $0x10] sm:$0x3]
        %v199 = vld [vmem:[%s195 + $0x18] sm:$0xff]
        %v200 = vld [vmem:[%s195 + $0x20] sm:$0xff]
        %v201 = vld [vmem:[%s195 + $0x28] sm:$0x3]
        %v202 = vld [vmem:[%s195 + $0x30] sm:$0xff]
        %v203 = vld [vmem:[%s195 + $0x38] sm:$0xff]
        %v204 = vld [vmem:[%s195 + $0x40] sm:$0x3]
        %v205 = vld [vmem:[%s195 + $0x48] sm:$0xff]
        %v206 = vld [vmem:[%s195 + $0x50] sm:$0xff]
        %v207 = vld [vmem:[%s195 + $0x58] sm:$0x3]
        %v208 = vld [vmem:[%s195 + $0x60] sm:$0xff]
        %v209 = vld [vmem:[%s195 + $0x68] sm:$0xff]
        %v210 = vld [vmem:[%s195 + $0x70] sm:$0x3]
        %v211 = vld [vmem:[%s195 + $0x78] sm:$0xff]
        %v212 = vld [vmem:[%s195 + $0x80] sm:$0xff]
        %v213 = vld [vmem:[%s195 + $0x88] sm:$0x3]
        %v214 = vld [vmem:[%s195 + $0x90] sm:$0xff]
        %v215 = vld [vmem:[%s195 + $0x98] sm:$0xff]
        %v216 = vld [vmem:[%s195 + $0xa0] sm:$0x3]
        %v217 = vld [vmem:[%s195 + $0xa8] sm:$0xff]
        %v218 = vld [vmem:[%s195 + $0xb0] sm:$0xff]
        %v219 = vld [vmem:[%s195 + $0xb8] sm:$0x3]
        %v220 = vld [vmem:[%s195 + $0xc0] sm:$0xff]
        %v221 = vld [vmem:[%s195 + $0xc8] sm:$0xff]
        %v222 = vld [vmem:[%s195 + $0xd0] sm:$0x3]
        %v223 = vld [vmem:[%s195 + $0xd8] sm:$0xff]
        %v224 = vld [vmem:[%s195 + $0xe0] sm:$0xff]
        %v225 = vld [vmem:[%s195 + $0xe8] sm:$0x3]
        %v226 = vld [vmem:[%s195 + $0xf0] sm:$0xff]
        %v227 = vld [vmem:[%s195 + $0xf8] sm:$0xff]
        %v228 = vld [vmem:[%s195 + $0x100] sm:$0x3]
        %v229 = vld [vmem:[%s195 + $0x108] sm:$0xff]
        %v230 = vld [vmem:[%s195 + $0x110] sm:$0xff]
        %v231 = vld [vmem:[%s195 + $0x118] sm:$0x3]
        %v232 = vld [vmem:[%s195 + $0x120] sm:$0xff]
        %v233 = vld [vmem:[%s195 + $0x128] sm:$0xff]
        %v234 = vld [vmem:[%s195 + $0x130] sm:$0x3]
        %v235 = vld [vmem:[%s195 + $0x138] sm:$0xff]
        %v236 = vld [vmem:[%s195 + $0x140] sm:$0xff]
        %v237 = vld [vmem:[%s195 + $0x148] sm:$0x3]
        %v238 = vld [vmem:[%s195 + $0x150] sm:$0xff]
        %v239 = vld [vmem:[%s195 + $0x158] sm:$0xff]
        %v240 = vld [vmem:[%s195 + $0x160] sm:$0x3]
        %v241 = vld [vmem:[%s195 + $0x168] sm:$0xff]
        %v242 = vld [vmem:[%s195 + $0x170] sm:$0xff]
        %v243 = vld [vmem:[%s195 + $0x178] sm:$0x3]
        %v244 = vld [vmem:[%s195 + $0x180] sm:$0xff]
        %v245 = vld [vmem:[%s195 + $0x188] sm:$0xff]
        %v246 = vld [vmem:[%s195 + $0x190] sm:$0x3]
        %v247 = vld [vmem:[%s195 + $0x198] sm:$0xff]
        %v248 = vld [vmem:[%s195 + $0x1a0] sm:$0xff]
        %v249 = vld [vmem:[%s195 + $0x1a8] sm:$0x3]
        %v250 = vld [vmem:[%s1] sm:$0xf]
        %vm251 = vcmask 31744
        %v253 = vsel %vm251, %v196, 0
        %v256 = vsel %vm251, %v197, 0
        %v259 = vsel %vm251, %v199, 0
        %v262 = vsel %vm251, %v200, 0
        %v265 = vsel %vm251, %v202, 0
        %v268 = vsel %vm251, %v203, 0
        %v271 = vsel %vm251, %v205, 0
        %v274 = vsel %vm251, %v206, 0
        %v277 = vsel %vm251, %v208, 0
        %v280 = vsel %vm251, %v209, 0
        %v283 = vsel %vm251, %v211, 0
        %v286 = vsel %vm251, %v212, 0
        %v289 = vsel %vm251, %v214, 0
        %v292 = vsel %vm251, %v215, 0
        %v295 = vsel %vm251, %v217, 0
        %v298 = vsel %vm251, %v218, 0
        %v301 = vsel %vm251, %v220, 0
        %v304 = vsel %vm251, %v221, 0
        %v307 = vsel %vm251, %v223, 0
        %v310 = vsel %vm251, %v224, 0
        %v313 = vsel %vm251, %v226, 0
        %v316 = vsel %vm251, %v227, 0
        %v319 = vsel %vm251, %v229, 0
        %v322 = vsel %vm251, %v230, 0
        %v325 = vsel %vm251, %v232, 0
        %v328 = vsel %vm251, %v233, 0
        %v331 = vsel %vm251, %v235, 0
        %v334 = vsel %vm251, %v236, 0
        %v337 = vsel %vm251, %v238, 0
        %v340 = vsel %vm251, %v239, 0
        %v343 = vsel %vm251, %v241, 0
        %v346 = vsel %vm251, %v242, 0
        %vm348 = vcmask 1043456
        %v350 = vsel %vm348, %v250, 0
        %352 = vmatpush.msra.mxu0 0.0
        %353 = vmatpush.msra.mxu0 0.0
        %354 = vmatpush.msra.mxu0 0.0
        %355 = vmatpush.msra.mxu0 0.0
        %356 = vmatpush.msra.mxu0 0.0
        %357 = vmatpush.msra.mxu0 0.0
        %358 = vmatpush.msra.mxu0 0.0
        %359 = vmatpush.msra.mxu0 0.0
        %360 = vmatpush.msra.mxu0 0.0
        %361 = vmatpush.msra.mxu0 0.0
        %362 = vmatpush.msra.mxu0 0.0
        %363 = vmatpush.msra.mxu0 0.0
        %364 = vmatpush.msra.mxu0 0.0
        %365 = vmatpush.msra.mxu0 0.0
        %366 = vmatpush.msra.mxu0 0.0
        %367 = vmatpush.msra.mxu0 %v350
        %368 = vmatmul.f32.gmra.mxu0 %v253
        %v369 = vpop.f32.mrf.mxu0
        %v370 = vadd.f32 0.0, %v369
        %371 = vmatmul.f32.gmra.mxu0 %v256
        %v372 = vpop.f32.mrf.mxu0
        %v373 = vadd.f32 0.0, %v372
        %374 = vmatmul.f32.gmra.mxu0 %v259
        %v375 = vpop.f32.mrf.mxu0
        %v376 = vadd.f32 0.0, %v375
        %377 = vmatmul.f32.gmra.mxu0 %v262
        %v378 = vpop.f32.mrf.mxu0
        %v379 = vadd.f32 0.0, %v378
        %380 = vmatmul.f32.gmra.mxu0 %v265
        %v381 = vpop.f32.mrf.mxu0
        %v382 = vadd.f32 0.0, %v381
        %383 = vmatmul.f32.gmra.mxu0 %v268
        %v384 = vpop.f32.mrf.mxu0
        %v385 = vadd.f32 0.0, %v384
        %386 = vmatmul.f32.gmra.mxu0 %v271
        %v387 = vpop.f32.mrf.mxu0
        %v388 = vadd.f32 0.0, %v387
        %389 = vmatmul.f32.gmra.mxu0 %v274
        %v390 = vpop.f32.mrf.mxu0
        %v391 = vadd.f32 0.0, %v390
        %392 = vmatmul.f32.gmra.mxu0 %v277
        %v393 = vpop.f32.mrf.mxu0
        %v394 = vadd.f32 0.0, %v393
        %395 = vmatmul.f32.gmra.mxu0 %v280
        %v396 = vpop.f32.mrf.mxu0
        %v397 = vadd.f32 0.0, %v396
        %398 = vmatmul.f32.gmra.mxu0 %v283
        %v399 = vpop.f32.mrf.mxu0
        %v400 = vadd.f32 0.0, %v399
        %401 = vmatmul.f32.gmra.mxu0 %v286
        %v402 = vpop.f32.mrf.mxu0
        %v403 = vadd.f32 0.0, %v402
        %404 = vmatmul.f32.gmra.mxu0 %v289
        %v405 = vpop.f32.mrf.mxu0
        %v406 = vadd.f32 0.0, %v405
        %407 = vmatmul.f32.gmra.mxu0 %v292
        %v408 = vpop.f32.mrf.mxu0
        %v409 = vadd.f32 0.0, %v408
        %410 = vmatmul.f32.gmra.mxu0 %v295
        %v411 = vpop.f32.mrf.mxu0
        %v412 = vadd.f32 0.0, %v411
        %413 = vmatmul.f32.gmra.mxu0 %v298
        %v414 = vpop.f32.mrf.mxu0
        %v415 = vadd.f32 0.0, %v414
        %416 = vmatmul.f32.gmra.mxu0 %v301
        %v417 = vpop.f32.mrf.mxu0
        %v418 = vadd.f32 0.0, %v417
        %419 = vmatmul.f32.gmra.mxu0 %v304
        %v420 = vpop.f32.mrf.mxu0
        %v421 = vadd.f32 0.0, %v420
        %422 = vmatmul.f32.gmra.mxu0 %v307
        %v423 = vpop.f32.mrf.mxu0
        %v424 = vadd.f32 0.0, %v423
        %425 = vmatmul.f32.gmra.mxu0 %v310
        %v426 = vpop.f32.mrf.mxu0
        %v427 = vadd.f32 0.0, %v426
        %428 = vmatmul.f32.gmra.mxu0 %v313
        %v429 = vpop.f32.mrf.mxu0
        %v430 = vadd.f32 0.0, %v429
        %431 = vmatmul.f32.gmra.mxu0 %v316
        %v432 = vpop.f32.mrf.mxu0
        %v433 = vadd.f32 0.0, %v432
        %434 = vmatmul.f32.gmra.mxu0 %v319
        %v435 = vpop.f32.mrf.mxu0
        %v436 = vadd.f32 0.0, %v435
        %437 = vmatmul.f32.gmra.mxu0 %v322
        %v438 = vpop.f32.mrf.mxu0
        %v439 = vadd.f32 0.0, %v438
        %440 = vmatmul.f32.gmra.mxu0 %v325
        %v441 = vpop.f32.mrf.mxu0
        %v442 = vadd.f32 0.0, %v441
        %443 = vmatmul.f32.gmra.mxu0 %v328
        %v444 = vpop.f32.mrf.mxu0
        %v445 = vadd.f32 0.0, %v444
        %446 = vmatmul.f32.gmra.mxu0 %v331
        %v447 = vpop.f32.mrf.mxu0
        %v448 = vadd.f32 0.0, %v447
        %449 = vmatmul.f32.gmra.mxu0 %v334
        %v450 = vpop.f32.mrf.mxu0
        %v451 = vadd.f32 0.0, %v450
        %452 = vmatmul.f32.gmra.mxu0 %v337
        %v453 = vpop.f32.mrf.mxu0
        %v454 = vadd.f32 0.0, %v453
        %455 = vmatmul.f32.gmra.mxu0 %v340
        %v456 = vpop.f32.mrf.mxu0
        %v457 = vadd.f32 0.0, %v456
        %458 = vmatmul.f32.gmra.mxu0 %v343
        %v459 = vpop.f32.mrf.mxu0
        %v460 = vadd.f32 0.0, %v459
        %461 = vmatmul.f32.gmra.mxu0 %v346
        %v462 = vpop.f32.mrf.mxu0
        %v463 = vadd.f32 0.0, %v462
        %464 = vdwg.mxu0
        %465 = vst [vmem:[#allocation2] sm:$0xff] %v370
        %466 = vst [vmem:[#allocation2 + $0x8] sm:$0xff] %v373
        %467 = vst [vmem:[#allocation2 + $0x10] sm:$0xff] %v376
        %468 = vst [vmem:[#allocation2 + $0x18] sm:$0xff] %v379
        %469 = vst [vmem:[#allocation2 + $0x20] sm:$0xff] %v382
        %470 = vst [vmem:[#allocation2 + $0x28] sm:$0xff] %v385
        %471 = vst [vmem:[#allocation2 + $0x30] sm:$0xff] %v388
        %472 = vst [vmem:[#allocation2 + $0x38] sm:$0xff] %v391
        %473 = vst [vmem:[#allocation2 + $0x40] sm:$0xff] %v394
        %474 = vst [vmem:[#allocation2 + $0x48] sm:$0xff] %v397
        %475 = vst [vmem:[#allocation2 + $0x50] sm:$0xff] %v400
        %476 = vst [vmem:[#allocation2 + $0x58] sm:$0xff] %v403
        %477 = vst [vmem:[#allocation2 + $0x60] sm:$0xff] %v406
        %478 = vst [vmem:[#allocation2 + $0x68] sm:$0xff] %v409
        %479 = vst [vmem:[#allocation2 + $0x70] sm:$0xff] %v412
        %480 = vst [vmem:[#allocation2 + $0x78] sm:$0xff] %v415
        %481 = vst [vmem:[#allocation2 + $0x80] sm:$0xff] %v418
        %482 = vst [vmem:[#allocation2 + $0x88] sm:$0xff] %v421
        %483 = vst [vmem:[#allocation2 + $0x90] sm:$0xff] %v424
        %484 = vst [vmem:[#allocation2 + $0x98] sm:$0xff] %v427
        %485 = vst [vmem:[#allocation2 + $0xa0] sm:$0xff] %v430
        %486 = vst [vmem:[#allocation2 + $0xa8] sm:$0xff] %v433
        %487 = vst [vmem:[#allocation2 + $0xb0] sm:$0xff] %v436
        %488 = vst [vmem:[#allocation2 + $0xb8] sm:$0xff] %v439
        %489 = vst [vmem:[#allocation2 + $0xc0] sm:$0xff] %v442
        %490 = vst [vmem:[#allocation2 + $0xc8] sm:$0xff] %v445
        %491 = vst [vmem:[#allocation2 + $0xd0] sm:$0xff] %v448
        %492 = vst [vmem:[#allocation2 + $0xd8] sm:$0xff] %v451
        %493 = vst [vmem:[#allocation2 + $0xe0] sm:$0xff] %v454
        %494 = vst [vmem:[#allocation2 + $0xe8] sm:$0xff] %v457
        %495 = vst [vmem:[#allocation2 + $0xf0] sm:$0xff] %v460
        %496 = vst [vmem:[#allocation2 + $0xf8] sm:$0xff] %v463
        %s497 = scalar_lea.vmem %s1, 4
        %v498 = vld [vmem:[%s497] sm:$0xf]
        %vm515 = vcmask 1046528
        %v516 = vrot.slane %v196, 1
        %v517 = vrot.slane %v197, 1
        %v518 = vsel %vm515, %v516, %v517
        %v519 = vrot.slane %v198, 1
        %v520 = vsel %vm515, %v517, %v519
        %v521 = vrot.slane %v199, 1
        %v522 = vrot.slane %v200, 1
        %v523 = vsel %vm515, %v521, %v522
        %v524 = vrot.slane %v201, 1
        %v525 = vsel %vm515, %v522, %v524
        %v526 = vrot.slane %v202, 1
        %v527 = vrot.slane %v203, 1
        %v528 = vsel %vm515, %v526, %v527
        %v529 = vrot.slane %v204, 1
        %v530 = vsel %vm515, %v527, %v529
        %v531 = vrot.slane %v205, 1
        %v532 = vrot.slane %v206, 1
        %v533 = vsel %vm515, %v531, %v532
        %v534 = vrot.slane %v207, 1
        %v535 = vsel %vm515, %v532, %v534
        %v536 = vrot.slane %v208, 1
        %v537 = vrot.slane %v209, 1
        %v538 = vsel %vm515, %v536, %v537
        %v539 = vrot.slane %v210, 1
        %v540 = vsel %vm515, %v537, %v539
        %v541 = vrot.slane %v211, 1
        %v542 = vrot.slane %v212, 1
        %v543 = vsel %vm515, %v541, %v542
        %v544 = vrot.slane %v213, 1
        %v545 = vsel %vm515, %v542, %v544
        %v546 = vrot.slane %v214, 1
        %v547 = vrot.slane %v215, 1
        %v548 = vsel %vm515, %v546, %v547
        %v549 = vrot.slane %v216, 1
        %v550 = vsel %vm515, %v547, %v549
        %v551 = vrot.slane %v217, 1
        %v552 = vrot.slane %v218, 1
        %v553 = vsel %vm515, %v551, %v552
        %v554 = vrot.slane %v219, 1
        %v555 = vsel %vm515, %v552, %v554
        %v556 = vrot.slane %v220, 1
        %v557 = vrot.slane %v221, 1
        %v558 = vsel %vm515, %v556, %v557
        %v559 = vrot.slane %v222, 1
        %v560 = vsel %vm515, %v557, %v559
        %v561 = vrot.slane %v223, 1
        %v562 = vrot.slane %v224, 1
        %v563 = vsel %vm515, %v561, %v562
        %v564 = vrot.slane %v225, 1
        %v565 = vsel %vm515, %v562, %v564
        %v566 = vrot.slane %v226, 1
        %v567 = vrot.slane %v227, 1
        %v568 = vsel %vm515, %v566, %v567
        %v569 = vrot.slane %v228, 1
        %v570 = vsel %vm515, %v567, %v569
        %v571 = vrot.slane %v229, 1
        %v572 = vrot.slane %v230, 1
        %v573 = vsel %vm515, %v571, %v572
        %v574 = vrot.slane %v231, 1
        %v575 = vsel %vm515, %v572, %v574
        %v576 = vrot.slane %v232, 1
        %v577 = vrot.slane %v233, 1
        %v578 = vsel %vm515, %v576, %v577
        %v579 = vrot.slane %v234, 1
        %v580 = vsel %vm515, %v577, %v579
        %v581 = vrot.slane %v235, 1
        %v582 = vrot.slane %v236, 1
        %v583 = vsel %vm515, %v581, %v582
        %v584 = vrot.slane %v237, 1
        %v585 = vsel %vm515, %v582, %v584
        %v586 = vrot.slane %v238, 1
        %v587 = vrot.slane %v239, 1
        %v588 = vsel %vm515, %v586, %v587
        %v589 = vrot.slane %v240, 1
        %v590 = vsel %vm515, %v587, %v589
        %v591 = vrot.slane %v241, 1
        %v592 = vrot.slane %v242, 1
        %v593 = vsel %vm515, %v591, %v592
        %v594 = vrot.slane %v243, 1
        %v595 = vsel %vm515, %v592, %v594
        %v596 = vsel %vm251, %v518, 0
        %v598 = vsel %vm251, %v520, 0
        %v600 = vsel %vm251, %v523, 0
        %v602 = vsel %vm251, %v525, 0
        %v604 = vsel %vm251, %v528, 0
        %v606 = vsel %vm251, %v530, 0
        %v608 = vsel %vm251, %v533, 0
        %v610 = vsel %vm251, %v535, 0
        %v612 = vsel %vm251, %v538, 0
        %v614 = vsel %vm251, %v540, 0
        %v616 = vsel %vm251, %v543, 0
        %v618 = vsel %vm251, %v545, 0
        %v620 = vsel %vm251, %v548, 0
        %v622 = vsel %vm251, %v550, 0
        %v624 = vsel %vm251, %v553, 0
        %v626 = vsel %vm251, %v555, 0
        %v628 = vsel %vm251, %v558, 0
        %v630 = vsel %vm251, %v560, 0
        %v632 = vsel %vm251, %v563, 0
        %v634 = vsel %vm251, %v565, 0
        %v636 = vsel %vm251, %v568, 0
        %v638 = vsel %vm251, %v570, 0
        %v640 = vsel %vm251, %v573, 0
        %v642 = vsel %vm251, %v575, 0
        %v644 = vsel %vm251, %v578, 0
        %v646 = vsel %vm251, %v580, 0
        %v648 = vsel %vm251, %v583, 0
        %v650 = vsel %vm251, %v585, 0
        %v652 = vsel %vm251, %v588, 0
        %v654 = vsel %vm251, %v590, 0
        %v656 = vsel %vm251, %v593, 0
        %v658 = vsel %vm251, %v595, 0
        %v661 = vsel %vm348, %v498, 0
        %663 = vmatpush.msra.mxu0 0.0
        %664 = vmatpush.msra.mxu0 0.0
        %665 = vmatpush.msra.mxu0 0.0
        %666 = vmatpush.msra.mxu0 0.0
        %667 = vmatpush.msra.mxu0 0.0
        %668 = vmatpush.msra.mxu0 0.0
        %669 = vmatpush.msra.mxu0 0.0
        %670 = vmatpush.msra.mxu0 0.0
        %671 = vmatpush.msra.mxu0 0.0
        %672 = vmatpush.msra.mxu0 0.0
        %673 = vmatpush.msra.mxu0 0.0
        %674 = vmatpush.msra.mxu0 0.0
        %675 = vmatpush.msra.mxu0 0.0
        %676 = vmatpush.msra.mxu0 0.0
        %677 = vmatpush.msra.mxu0 0.0
        %678 = vmatpush.msra.mxu0 %v661
        %679 = vmatmul.f32.gmra.mxu0 %v596
        %v680 = vpop.f32.mrf.mxu0
        %v681 = vadd.f32 0.0, %v680
        %682 = vmatmul.f32.gmra.mxu0 %v598
        %v683 = vpop.f32.mrf.mxu0
        %v684 = vadd.f32 0.0, %v683
        %685 = vmatmul.f32.gmra.mxu0 %v600
        %v686 = vpop.f32.mrf.mxu0
        %v687 = vadd.f32 0.0, %v686
        %688 = vmatmul.f32.gmra.mxu0 %v602
        %v689 = vpop.f32.mrf.mxu0
        %v690 = vadd.f32 0.0, %v689
        %691 = vmatmul.f32.gmra.mxu0 %v604
        %v692 = vpop.f32.mrf.mxu0
        %v693 = vadd.f32 0.0, %v692
        %694 = vmatmul.f32.gmra.mxu0 %v606
        %v695 = vpop.f32.mrf.mxu0
        %v696 = vadd.f32 0.0, %v695
        %697 = vmatmul.f32.gmra.mxu0 %v608
        %v698 = vpop.f32.mrf.mxu0
        %v699 = vadd.f32 0.0, %v698
        %700 = vmatmul.f32.gmra.mxu0 %v610
        %v701 = vpop.f32.mrf.mxu0
        %v702 = vadd.f32 0.0, %v701
        %703 = vmatmul.f32.gmra.mxu0 %v612
        %v704 = vpop.f32.mrf.mxu0
        %v705 = vadd.f32 0.0, %v704
        %706 = vmatmul.f32.gmra.mxu0 %v614
        %v707 = vpop.f32.mrf.mxu0
        %v708 = vadd.f32 0.0, %v707
        %709 = vmatmul.f32.gmra.mxu0 %v616
        %v710 = vpop.f32.mrf.mxu0
        %v711 = vadd.f32 0.0, %v710
        %712 = vmatmul.f32.gmra.mxu0 %v618
        %v713 = vpop.f32.mrf.mxu0
        %v714 = vadd.f32 0.0, %v713
        %715 = vmatmul.f32.gmra.mxu0 %v620
        %v716 = vpop.f32.mrf.mxu0
        %v717 = vadd.f32 0.0, %v716
        %718 = vmatmul.f32.gmra.mxu0 %v622
        %v719 = vpop.f32.mrf.mxu0
        %v720 = vadd.f32 0.0, %v719
        %721 = vmatmul.f32.gmra.mxu0 %v624
        %v722 = vpop.f32.mrf.mxu0
        %v723 = vadd.f32 0.0, %v722
        %724 = vmatmul.f32.gmra.mxu0 %v626
        %v725 = vpop.f32.mrf.mxu0
        %v726 = vadd.f32 0.0, %v725
        %727 = vmatmul.f32.gmra.mxu0 %v628
        %v728 = vpop.f32.mrf.mxu0
        %v729 = vadd.f32 0.0, %v728
        %730 = vmatmul.f32.gmra.mxu0 %v630
        %v731 = vpop.f32.mrf.mxu0
        %v732 = vadd.f32 0.0, %v731
        %733 = vmatmul.f32.gmra.mxu0 %v632
        %v734 = vpop.f32.mrf.mxu0
        %v735 = vadd.f32 0.0, %v734
        %736 = vmatmul.f32.gmra.mxu0 %v634
        %v737 = vpop.f32.mrf.mxu0
        %v738 = vadd.f32 0.0, %v737
        %739 = vmatmul.f32.gmra.mxu0 %v636
        %v740 = vpop.f32.mrf.mxu0
        %v741 = vadd.f32 0.0, %v740
        %742 = vmatmul.f32.gmra.mxu0 %v638
        %v743 = vpop.f32.mrf.mxu0
        %v744 = vadd.f32 0.0, %v743
        %745 = vmatmul.f32.gmra.mxu0 %v640
        %v746 = vpop.f32.mrf.mxu0
        %v747 = vadd.f32 0.0, %v746
        %748 = vmatmul.f32.gmra.mxu0 %v642
        %v749 = vpop.f32.mrf.mxu0
        %v750 = vadd.f32 0.0, %v749
        %751 = vmatmul.f32.gmra.mxu0 %v644
        %v752 = vpop.f32.mrf.mxu0
        %v753 = vadd.f32 0.0, %v752
        %754 = vmatmul.f32.gmra.mxu0 %v646
        %v755 = vpop.f32.mrf.mxu0
        %v756 = vadd.f32 0.0, %v755
        %757 = vmatmul.f32.gmra.mxu0 %v648
        %v758 = vpop.f32.mrf.mxu0
        %v759 = vadd.f32 0.0, %v758
        %760 = vmatmul.f32.gmra.mxu0 %v650
        %v761 = vpop.f32.mrf.mxu0
        %v762 = vadd.f32 0.0, %v761
        %763 = vmatmul.f32.gmra.mxu0 %v652
        %v764 = vpop.f32.mrf.mxu0
        %v765 = vadd.f32 0.0, %v764
        %766 = vmatmul.f32.gmra.mxu0 %v654
        %v767 = vpop.f32.mrf.mxu0
        %v768 = vadd.f32 0.0, %v767
        %769 = vmatmul.f32.gmra.mxu0 %v656
        %v770 = vpop.f32.mrf.mxu0
        %v771 = vadd.f32 0.0, %v770
        %772 = vmatmul.f32.gmra.mxu0 %v658
        %v773 = vpop.f32.mrf.mxu0
        %v774 = vadd.f32 0.0, %v773
        %775 = vdwg.mxu0
        %v776 = vld [vmem:[#allocation2] sm:$0xff]
        %v777 = vld [vmem:[#allocation2 + $0x8] sm:$0xff]
        %v778 = vld [vmem:[#allocation2 + $0x10] sm:$0xff]
        %v779 = vld [vmem:[#allocation2 + $0x18] sm:$0xff]
        %v780 = vld [vmem:[#allocation2 + $0x20] sm:$0xff]
        %v781 = vld [vmem:[#allocation2 + $0x28] sm:$0xff]
        %v782 = vld [vmem:[#allocation2 + $0x30] sm:$0xff]
        %v783 = vld [vmem:[#allocation2 + $0x38] sm:$0xff]
        %v784 = vld [vmem:[#allocation2 + $0x40] sm:$0xff]
        %v785 = vld [vmem:[#allocation2 + $0x48] sm:$0xff]
        %v786 = vld [vmem:[#allocation2 + $0x50] sm:$0xff]
        %v787 = vld [vmem:[#allocation2 + $0x58] sm:$0xff]
        %v788 = vld [vmem:[#allocation2 + $0x60] sm:$0xff]
        %v789 = vld [vmem:[#allocation2 + $0x68] sm:$0xff]
        %v790 = vld [vmem:[#allocation2 + $0x70] sm:$0xff]
        %v791 = vld [vmem:[#allocation2 + $0x78] sm:$0xff]
        %v792 = vld [vmem:[#allocation2 + $0x80] sm:$0xff]
        %v793 = vld [vmem:[#allocation2 + $0x88] sm:$0xff]
        %v794 = vld [vmem:[#allocation2 + $0x90] sm:$0xff]
        %v795 = vld [vmem:[#allocation2 + $0x98] sm:$0xff]
        %v796 = vld [vmem:[#allocation2 + $0xa0] sm:$0xff]
        %v797 = vld [vmem:[#allocation2 + $0xa8] sm:$0xff]
        %v798 = vld [vmem:[#allocation2 + $0xb0] sm:$0xff]
        %v799 = vld [vmem:[#allocation2 + $0xb8] sm:$0xff]
        %v800 = vld [vmem:[#allocation2 + $0xc0] sm:$0xff]
        %v801 = vld [vmem:[#allocation2 + $0xc8] sm:$0xff]
        %v802 = vld [vmem:[#allocation2 + $0xd0] sm:$0xff]
        %v803 = vld [vmem:[#allocation2 + $0xd8] sm:$0xff]
        %v804 = vld [vmem:[#allocation2 + $0xe0] sm:$0xff]
        %v805 = vld [vmem:[#allocation2 + $0xe8] sm:$0xff]
        %v806 = vld [vmem:[#allocation2 + $0xf0] sm:$0xff]
        %v807 = vld [vmem:[#allocation2 + $0xf8] sm:$0xff]
        %v808 = vadd.f32 %v776, %v681
        %v809 = vadd.f32 %v777, %v684
        %v810 = vadd.f32 %v778, %v687
        %v811 = vadd.f32 %v779, %v690
        %v812 = vadd.f32 %v780, %v693
        %v813 = vadd.f32 %v781, %v696
        %v814 = vadd.f32 %v782, %v699
        %v815 = vadd.f32 %v783, %v702
        %v816 = vadd.f32 %v784, %v705
        %v817 = vadd.f32 %v785, %v708
        %v818 = vadd.f32 %v786, %v711
        %v819 = vadd.f32 %v787, %v714
        %v820 = vadd.f32 %v788, %v717
        %v821 = vadd.f32 %v789, %v720
        %v822 = vadd.f32 %v790, %v723
        %v823 = vadd.f32 %v791, %v726
        %v824 = vadd.f32 %v792, %v729
        %v825 = vadd.f32 %v793, %v732
        %v826 = vadd.f32 %v794, %v735
        %v827 = vadd.f32 %v795, %v738
        %v828 = vadd.f32 %v796, %v741
        %v829 = vadd.f32 %v797, %v744
        %v830 = vadd.f32 %v798, %v747
        %v831 = vadd.f32 %v799, %v750
        %v832 = vadd.f32 %v800, %v753
        %v833 = vadd.f32 %v801, %v756
        %v834 = vadd.f32 %v802, %v759
        %v835 = vadd.f32 %v803, %v762
        %v836 = vadd.f32 %v804, %v765
        %v837 = vadd.f32 %v805, %v768
        %v838 = vadd.f32 %v806, %v771
        %v839 = vadd.f32 %v807, %v774
        %840 = vst [vmem:[#allocation2] sm:$0xff] %v808
        %841 = vst [vmem:[#allocation2 + $0x8] sm:$0xff] %v809
        %842 = vst [vmem:[#allocation2 + $0x10] sm:$0xff] %v810
        %843 = vst [vmem:[#allocation2 + $0x18] sm:$0xff] %v811
        %844 = vst [vmem:[#allocation2 + $0x20] sm:$0xff] %v812
        %845 = vst [vmem:[#allocation2 + $0x28] sm:$0xff] %v813
        %846 = vst [vmem:[#allocation2 + $0x30] sm:$0xff] %v814
        %847 = vst [vmem:[#allocation2 + $0x38] sm:$0xff] %v815
        %848 = vst [vmem:[#allocation2 + $0x40] sm:$0xff] %v816
        %849 = vst [vmem:[#allocation2 + $0x48] sm:$0xff] %v817
        %850 = vst [vmem:[#allocation2 + $0x50] sm:$0xff] %v818
        %851 = vst [vmem:[#allocation2 + $0x58] sm:$0xff] %v819
        %852 = vst [vmem:[#allocation2 + $0x60] sm:$0xff] %v820
        %853 = vst [vmem:[#allocation2 + $0x68] sm:$0xff] %v821
        %854 = vst [vmem:[#allocation2 + $0x70] sm:$0xff] %v822
        %855 = vst [vmem:[#allocation2 + $0x78] sm:$0xff] %v823
        %856 = vst [vmem:[#allocation2 + $0x80] sm:$0xff] %v824
        %857 = vst [vmem:[#allocation2 + $0x88] sm:$0xff] %v825
        %858 = vst [vmem:[#allocation2 + $0x90] sm:$0xff] %v826
        %859 = vst [vmem:[#allocation2 + $0x98] sm:$0xff] %v827
        %860 = vst [vmem:[#allocation2 + $0xa0] sm:$0xff] %v828
        %861 = vst [vmem:[#allocation2 + $0xa8] sm:$0xff] %v829
        %862 = vst [vmem:[#allocation2 + $0xb0] sm:$0xff] %v830
        %863 = vst [vmem:[#allocation2 + $0xb8] sm:$0xff] %v831
        %864 = vst [vmem:[#allocation2 + $0xc0] sm:$0xff] %v832
        %865 = vst [vmem:[#allocation2 + $0xc8] sm:$0xff] %v833
        %866 = vst [vmem:[#allocation2 + $0xd0] sm:$0xff] %v834
        %867 = vst [vmem:[#allocation2 + $0xd8] sm:$0xff] %v835
        %868 = vst [vmem:[#allocation2 + $0xe0] sm:$0xff] %v836
        %869 = vst [vmem:[#allocation2 + $0xe8] sm:$0xff] %v837
        %870 = vst [vmem:[#allocation2 + $0xf0] sm:$0xff] %v838
        %871 = vst [vmem:[#allocation2 + $0xf8] sm:$0xff] %v839
        %s872 = scalar_lea.vmem %s1, 8
        %v873 = vld [vmem:[%s872] sm:$0xf]
        %vm874 = vcmask 1045504
        %v875 = vrot.slane %v196, 2
        %v876 = vrot.slane %v197, 2
        %v877 = vsel %vm874, %v875, %v876
        %v878 = vrot.slane %v198, 2
        %v879 = vsel %vm874, %v876, %v878
        %v880 = vrot.slane %v199, 2
        %v881 = vrot.slane %v200, 2
        %v882 = vsel %vm874, %v880, %v881
        %v883 = vrot.slane %v201, 2
        %v884 = vsel %vm874, %v881, %v883
        %v885 = vrot.slane %v202, 2
        %v886 = vrot.slane %v203, 2
        %v887 = vsel %vm874, %v885, %v886
        %v888 = vrot.slane %v204, 2
        %v889 = vsel %vm874, %v886, %v888
        %v890 = vrot.slane %v205, 2
        %v891 = vrot.slane %v206, 2
        %v892 = vsel %vm874, %v890, %v891
        %v893 = vrot.slane %v207, 2
        %v894 = vsel %vm874, %v891, %v893
        %v895 = vrot.slane %v208, 2
        %v896 = vrot.slane %v209, 2
        %v897 = vsel %vm874, %v895, %v896
        %v898 = vrot.slane %v210, 2
        %v899 = vsel %vm874, %v896, %v898
        %v900 = vrot.slane %v211, 2
        %v901 = vrot.slane %v212, 2
        %v902 = vsel %vm874, %v900, %v901
        %v903 = vrot.slane %v213, 2
        %v904 = vsel %vm874, %v901, %v903
        %v905 = vrot.slane %v214, 2
        %v906 = vrot.slane %v215, 2
        %v907 = vsel %vm874, %v905, %v906
        %v908 = vrot.slane %v216, 2
        %v909 = vsel %vm874, %v906, %v908
        %v910 = vrot.slane %v217, 2
        %v911 = vrot.slane %v218, 2
        %v912 = vsel %vm874, %v910, %v911
        %v913 = vrot.slane %v219, 2
        %v914 = vsel %vm874, %v911, %v913
        %v915 = vrot.slane %v220, 2
        %v916 = vrot.slane %v221, 2
        %v917 = vsel %vm874, %v915, %v916
        %v918 = vrot.slane %v222, 2
        %v919 = vsel %vm874, %v916, %v918
        %v920 = vrot.slane %v223, 2
        %v921 = vrot.slane %v224, 2
        %v922 = vsel %vm874, %v920, %v921
        %v923 = vrot.slane %v225, 2
        %v924 = vsel %vm874, %v921, %v923
        %v925 = vrot.slane %v226, 2
        %v926 = vrot.slane %v227, 2
        %v927 = vsel %vm874, %v925, %v926
        %v928 = vrot.slane %v228, 2
        %v929 = vsel %vm874, %v926, %v928
        %v930 = vrot.slane %v229, 2
        %v931 = vrot.slane %v230, 2
        %v932 = vsel %vm874, %v930, %v931
        %v933 = vrot.slane %v231, 2
        %v934 = vsel %vm874, %v931, %v933
        %v935 = vrot.slane %v232, 2
        %v936 = vrot.slane %v233, 2
        %v937 = vsel %vm874, %v935, %v936
        %v938 = vrot.slane %v234, 2
        %v939 = vsel %vm874, %v936, %v938
        %v940 = vrot.slane %v235, 2
        %v941 = vrot.slane %v236, 2
        %v942 = vsel %vm874, %v940, %v941
        %v943 = vrot.slane %v237, 2
        %v944 = vsel %vm874, %v941, %v943
        %v945 = vrot.slane %v238, 2
        %v946 = vrot.slane %v239, 2
        %v947 = vsel %vm874, %v945, %v946
        %v948 = vrot.slane %v240, 2
        %v949 = vsel %vm874, %v946, %v948
        %v950 = vrot.slane %v241, 2
        %v951 = vrot.slane %v242, 2
        %v952 = vsel %vm874, %v950, %v951
        %v953 = vrot.slane %v243, 2
        %v954 = vsel %vm874, %v951, %v953
        %v955 = vsel %vm251, %v877, 0
        %v957 = vsel %vm251, %v879, 0
        %v959 = vsel %vm251, %v882, 0
        %v961 = vsel %vm251, %v884, 0
        %v963 = vsel %vm251, %v887, 0
        %v965 = vsel %vm251, %v889, 0
        %v967 = vsel %vm251, %v892, 0
        %v969 = vsel %vm251, %v894, 0
        %v971 = vsel %vm251, %v897, 0
        %v973 = vsel %vm251, %v899, 0
        %v975 = vsel %vm251, %v902, 0
        %v977 = vsel %vm251, %v904, 0
        %v979 = vsel %vm251, %v907, 0
        %v981 = vsel %vm251, %v909, 0
        %v983 = vsel %vm251, %v912, 0
        %v985 = vsel %vm251, %v914, 0
        %v987 = vsel %vm251, %v917, 0
        %v989 = vsel %vm251, %v919, 0
        %v991 = vsel %vm251, %v922, 0
        %v993 = vsel %vm251, %v924, 0
        %v995 = vsel %vm251, %v927, 0
        %v997 = vsel %vm251, %v929, 0
        %v999 = vsel %vm251, %v932, 0
        %v1001 = vsel %vm251, %v934, 0
        %v1003 = vsel %vm251, %v937, 0
        %v1005 = vsel %vm251, %v939, 0
        %v1007 = vsel %vm251, %v942, 0
        %v1009 = vsel %vm251, %v944, 0
        %v1011 = vsel %vm251, %v947, 0
        %v1013 = vsel %vm251, %v949, 0
        %v1015 = vsel %vm251, %v952, 0
        %v1017 = vsel %vm251, %v954, 0
        %v1020 = vsel %vm348, %v873, 0
        %1022 = vmatpush.msra.mxu0 0.0
        %1023 = vmatpush.msra.mxu0 0.0
        %1024 = vmatpush.msra.mxu0 0.0
        %1025 = vmatpush.msra.mxu0 0.0
        %1026 = vmatpush.msra.mxu0 0.0
        %1027 = vmatpush.msra.mxu0 0.0
        %1028 = vmatpush.msra.mxu0 0.0
        %1029 = vmatpush.msra.mxu0 0.0
        %1030 = vmatpush.msra.mxu0 0.0
        %1031 = vmatpush.msra.mxu0 0.0
        %1032 = vmatpush.msra.mxu0 0.0
        %1033 = vmatpush.msra.mxu0 0.0
        %1034 = vmatpush.msra.mxu0 0.0
        %1035 = vmatpush.msra.mxu0 0.0
        %1036 = vmatpush.msra.mxu0 0.0
        %1037 = vmatpush.msra.mxu0 %v1020
        %1038 = vmatmul.f32.gmra.mxu0 %v955
        %v1039 = vpop.f32.mrf.mxu0
        %v1040 = vadd.f32 0.0, %v1039
        %1041 = vmatmul.f32.gmra.mxu0 %v957
        %v1042 = vpop.f32.mrf.mxu0
        %v1043 = vadd.f32 0.0, %v1042
        %1044 = vmatmul.f32.gmra.mxu0 %v959
        %v1045 = vpop.f32.mrf.mxu0
        %v1046 = vadd.f32 0.0, %v1045
        %1047 = vmatmul.f32.gmra.mxu0 %v961
        %v1048 = vpop.f32.mrf.mxu0
        %v1049 = vadd.f32 0.0, %v1048
        %1050 = vmatmul.f32.gmra.mxu0 %v963
        %v1051 = vpop.f32.mrf.mxu0
        %v1052 = vadd.f32 0.0, %v1051
        %1053 = vmatmul.f32.gmra.mxu0 %v965
        %v1054 = vpop.f32.mrf.mxu0
        %v1055 = vadd.f32 0.0, %v1054
        %1056 = vmatmul.f32.gmra.mxu0 %v967
        %v1057 = vpop.f32.mrf.mxu0
        %v1058 = vadd.f32 0.0, %v1057
        %1059 = vmatmul.f32.gmra.mxu0 %v969
        %v1060 = vpop.f32.mrf.mxu0
        %v1061 = vadd.f32 0.0, %v1060
        %1062 = vmatmul.f32.gmra.mxu0 %v971
        %v1063 = vpop.f32.mrf.mxu0
        %v1064 = vadd.f32 0.0, %v1063
        %1065 = vmatmul.f32.gmra.mxu0 %v973
        %v1066 = vpop.f32.mrf.mxu0
        %v1067 = vadd.f32 0.0, %v1066
        %1068 = vmatmul.f32.gmra.mxu0 %v975
        %v1069 = vpop.f32.mrf.mxu0
        %v1070 = vadd.f32 0.0, %v1069
        %1071 = vmatmul.f32.gmra.mxu0 %v977
        %v1072 = vpop.f32.mrf.mxu0
        %v1073 = vadd.f32 0.0, %v1072
        %1074 = vmatmul.f32.gmra.mxu0 %v979
        %v1075 = vpop.f32.mrf.mxu0
        %v1076 = vadd.f32 0.0, %v1075
        %1077 = vmatmul.f32.gmra.mxu0 %v981
        %v1078 = vpop.f32.mrf.mxu0
        %v1079 = vadd.f32 0.0, %v1078
        %1080 = vmatmul.f32.gmra.mxu0 %v983
        %v1081 = vpop.f32.mrf.mxu0
        %v1082 = vadd.f32 0.0, %v1081
        %1083 = vmatmul.f32.gmra.mxu0 %v985
        %v1084 = vpop.f32.mrf.mxu0
        %v1085 = vadd.f32 0.0, %v1084
        %1086 = vmatmul.f32.gmra.mxu0 %v987
        %v1087 = vpop.f32.mrf.mxu0
        %v1088 = vadd.f32 0.0, %v1087
        %1089 = vmatmul.f32.gmra.mxu0 %v989
        %v1090 = vpop.f32.mrf.mxu0
        %v1091 = vadd.f32 0.0, %v1090
        %1092 = vmatmul.f32.gmra.mxu0 %v991
        %v1093 = vpop.f32.mrf.mxu0
        %v1094 = vadd.f32 0.0, %v1093
        %1095 = vmatmul.f32.gmra.mxu0 %v993
        %v1096 = vpop.f32.mrf.mxu0
        %v1097 = vadd.f32 0.0, %v1096
        %1098 = vmatmul.f32.gmra.mxu0 %v995
        %v1099 = vpop.f32.mrf.mxu0
        %v1100 = vadd.f32 0.0, %v1099
        %1101 = vmatmul.f32.gmra.mxu0 %v997
        %v1102 = vpop.f32.mrf.mxu0
        %v1103 = vadd.f32 0.0, %v1102
        %1104 = vmatmul.f32.gmra.mxu0 %v999
        %v1105 = vpop.f32.mrf.mxu0
        %v1106 = vadd.f32 0.0, %v1105
        %1107 = vmatmul.f32.gmra.mxu0 %v1001
        %v1108 = vpop.f32.mrf.mxu0
        %v1109 = vadd.f32 0.0, %v1108
        %1110 = vmatmul.f32.gmra.mxu0 %v1003
        %v1111 = vpop.f32.mrf.mxu0
        %v1112 = vadd.f32 0.0, %v1111
        %1113 = vmatmul.f32.gmra.mxu0 %v1005
        %v1114 = vpop.f32.mrf.mxu0
        %v1115 = vadd.f32 0.0, %v1114
        %1116 = vmatmul.f32.gmra.mxu0 %v1007
        %v1117 = vpop.f32.mrf.mxu0
        %v1118 = vadd.f32 0.0, %v1117
        %1119 = vmatmul.f32.gmra.mxu0 %v1009
        %v1120 = vpop.f32.mrf.mxu0
        %v1121 = vadd.f32 0.0, %v1120
        %1122 = vmatmul.f32.gmra.mxu0 %v1011
        %v1123 = vpop.f32.mrf.mxu0
        %v1124 = vadd.f32 0.0, %v1123
        %1125 = vmatmul.f32.gmra.mxu0 %v1013
        %v1126 = vpop.f32.mrf.mxu0
        %v1127 = vadd.f32 0.0, %v1126
        %1128 = vmatmul.f32.gmra.mxu0 %v1015
        %v1129 = vpop.f32.mrf.mxu0
        %v1130 = vadd.f32 0.0, %v1129
        %1131 = vmatmul.f32.gmra.mxu0 %v1017
        %v1132 = vpop.f32.mrf.mxu0
        %v1133 = vadd.f32 0.0, %v1132
        %1134 = vdwg.mxu0
        %v1135 = vld [vmem:[#allocation2] sm:$0xff]
        %v1136 = vld [vmem:[#allocation2 + $0x8] sm:$0xff]
        %v1137 = vld [vmem:[#allocation2 + $0x10] sm:$0xff]
        %v1138 = vld [vmem:[#allocation2 + $0x18] sm:$0xff]
        %v1139 = vld [vmem:[#allocation2 + $0x20] sm:$0xff]
        %v1140 = vld [vmem:[#allocation2 + $0x28] sm:$0xff]
        %v1141 = vld [vmem:[#allocation2 + $0x30] sm:$0xff]
        %v1142 = vld [vmem:[#allocation2 + $0x38] sm:$0xff]
        %v1143 = vld [vmem:[#allocation2 + $0x40] sm:$0xff]
        %v1144 = vld [vmem:[#allocation2 + $0x48] sm:$0xff]
        %v1145 = vld [vmem:[#allocation2 + $0x50] sm:$0xff]
        %v1146 = vld [vmem:[#allocation2 + $0x58] sm:$0xff]
        %v1147 = vld [vmem:[#allocation2 + $0x60] sm:$0xff]
        %v1148 = vld [vmem:[#allocation2 + $0x68] sm:$0xff]
        %v1149 = vld [vmem:[#allocation2 + $0x70] sm:$0xff]
        %v1150 = vld [vmem:[#allocation2 + $0x78] sm:$0xff]
        %v1151 = vld [vmem:[#allocation2 + $0x80] sm:$0xff]
        %v1152 = vld [vmem:[#allocation2 + $0x88] sm:$0xff]
        %v1153 = vld [vmem:[#allocation2 + $0x90] sm:$0xff]
        %v1154 = vld [vmem:[#allocation2 + $0x98] sm:$0xff]
        %v1155 = vld [vmem:[#allocation2 + $0xa0] sm:$0xff]
        %v1156 = vld [vmem:[#allocation2 + $0xa8] sm:$0xff]
        %v1157 = vld [vmem:[#allocation2 + $0xb0] sm:$0xff]
        %v1158 = vld [vmem:[#allocation2 + $0xb8] sm:$0xff]
        %v1159 = vld [vmem:[#allocation2 + $0xc0] sm:$0xff]
        %v1160 = vld [vmem:[#allocation2 + $0xc8] sm:$0xff]
        %v1161 = vld [vmem:[#allocation2 + $0xd0] sm:$0xff]
        %v1162 = vld [vmem:[#allocation2 + $0xd8] sm:$0xff]
        %v1163 = vld [vmem:[#allocation2 + $0xe0] sm:$0xff]
        %v1164 = vld [vmem:[#allocation2 + $0xe8] sm:$0xff]
        %v1165 = vld [vmem:[#allocation2 + $0xf0] sm:$0xff]
        %v1166 = vld [vmem:[#allocation2 + $0xf8] sm:$0xff]
        %v1167 = vadd.f32 %v1135, %v1040
        %v1168 = vadd.f32 %v1136, %v1043
        %v1169 = vadd.f32 %v1137, %v1046
        %v1170 = vadd.f32 %v1138, %v1049
        %v1171 = vadd.f32 %v1139, %v1052
        %v1172 = vadd.f32 %v1140, %v1055
        %v1173 = vadd.f32 %v1141, %v1058
        %v1174 = vadd.f32 %v1142, %v1061
        %v1175 = vadd.f32 %v1143, %v1064
        %v1176 = vadd.f32 %v1144, %v1067
        %v1177 = vadd.f32 %v1145, %v1070
        %v1178 = vadd.f32 %v1146, %v1073
        %v1179 = vadd.f32 %v1147, %v1076
        %v1180 = vadd.f32 %v1148, %v1079
        %v1181 = vadd.f32 %v1149, %v1082
        %v1182 = vadd.f32 %v1150, %v1085
        %v1183 = vadd.f32 %v1151, %v1088
        %v1184 = vadd.f32 %v1152, %v1091
        %v1185 = vadd.f32 %v1153, %v1094
        %v1186 = vadd.f32 %v1154, %v1097
        %v1187 = vadd.f32 %v1155, %v1100
        %v1188 = vadd.f32 %v1156, %v1103
        %v1189 = vadd.f32 %v1157, %v1106
        %v1190 = vadd.f32 %v1158, %v1109
        %v1191 = vadd.f32 %v1159, %v1112
        %v1192 = vadd.f32 %v1160, %v1115
        %v1193 = vadd.f32 %v1161, %v1118
        %v1194 = vadd.f32 %v1162, %v1121
        %v1195 = vadd.f32 %v1163, %v1124
        %v1196 = vadd.f32 %v1164, %v1127
        %v1197 = vadd.f32 %v1165, %v1130
        %v1198 = vadd.f32 %v1166, %v1133
        %1199 = vst [vmem:[#allocation2] sm:$0xff] %v1167
        %1200 = vst [vmem:[#allocation2 + $0x8] sm:$0xff] %v1168
        %1201 = vst [vmem:[#allocation2 + $0x10] sm:$0xff] %v1169
        %1202 = vst [vmem:[#allocation2 + $0x18] sm:$0xff] %v1170
        %1203 = vst [vmem:[#allocation2 + $0x20] sm:$0xff] %v1171
        %1204 = vst [vmem:[#allocation2 + $0x28] sm:$0xff] %v1172
        %1205 = vst [vmem:[#allocation2 + $0x30] sm:$0xff] %v1173
        %1206 = vst [vmem:[#allocation2 + $0x38] sm:$0xff] %v1174
        %1207 = vst [vmem:[#allocation2 + $0x40] sm:$0xff] %v1175
        %1208 = vst [vmem:[#allocation2 + $0x48] sm:$0xff] %v1176
        %1209 = vst [vmem:[#allocation2 + $0x50] sm:$0xff] %v1177
        %1210 = vst [vmem:[#allocation2 + $0x58] sm:$0xff] %v1178
        %1211 = vst [vmem:[#allocation2 + $0x60] sm:$0xff] %v1179
        %1212 = vst [vmem:[#allocation2 + $0x68] sm:$0xff] %v1180
        %1213 = vst [vmem:[#allocation2 + $0x70] sm:$0xff] %v1181
        %1214 = vst [vmem:[#allocation2 + $0x78] sm:$0xff] %v1182
        %1215 = vst [vmem:[#allocation2 + $0x80] sm:$0xff] %v1183
        %1216 = vst [vmem:[#allocation2 + $0x88] sm:$0xff] %v1184
        %1217 = vst [vmem:[#allocation2 + $0x90] sm:$0xff] %v1185
        %1218 = vst [vmem:[#allocation2 + $0x98] sm:$0xff] %v1186
        %1219 = vst [vmem:[#allocation2 + $0xa0] sm:$0xff] %v1187
        %1220 = vst [vmem:[#allocation2 + $0xa8] sm:$0xff] %v1188
        %1221 = vst [vmem:[#allocation2 + $0xb0] sm:$0xff] %v1189
        %1222 = vst [vmem:[#allocation2 + $0xb8] sm:$0xff] %v1190
        %1223 = vst [vmem:[#allocation2 + $0xc0] sm:$0xff] %v1191
        %1224 = vst [vmem:[#allocation2 + $0xc8] sm:$0xff] %v1192
        %1225 = vst [vmem:[#allocation2 + $0xd0] sm:$0xff] %v1193
        %1226 = vst [vmem:[#allocation2 + $0xd8] sm:$0xff] %v1194
        %1227 = vst [vmem:[#allocation2 + $0xe0] sm:$0xff] %v1195
        %1228 = vst [vmem:[#allocation2 + $0xe8] sm:$0xff] %v1196
        %1229 = vst [vmem:[#allocation2 + $0xf0] sm:$0xff] %v1197
        %1230 = vst [vmem:[#allocation2 + $0xf8] sm:$0xff] %v1198
        %s1231 = scalar_lea.vmem %s1, 12
        %v1232 = vld [vmem:[%s1231] sm:$0xf]
        %v1234 = vsel %vm251, %v244, 0
        %v1237 = vsel %vm251, %v245, 0
        %v1240 = vsel %vm348, %v1232, 0
        %1242 = vmatpush.msra.mxu0 0.0
        %1243 = vmatpush.msra.mxu0 0.0
        %1244 = vmatpush.msra.mxu0 0.0
        %1245 = vmatpush.msra.mxu0 0.0
        %1246 = vmatpush.msra.mxu0 0.0
        %1247 = vmatpush.msra.mxu0 0.0
        %1248 = vmatpush.msra.mxu0 0.0
        %1249 = vmatpush.msra.mxu0 0.0
        %1250 = vmatpush.msra.mxu0 0.0
        %1251 = vmatpush.msra.mxu0 0.0
        %1252 = vmatpush.msra.mxu0 0.0
        %1253 = vmatpush.msra.mxu0 0.0
        %1254 = vmatpush.msra.mxu0 0.0
        %1255 = vmatpush.msra.mxu0 0.0
        %1256 = vmatpush.msra.mxu0 0.0
        %1257 = vmatpush.msra.mxu0 %v1240
        %1258 = vmatmul.f32.gmra.mxu0 %v259
        %v1259 = vpop.f32.mrf.mxu0
        %v1260 = vadd.f32 0.0, %v1259
        %1261 = vmatmul.f32.gmra.mxu0 %v262
        %v1262 = vpop.f32.mrf.mxu0
        %v1263 = vadd.f32 0.0, %v1262
        %1264 = vmatmul.f32.gmra.mxu0 %v265
        %v1265 = vpop.f32.mrf.mxu0
        %v1266 = vadd.f32 0.0, %v1265
        %1267 = vmatmul.f32.gmra.mxu0 %v268
        %v1268 = vpop.f32.mrf.mxu0
        %v1269 = vadd.f32 0.0, %v1268
        %1270 = vmatmul.f32.gmra.mxu0 %v271
        %v1271 = vpop.f32.mrf.mxu0
        %v1272 = vadd.f32 0.0, %v1271
        %1273 = vmatmul.f32.gmra.mxu0 %v274
        %v1274 = vpop.f32.mrf.mxu0
        %v1275 = vadd.f32 0.0, %v1274
        %1276 = vmatmul.f32.gmra.mxu0 %v277
        %v1277 = vpop.f32.mrf.mxu0
        %v1278 = vadd.f32 0.0, %v1277
        %1279 = vmatmul.f32.gmra.mxu0 %v280
        %v1280 = vpop.f32.mrf.mxu0
        %v1281 = vadd.f32 0.0, %v1280
        %1282 = vmatmul.f32.gmra.mxu0 %v283
        %v1283 = vpop.f32.mrf.mxu0
        %v1284 = vadd.f32 0.0, %v1283
        %1285 = vmatmul.f32.gmra.mxu0 %v286
        %v1286 = vpop.f32.mrf.mxu0
        %v1287 = vadd.f32 0.0, %v1286
        %1288 = vmatmul.f32.gmra.mxu0 %v289
        %v1289 = vpop.f32.mrf.mxu0
        %v1290 = vadd.f32 0.0, %v1289
        %1291 = vmatmul.f32.gmra.mxu0 %v292
        %v1292 = vpop.f32.mrf.mxu0
        %v1293 = vadd.f32 0.0, %v1292
        %1294 = vmatmul.f32.gmra.mxu0 %v295
        %v1295 = vpop.f32.mrf.mxu0
        %v1296 = vadd.f32 0.0, %v1295
        %1297 = vmatmul.f32.gmra.mxu0 %v298
        %v1298 = vpop.f32.mrf.mxu0
        %v1299 = vadd.f32 0.0, %v1298
        %1300 = vmatmul.f32.gmra.mxu0 %v301
        %v1301 = vpop.f32.mrf.mxu0
        %v1302 = vadd.f32 0.0, %v1301
        %1303 = vmatmul.f32.gmra.mxu0 %v304
        %v1304 = vpop.f32.mrf.mxu0
        %v1305 = vadd.f32 0.0, %v1304
        %1306 = vmatmul.f32.gmra.mxu0 %v307
        %v1307 = vpop.f32.mrf.mxu0
        %v1308 = vadd.f32 0.0, %v1307
        %1309 = vmatmul.f32.gmra.mxu0 %v310
        %v1310 = vpop.f32.mrf.mxu0
        %v1311 = vadd.f32 0.0, %v1310
        %1312 = vmatmul.f32.gmra.mxu0 %v313
        %v1313 = vpop.f32.mrf.mxu0
        %v1314 = vadd.f32 0.0, %v1313
        %1315 = vmatmul.f32.gmra.mxu0 %v316
        %v1316 = vpop.f32.mrf.mxu0
        %v1317 = vadd.f32 0.0, %v1316
        %1318 = vmatmul.f32.gmra.mxu0 %v319
        %v1319 = vpop.f32.mrf.mxu0
        %v1320 = vadd.f32 0.0, %v1319
        %1321 = vmatmul.f32.gmra.mxu0 %v322
        %v1322 = vpop.f32.mrf.mxu0
        %v1323 = vadd.f32 0.0, %v1322
        %1324 = vmatmul.f32.gmra.mxu0 %v325
        %v1325 = vpop.f32.mrf.mxu0
        %v1326 = vadd.f32 0.0, %v1325
        %1327 = vmatmul.f32.gmra.mxu0 %v328
        %v1328 = vpop.f32.mrf.mxu0
        %v1329 = vadd.f32 0.0, %v1328
        %1330 = vmatmul.f32.gmra.mxu0 %v331
        %v1331 = vpop.f32.mrf.mxu0
        %v1332 = vadd.f32 0.0, %v1331
        %1333 = vmatmul.f32.gmra.mxu0 %v334
        %v1334 = vpop.f32.mrf.mxu0
        %v1335 = vadd.f32 0.0, %v1334
        %1336 = vmatmul.f32.gmra.mxu0 %v337
        %v1337 = vpop.f32.mrf.mxu0
        %v1338 = vadd.f32 0.0, %v1337
        %1339 = vmatmul.f32.gmra.mxu0 %v340
        %v1340 = vpop.f32.mrf.mxu0
        %v1341 = vadd.f32 0.0, %v1340
        %1342 = vmatmul.f32.gmra.mxu0 %v343
        %v1343 = vpop.f32.mrf.mxu0
        %v1344 = vadd.f32 0.0, %v1343
        %1345 = vmatmul.f32.gmra.mxu0 %v346
        %v1346 = vpop.f32.mrf.mxu0
        %v1347 = vadd.f32 0.0, %v1346
        %1348 = vmatmul.f32.gmra.mxu0 %v1234
        %v1349 = vpop.f32.mrf.mxu0
        %v1350 = vadd.f32 0.0, %v1349
        %1351 = vmatmul.f32.gmra.mxu0 %v1237
        %v1352 = vpop.f32.mrf.mxu0
        %v1353 = vadd.f32 0.0, %v1352
        %1354 = vdwg.mxu0
        %v1355 = vld [vmem:[#allocation2] sm:$0xff]
        %v1356 = vld [vmem:[#allocation2 + $0x8] sm:$0xff]
        %v1357 = vld [vmem:[#allocation2 + $0x10] sm:$0xff]
        %v1358 = vld [vmem:[#allocation2 + $0x18] sm:$0xff]
        %v1359 = vld [vmem:[#allocation2 + $0x20] sm:$0xff]
        %v1360 = vld [vmem:[#allocation2 + $0x28] sm:$0xff]
        %v1361 = vld [vmem:[#allocation2 + $0x30] sm:$0xff]
        %v1362 = vld [vmem:[#allocation2 + $0x38] sm:$0xff]
        %v1363 = vld [vmem:[#allocation2 + $0x40] sm:$0xff]
        %v1364 = vld [vmem:[#allocation2 + $0x48] sm:$0xff]
        %v1365 = vld [vmem:[#allocation2 + $0x50] sm:$0xff]
        %v1366 = vld [vmem:[#allocation2 + $0x58] sm:$0xff]
        %v1367 = vld [vmem:[#allocation2 + $0x60] sm:$0xff]
        %v1368 = vld [vmem:[#allocation2 + $0x68] sm:$0xff]
        %v1369 = vld [vmem:[#allocation2 + $0x70] sm:$0xff]
        %v1370 = vld [vmem:[#allocation2 + $0x78] sm:$0xff]
        %v1371 = vld [vmem:[#allocation2 + $0x80] sm:$0xff]
        %v1372 = vld [vmem:[#allocation2 + $0x88] sm:$0xff]
        %v1373 = vld [vmem:[#allocation2 + $0x90] sm:$0xff]
        %v1374 = vld [vmem:[#allocation2 + $0x98] sm:$0xff]
        %v1375 = vld [vmem:[#allocation2 + $0xa0] sm:$0xff]
        %v1376 = vld [vmem:[#allocation2 + $0xa8] sm:$0xff]
        %v1377 = vld [vmem:[#allocation2 + $0xb0] sm:$0xff]
        %v1378 = vld [vmem:[#allocation2 + $0xb8] sm:$0xff]
        %v1379 = vld [vmem:[#allocation2 + $0xc0] sm:$0xff]
        %v1380 = vld [vmem:[#allocation2 + $0xc8] sm:$0xff]
        %v1381 = vld [vmem:[#allocation2 + $0xd0] sm:$0xff]
        %v1382 = vld [vmem:[#allocation2 + $0xd8] sm:$0xff]
        %v1383 = vld [vmem:[#allocation2 + $0xe0] sm:$0xff]
        %v1384 = vld [vmem:[#allocation2 + $0xe8] sm:$0xff]
        %v1385 = vld [vmem:[#allocation2 + $0xf0] sm:$0xff]
        %v1386 = vld [vmem:[#allocation2 + $0xf8] sm:$0xff]
        %v1387 = vadd.f32 %v1355, %v1260
        %v1388 = vadd.f32 %v1356, %v1263
        %v1389 = vadd.f32 %v1357, %v1266
        %v1390 = vadd.f32 %v1358, %v1269
        %v1391 = vadd.f32 %v1359, %v1272
        %v1392 = vadd.f32 %v1360, %v1275
        %v1393 = vadd.f32 %v1361, %v1278
        %v1394 = vadd.f32 %v1362, %v1281
        %v1395 = vadd.f32 %v1363, %v1284
        %v1396 = vadd.f32 %v1364, %v1287
        %v1397 = vadd.f32 %v1365, %v1290
        %v1398 = vadd.f32 %v1366, %v1293
        %v1399 = vadd.f32 %v1367, %v1296
        %v1400 = vadd.f32 %v1368, %v1299
        %v1401 = vadd.f32 %v1369, %v1302
        %v1402 = vadd.f32 %v1370, %v1305
        %v1403 = vadd.f32 %v1371, %v1308
        %v1404 = vadd.f32 %v1372, %v1311
        %v1405 = vadd.f32 %v1373, %v1314
        %v1406 = vadd.f32 %v1374, %v1317
        %v1407 = vadd.f32 %v1375, %v1320
        %v1408 = vadd.f32 %v1376, %v1323
        %v1409 = vadd.f32 %v1377, %v1326
        %v1410 = vadd.f32 %v1378, %v1329
        %v1411 = vadd.f32 %v1379, %v1332
        %v1412 = vadd.f32 %v1380, %v1335
        %v1413 = vadd.f32 %v1381, %v1338
        %v1414 = vadd.f32 %v1382, %v1341
        %v1415 = vadd.f32 %v1383, %v1344
        %v1416 = vadd.f32 %v1384, %v1347
        %v1417 = vadd.f32 %v1385, %v1350
        %v1418 = vadd.f32 %v1386, %v1353
        %1419 = vst [vmem:[#allocation2] sm:$0xff] %v1387
        %1420 = vst [vmem:[#allocation2 + $0x8] sm:$0xff] %v1388
        %1421 = vst [vmem:[#allocation2 + $0x10] sm:$0xff] %v1389
        %1422 = vst [vmem:[#allocation2 + $0x18] sm:$0xff] %v1390
        %1423 = vst [vmem:[#allocation2 + $0x20] sm:$0xff] %v1391
        %1424 = vst [vmem:[#allocation2 + $0x28] sm:$0xff] %v1392
        %1425 = vst [vmem:[#allocation2 + $0x30] sm:$0xff] %v1393
        %1426 = vst [vmem:[#allocation2 + $0x38] sm:$0xff] %v1394
        %1427 = vst [vmem:[#allocation2 + $0x40] sm:$0xff] %v1395
        %1428 = vst [vmem:[#allocation2 + $0x48] sm:$0xff] %v1396
        %1429 = vst [vmem:[#allocation2 + $0x50] sm:$0xff] %v1397
        %1430 = vst [vmem:[#allocation2 + $0x58] sm:$0xff] %v1398
        %1431 = vst [vmem:[#allocation2 + $0x60] sm:$0xff] %v1399
        %1432 = vst [vmem:[#allocation2 + $0x68] sm:$0xff] %v1400
        %1433 = vst [vmem:[#allocation2 + $0x70] sm:$0xff] %v1401
        %1434 = vst [vmem:[#allocation2 + $0x78] sm:$0xff] %v1402
        %1435 = vst [vmem:[#allocation2 + $0x80] sm:$0xff] %v1403
        %1436 = vst [vmem:[#allocation2 + $0x88] sm:$0xff] %v1404
        %1437 = vst [vmem:[#allocation2 + $0x90] sm:$0xff] %v1405
        %1438 = vst [vmem:[#allocation2 + $0x98] sm:$0xff] %v1406
        %1439 = vst [vmem:[#allocation2 + $0xa0] sm:$0xff] %v1407
        %1440 = vst [vmem:[#allocation2 + $0xa8] sm:$0xff] %v1408
        %1441 = vst [vmem:[#allocation2 + $0xb0] sm:$0xff] %v1409
        %1442 = vst [vmem:[#allocation2 + $0xb8] sm:$0xff] %v1410
        %1443 = vst [vmem:[#allocation2 + $0xc0] sm:$0xff] %v1411
        %1444 = vst [vmem:[#allocation2 + $0xc8] sm:$0xff] %v1412
        %1445 = vst [vmem:[#allocation2 + $0xd0] sm:$0xff] %v1413
        %1446 = vst [vmem:[#allocation2 + $0xd8] sm:$0xff] %v1414
        %1447 = vst [vmem:[#allocation2 + $0xe0] sm:$0xff] %v1415
        %1448 = vst [vmem:[#allocation2 + $0xe8] sm:$0xff] %v1416
        %1449 = vst [vmem:[#allocation2 + $0xf0] sm:$0xff] %v1417
        %1450 = vst [vmem:[#allocation2 + $0xf8] sm:$0xff] %v1418
        %s1451 = scalar_lea.vmem %s1, 16
        %v1452 = vld [vmem:[%s1451] sm:$0xf]
        %v1454 = vrot.slane %v244, 1
        %v1455 = vrot.slane %v245, 1
        %v1456 = vsel %vm515, %v1454, %v1455
        %v1457 = vrot.slane %v246, 1
        %v1458 = vsel %vm515, %v1455, %v1457
        %v1459 = vsel %vm251, %v1456, 0
        %v1461 = vsel %vm251, %v1458, 0
        %v1464 = vsel %vm348, %v1452, 0
        %1466 = vmatpush.msra.mxu0 0.0
        %1467 = vmatpush.msra.mxu0 0.0
        %1468 = vmatpush.msra.mxu0 0.0
        %1469 = vmatpush.msra.mxu0 0.0
        %1470 = vmatpush.msra.mxu0 0.0
        %1471 = vmatpush.msra.mxu0 0.0
        %1472 = vmatpush.msra.mxu0 0.0
        %1473 = vmatpush.msra.mxu0 0.0
        %1474 = vmatpush.msra.mxu0 0.0
        %1475 = vmatpush.msra.mxu0 0.0
        %1476 = vmatpush.msra.mxu0 0.0
        %1477 = vmatpush.msra.mxu0 0.0
        %1478 = vmatpush.msra.mxu0 0.0
        %1479 = vmatpush.msra.mxu0 0.0
        %1480 = vmatpush.msra.mxu0 0.0
        %1481 = vmatpush.msra.mxu0 %v1464
        %1482 = vmatmul.f32.gmra.mxu0 %v600
        %v1483 = vpop.f32.mrf.mxu0
        %v1484 = vadd.f32 0.0, %v1483
        %1485 = vmatmul.f32.gmra.mxu0 %v602
        %v1486 = vpop.f32.mrf.mxu0
        %v1487 = vadd.f32 0.0, %v1486
        %1488 = vmatmul.f32.gmra.mxu0 %v604
        %v1489 = vpop.f32.mrf.mxu0
        %v1490 = vadd.f32 0.0, %v1489
        %1491 = vmatmul.f32.gmra.mxu0 %v606
        %v1492 = vpop.f32.mrf.mxu0
        %v1493 = vadd.f32 0.0, %v1492
        %1494 = vmatmul.f32.gmra.mxu0 %v608
        %v1495 = vpop.f32.mrf.mxu0
        %v1496 = vadd.f32 0.0, %v1495
        %1497 = vmatmul.f32.gmra.mxu0 %v610
        %v1498 = vpop.f32.mrf.mxu0
        %v1499 = vadd.f32 0.0, %v1498
        %1500 = vmatmul.f32.gmra.mxu0 %v612
        %v1501 = vpop.f32.mrf.mxu0
        %v1502 = vadd.f32 0.0, %v1501
        %1503 = vmatmul.f32.gmra.mxu0 %v614
        %v1504 = vpop.f32.mrf.mxu0
        %v1505 = vadd.f32 0.0, %v1504
        %1506 = vmatmul.f32.gmra.mxu0 %v616
        %v1507 = vpop.f32.mrf.mxu0
        %v1508 = vadd.f32 0.0, %v1507
        %1509 = vmatmul.f32.gmra.mxu0 %v618
        %v1510 = vpop.f32.mrf.mxu0
        %v1511 = vadd.f32 0.0, %v1510
        %1512 = vmatmul.f32.gmra.mxu0 %v620
        %v1513 = vpop.f32.mrf.mxu0
        %v1514 = vadd.f32 0.0, %v1513
        %1515 = vmatmul.f32.gmra.mxu0 %v622
        %v1516 = vpop.f32.mrf.mxu0
        %v1517 = vadd.f32 0.0, %v1516
        %1518 = vmatmul.f32.gmra.mxu0 %v624
        %v1519 = vpop.f32.mrf.mxu0
        %v1520 = vadd.f32 0.0, %v1519
        %1521 = vmatmul.f32.gmra.mxu0 %v626
        %v1522 = vpop.f32.mrf.mxu0
        %v1523 = vadd.f32 0.0, %v1522
        %1524 = vmatmul.f32.gmra.mxu0 %v628
        %v1525 = vpop.f32.mrf.mxu0
        %v1526 = vadd.f32 0.0, %v1525
        %1527 = vmatmul.f32.gmra.mxu0 %v630
        %v1528 = vpop.f32.mrf.mxu0
        %v1529 = vadd.f32 0.0, %v1528
        %1530 = vmatmul.f32.gmra.mxu0 %v632
        %v1531 = vpop.f32.mrf.mxu0
        %v1532 = vadd.f32 0.0, %v1531
        %1533 = vmatmul.f32.gmra.mxu0 %v634
        %v1534 = vpop.f32.mrf.mxu0
        %v1535 = vadd.f32 0.0, %v1534
        %1536 = vmatmul.f32.gmra.mxu0 %v636
        %v1537 = vpop.f32.mrf.mxu0
        %v1538 = vadd.f32 0.0, %v1537
        %1539 = vmatmul.f32.gmra.mxu0 %v638
        %v1540 = vpop.f32.mrf.mxu0
        %v1541 = vadd.f32 0.0, %v1540
        %1542 = vmatmul.f32.gmra.mxu0 %v640
        %v1543 = vpop.f32.mrf.mxu0
        %v1544 = vadd.f32 0.0, %v1543
        %1545 = vmatmul.f32.gmra.mxu0 %v642
        %v1546 = vpop.f32.mrf.mxu0
        %v1547 = vadd.f32 0.0, %v1546
        %1548 = vmatmul.f32.gmra.mxu0 %v644
        %v1549 = vpop.f32.mrf.mxu0
        %v1550 = vadd.f32 0.0, %v1549
        %1551 = vmatmul.f32.gmra.mxu0 %v646
        %v1552 = vpop.f32.mrf.mxu0
        %v1553 = vadd.f32 0.0, %v1552
        %1554 = vmatmul.f32.gmra.mxu0 %v648
        %v1555 = vpop.f32.mrf.mxu0
        %v1556 = vadd.f32 0.0, %v1555
        %1557 = vmatmul.f32.gmra.mxu0 %v650
        %v1558 = vpop.f32.mrf.mxu0
        %v1559 = vadd.f32 0.0, %v1558
        %1560 = vmatmul.f32.gmra.mxu0 %v652
        %v1561 = vpop.f32.mrf.mxu0
        %v1562 = vadd.f32 0.0, %v1561
        %1563 = vmatmul.f32.gmra.mxu0 %v654
        %v1564 = vpop.f32.mrf.mxu0
        %v1565 = vadd.f32 0.0, %v1564
        %1566 = vmatmul.f32.gmra.mxu0 %v656
        %v1567 = vpop.f32.mrf.mxu0
        %v1568 = vadd.f32 0.0, %v1567
        %1569 = vmatmul.f32.gmra.mxu0 %v658
        %v1570 = vpop.f32.mrf.mxu0
        %v1571 = vadd.f32 0.0, %v1570
        %1572 = vmatmul.f32.gmra.mxu0 %v1459
        %v1573 = vpop.f32.mrf.mxu0
        %v1574 = vadd.f32 0.0, %v1573
        %1575 = vmatmul.f32.gmra.mxu0 %v1461
        %v1576 = vpop.f32.mrf.mxu0
        %v1577 = vadd.f32 0.0, %v1576
        %1578 = vdwg.mxu0
        %v1579 = vld [vmem:[#allocation2] sm:$0xff]
        %v1580 = vld [vmem:[#allocation2 + $0x8] sm:$0xff]
        %v1581 = vld [vmem:[#allocation2 + $0x10] sm:$0xff]
        %v1582 = vld [vmem:[#allocation2 + $0x18] sm:$0xff]
        %v1583 = vld [vmem:[#allocation2 + $0x20] sm:$0xff]
        %v1584 = vld [vmem:[#allocation2 + $0x28] sm:$0xff]
        %v1585 = vld [vmem:[#allocation2 + $0x30] sm:$0xff]
        %v1586 = vld [vmem:[#allocation2 + $0x38] sm:$0xff]
        %v1587 = vld [vmem:[#allocation2 + $0x40] sm:$0xff]
        %v1588 = vld [vmem:[#allocation2 + $0x48] sm:$0xff]
        %v1589 = vld [vmem:[#allocation2 + $0x50] sm:$0xff]
        %v1590 = vld [vmem:[#allocation2 + $0x58] sm:$0xff]
        %v1591 = vld [vmem:[#allocation2 + $0x60] sm:$0xff]
        %v1592 = vld [vmem:[#allocation2 + $0x68] sm:$0xff]
        %v1593 = vld [vmem:[#allocation2 + $0x70] sm:$0xff]
        %v1594 = vld [vmem:[#allocation2 + $0x78] sm:$0xff]
        %v1595 = vld [vmem:[#allocation2 + $0x80] sm:$0xff]
        %v1596 = vld [vmem:[#allocation2 + $0x88] sm:$0xff]
        %v1597 = vld [vmem:[#allocation2 + $0x90] sm:$0xff]
        %v1598 = vld [vmem:[#allocation2 + $0x98] sm:$0xff]
        %v1599 = vld [vmem:[#allocation2 + $0xa0] sm:$0xff]
        %v1600 = vld [vmem:[#allocation2 + $0xa8] sm:$0xff]
        %v1601 = vld [vmem:[#allocation2 + $0xb0] sm:$0xff]
        %v1602 = vld [vmem:[#allocation2 + $0xb8] sm:$0xff]
        %v1603 = vld [vmem:[#allocation2 + $0xc0] sm:$0xff]
        %v1604 = vld [vmem:[#allocation2 + $0xc8] sm:$0xff]
        %v1605 = vld [vmem:[#allocation2 + $0xd0] sm:$0xff]
        %v1606 = vld [vmem:[#allocation2 + $0xd8] sm:$0xff]
        %v1607 = vld [vmem:[#allocation2 + $0xe0] sm:$0xff]
        %v1608 = vld [vmem:[#allocation2 + $0xe8] sm:$0xff]
        %v1609 = vld [vmem:[#allocation2 + $0xf0] sm:$0xff]
        %v1610 = vld [vmem:[#allocation2 + $0xf8] sm:$0xff]
        %v1611 = vadd.f32 %v1579, %v1484
        %v1612 = vadd.f32 %v1580, %v1487
        %v1613 = vadd.f32 %v1581, %v1490
        %v1614 = vadd.f32 %v1582, %v1493
        %v1615 = vadd.f32 %v1583, %v1496
        %v1616 = vadd.f32 %v1584, %v1499
        %v1617 = vadd.f32 %v1585, %v1502
        %v1618 = vadd.f32 %v1586, %v1505
        %v1619 = vadd.f32 %v1587, %v1508
        %v1620 = vadd.f32 %v1588, %v1511
        %v1621 = vadd.f32 %v1589, %v1514
        %v1622 = vadd.f32 %v1590, %v1517
        %v1623 = vadd.f32 %v1591, %v1520
        %v1624 = vadd.f32 %v1592, %v1523
        %v1625 = vadd.f32 %v1593, %v1526
        %v1626 = vadd.f32 %v1594, %v1529
        %v1627 = vadd.f32 %v1595, %v1532
        %v1628 = vadd.f32 %v1596, %v1535
        %v1629 = vadd.f32 %v1597, %v1538
        %v1630 = vadd.f32 %v1598, %v1541
        %v1631 = vadd.f32 %v1599, %v1544
        %v1632 = vadd.f32 %v1600, %v1547
        %v1633 = vadd.f32 %v1601, %v1550
        %v1634 = vadd.f32 %v1602, %v1553
        %v1635 = vadd.f32 %v1603, %v1556
        %v1636 = vadd.f32 %v1604, %v1559
        %v1637 = vadd.f32 %v1605, %v1562
        %v1638 = vadd.f32 %v1606, %v1565
        %v1639 = vadd.f32 %v1607, %v1568
        %v1640 = vadd.f32 %v1608, %v1571
        %v1641 = vadd.f32 %v1609, %v1574
        %v1642 = vadd.f32 %v1610, %v1577
        %1643 = vst [vmem:[#allocation2] sm:$0xff] %v1611
        %1644 = vst [vmem:[#allocation2 + $0x8] sm:$0xff] %v1612
        %1645 = vst [vmem:[#allocation2 + $0x10] sm:$0xff] %v1613
        %1646 = vst [vmem:[#allocation2 + $0x18] sm:$0xff] %v1614
        %1647 = vst [vmem:[#allocation2 + $0x20] sm:$0xff] %v1615
        %1648 = vst [vmem:[#allocation2 + $0x28] sm:$0xff] %v1616
        %1649 = vst [vmem:[#allocation2 + $0x30] sm:$0xff] %v1617
        %1650 = vst [vmem:[#allocation2 + $0x38] sm:$0xff] %v1618
        %1651 = vst [vmem:[#allocation2 + $0x40] sm:$0xff] %v1619
        %1652 = vst [vmem:[#allocation2 + $0x48] sm:$0xff] %v1620
        %1653 = vst [vmem:[#allocation2 + $0x50] sm:$0xff] %v1621
        %1654 = vst [vmem:[#allocation2 + $0x58] sm:$0xff] %v1622
        %1655 = vst [vmem:[#allocation2 + $0x60] sm:$0xff] %v1623
        %1656 = vst [vmem:[#allocation2 + $0x68] sm:$0xff] %v1624
        %1657 = vst [vmem:[#allocation2 + $0x70] sm:$0xff] %v1625
        %1658 = vst [vmem:[#allocation2 + $0x78] sm:$0xff] %v1626
        %1659 = vst [vmem:[#allocation2 + $0x80] sm:$0xff] %v1627
        %1660 = vst [vmem:[#allocation2 + $0x88] sm:$0xff] %v1628
        %1661 = vst [vmem:[#allocation2 + $0x90] sm:$0xff] %v1629
        %1662 = vst [vmem:[#allocation2 + $0x98] sm:$0xff] %v1630
        %1663 = vst [vmem:[#allocation2 + $0xa0] sm:$0xff] %v1631
        %1664 = vst [vmem:[#allocation2 + $0xa8] sm:$0xff] %v1632
        %1665 = vst [vmem:[#allocation2 + $0xb0] sm:$0xff] %v1633
        %1666 = vst [vmem:[#allocation2 + $0xb8] sm:$0xff] %v1634
        %1667 = vst [vmem:[#allocation2 + $0xc0] sm:$0xff] %v1635
        %1668 = vst [vmem:[#allocation2 + $0xc8] sm:$0xff] %v1636
        %1669 = vst [vmem:[#allocation2 + $0xd0] sm:$0xff] %v1637
        %1670 = vst [vmem:[#allocation2 + $0xd8] sm:$0xff] %v1638
        %1671 = vst [vmem:[#allocation2 + $0xe0] sm:$0xff] %v1639
        %1672 = vst [vmem:[#allocation2 + $0xe8] sm:$0xff] %v1640
        %1673 = vst [vmem:[#allocation2 + $0xf0] sm:$0xff] %v1641
        %1674 = vst [vmem:[#allocation2 + $0xf8] sm:$0xff] %v1642
        %s1675 = scalar_lea.vmem %s1, 20
        %v1676 = vld [vmem:[%s1675] sm:$0xf]
        %v1677 = vrot.slane %v244, 2
        %v1678 = vrot.slane %v245, 2
        %v1679 = vsel %vm874, %v1677, %v1678
        %v1680 = vrot.slane %v246, 2
        %v1681 = vsel %vm874, %v1678, %v1680
        %v1682 = vsel %vm251, %v1679, 0
        %v1684 = vsel %vm251, %v1681, 0
        %v1687 = vsel %vm348, %v1676, 0
        %1689 = vmatpush.msra.mxu0 0.0
        %1690 = vmatpush.msra.mxu0 0.0
        %1691 = vmatpush.msra.mxu0 0.0
        %1692 = vmatpush.msra.mxu0 0.0
        %1693 = vmatpush.msra.mxu0 0.0
        %1694 = vmatpush.msra.mxu0 0.0
        %1695 = vmatpush.msra.mxu0 0.0
        %1696 = vmatpush.msra.mxu0 0.0
        %1697 = vmatpush.msra.mxu0 0.0
        %1698 = vmatpush.msra.mxu0 0.0
        %1699 = vmatpush.msra.mxu0 0.0
        %1700 = vmatpush.msra.mxu0 0.0
        %1701 = vmatpush.msra.mxu0 0.0
        %1702 = vmatpush.msra.mxu0 0.0
        %1703 = vmatpush.msra.mxu0 0.0
        %1704 = vmatpush.msra.mxu0 %v1687
        %1705 = vmatmul.f32.gmra.mxu0 %v959
        %v1706 = vpop.f32.mrf.mxu0
        %v1707 = vadd.f32 0.0, %v1706
        %1708 = vmatmul.f32.gmra.mxu0 %v961
        %v1709 = vpop.f32.mrf.mxu0
        %v1710 = vadd.f32 0.0, %v1709
        %1711 = vmatmul.f32.gmra.mxu0 %v963
        %v1712 = vpop.f32.mrf.mxu0
        %v1713 = vadd.f32 0.0, %v1712
        %1714 = vmatmul.f32.gmra.mxu0 %v965
        %v1715 = vpop.f32.mrf.mxu0
        %v1716 = vadd.f32 0.0, %v1715
        %1717 = vmatmul.f32.gmra.mxu0 %v967
        %v1718 = vpop.f32.mrf.mxu0
        %v1719 = vadd.f32 0.0, %v1718
        %1720 = vmatmul.f32.gmra.mxu0 %v969
        %v1721 = vpop.f32.mrf.mxu0
        %v1722 = vadd.f32 0.0, %v1721
        %1723 = vmatmul.f32.gmra.mxu0 %v971
        %v1724 = vpop.f32.mrf.mxu0
        %v1725 = vadd.f32 0.0, %v1724
        %1726 = vmatmul.f32.gmra.mxu0 %v973
        %v1727 = vpop.f32.mrf.mxu0
        %v1728 = vadd.f32 0.0, %v1727
        %1729 = vmatmul.f32.gmra.mxu0 %v975
        %v1730 = vpop.f32.mrf.mxu0
        %v1731 = vadd.f32 0.0, %v1730
        %1732 = vmatmul.f32.gmra.mxu0 %v977
        %v1733 = vpop.f32.mrf.mxu0
        %v1734 = vadd.f32 0.0, %v1733
        %1735 = vmatmul.f32.gmra.mxu0 %v979
        %v1736 = vpop.f32.mrf.mxu0
        %v1737 = vadd.f32 0.0, %v1736
        %1738 = vmatmul.f32.gmra.mxu0 %v981
        %v1739 = vpop.f32.mrf.mxu0
        %v1740 = vadd.f32 0.0, %v1739
        %1741 = vmatmul.f32.gmra.mxu0 %v983
        %v1742 = vpop.f32.mrf.mxu0
        %v1743 = vadd.f32 0.0, %v1742
        %1744 = vmatmul.f32.gmra.mxu0 %v985
        %v1745 = vpop.f32.mrf.mxu0
        %v1746 = vadd.f32 0.0, %v1745
        %1747 = vmatmul.f32.gmra.mxu0 %v987
        %v1748 = vpop.f32.mrf.mxu0
        %v1749 = vadd.f32 0.0, %v1748
        %1750 = vmatmul.f32.gmra.mxu0 %v989
        %v1751 = vpop.f32.mrf.mxu0
        %v1752 = vadd.f32 0.0, %v1751
        %1753 = vmatmul.f32.gmra.mxu0 %v991
        %v1754 = vpop.f32.mrf.mxu0
        %v1755 = vadd.f32 0.0, %v1754
        %1756 = vmatmul.f32.gmra.mxu0 %v993
        %v1757 = vpop.f32.mrf.mxu0
        %v1758 = vadd.f32 0.0, %v1757
        %1759 = vmatmul.f32.gmra.mxu0 %v995
        %v1760 = vpop.f32.mrf.mxu0
        %v1761 = vadd.f32 0.0, %v1760
        %1762 = vmatmul.f32.gmra.mxu0 %v997
        %v1763 = vpop.f32.mrf.mxu0
        %v1764 = vadd.f32 0.0, %v1763
        %1765 = vmatmul.f32.gmra.mxu0 %v999
        %v1766 = vpop.f32.mrf.mxu0
        %v1767 = vadd.f32 0.0, %v1766
        %1768 = vmatmul.f32.gmra.mxu0 %v1001
        %v1769 = vpop.f32.mrf.mxu0
        %v1770 = vadd.f32 0.0, %v1769
        %1771 = vmatmul.f32.gmra.mxu0 %v1003
        %v1772 = vpop.f32.mrf.mxu0
        %v1773 = vadd.f32 0.0, %v1772
        %1774 = vmatmul.f32.gmra.mxu0 %v1005
        %v1775 = vpop.f32.mrf.mxu0
        %v1776 = vadd.f32 0.0, %v1775
        %1777 = vmatmul.f32.gmra.mxu0 %v1007
        %v1778 = vpop.f32.mrf.mxu0
        %v1779 = vadd.f32 0.0, %v1778
        %1780 = vmatmul.f32.gmra.mxu0 %v1009
        %v1781 = vpop.f32.mrf.mxu0
        %v1782 = vadd.f32 0.0, %v1781
        %1783 = vmatmul.f32.gmra.mxu0 %v1011
        %v1784 = vpop.f32.mrf.mxu0
        %v1785 = vadd.f32 0.0, %v1784
        %1786 = vmatmul.f32.gmra.mxu0 %v1013
        %v1787 = vpop.f32.mrf.mxu0
        %v1788 = vadd.f32 0.0, %v1787
        %1789 = vmatmul.f32.gmra.mxu0 %v1015
        %v1790 = vpop.f32.mrf.mxu0
        %v1791 = vadd.f32 0.0, %v1790
        %1792 = vmatmul.f32.gmra.mxu0 %v1017
        %v1793 = vpop.f32.mrf.mxu0
        %v1794 = vadd.f32 0.0, %v1793
        %1795 = vmatmul.f32.gmra.mxu0 %v1682
        %v1796 = vpop.f32.mrf.mxu0
        %v1797 = vadd.f32 0.0, %v1796
        %1798 = vmatmul.f32.gmra.mxu0 %v1684
        %v1799 = vpop.f32.mrf.mxu0
        %v1800 = vadd.f32 0.0, %v1799
        %1801 = vdwg.mxu0
        %v1802 = vld [vmem:[#allocation2] sm:$0xff]
        %v1803 = vld [vmem:[#allocation2 + $0x8] sm:$0xff]
        %v1804 = vld [vmem:[#allocation2 + $0x10] sm:$0xff]
        %v1805 = vld [vmem:[#allocation2 + $0x18] sm:$0xff]
        %v1806 = vld [vmem:[#allocation2 + $0x20] sm:$0xff]
        %v1807 = vld [vmem:[#allocation2 + $0x28] sm:$0xff]
        %v1808 = vld [vmem:[#allocation2 + $0x30] sm:$0xff]
        %v1809 = vld [vmem:[#allocation2 + $0x38] sm:$0xff]
        %v1810 = vld [vmem:[#allocation2 + $0x40] sm:$0xff]
        %v1811 = vld [vmem:[#allocation2 + $0x48] sm:$0xff]
        %v1812 = vld [vmem:[#allocation2 + $0x50] sm:$0xff]
        %v1813 = vld [vmem:[#allocation2 + $0x58] sm:$0xff]
        %v1814 = vld [vmem:[#allocation2 + $0x60] sm:$0xff]
        %v1815 = vld [vmem:[#allocation2 + $0x68] sm:$0xff]
        %v1816 = vld [vmem:[#allocation2 + $0x70] sm:$0xff]
        %v1817 = vld [vmem:[#allocation2 + $0x78] sm:$0xff]
        %v1818 = vld [vmem:[#allocation2 + $0x80] sm:$0xff]
        %v1819 = vld [vmem:[#allocation2 + $0x88] sm:$0xff]
        %v1820 = vld [vmem:[#allocation2 + $0x90] sm:$0xff]
        %v1821 = vld [vmem:[#allocation2 + $0x98] sm:$0xff]
        %v1822 = vld [vmem:[#allocation2 + $0xa0] sm:$0xff]
        %v1823 = vld [vmem:[#allocation2 + $0xa8] sm:$0xff]
        %v1824 = vld [vmem:[#allocation2 + $0xb0] sm:$0xff]
        %v1825 = vld [vmem:[#allocation2 + $0xb8] sm:$0xff]
        %v1826 = vld [vmem:[#allocation2 + $0xc0] sm:$0xff]
        %v1827 = vld [vmem:[#allocation2 + $0xc8] sm:$0xff]
        %v1828 = vld [vmem:[#allocation2 + $0xd0] sm:$0xff]
        %v1829 = vld [vmem:[#allocation2 + $0xd8] sm:$0xff]
        %v1830 = vld [vmem:[#allocation2 + $0xe0] sm:$0xff]
        %v1831 = vld [vmem:[#allocation2 + $0xe8] sm:$0xff]
        %v1832 = vld [vmem:[#allocation2 + $0xf0] sm:$0xff]
        %v1833 = vld [vmem:[#allocation2 + $0xf8] sm:$0xff]
        %v1834 = vadd.f32 %v1802, %v1707
        %v1835 = vadd.f32 %v1803, %v1710
        %v1836 = vadd.f32 %v1804, %v1713
        %v1837 = vadd.f32 %v1805, %v1716
        %v1838 = vadd.f32 %v1806, %v1719
        %v1839 = vadd.f32 %v1807, %v1722
        %v1840 = vadd.f32 %v1808, %v1725
        %v1841 = vadd.f32 %v1809, %v1728
        %v1842 = vadd.f32 %v1810, %v1731
        %v1843 = vadd.f32 %v1811, %v1734
        %v1844 = vadd.f32 %v1812, %v1737
        %v1845 = vadd.f32 %v1813, %v1740
        %v1846 = vadd.f32 %v1814, %v1743
        %v1847 = vadd.f32 %v1815, %v1746
        %v1848 = vadd.f32 %v1816, %v1749
        %v1849 = vadd.f32 %v1817, %v1752
        %v1850 = vadd.f32 %v1818, %v1755
        %v1851 = vadd.f32 %v1819, %v1758
        %v1852 = vadd.f32 %v1820, %v1761
        %v1853 = vadd.f32 %v1821, %v1764
        %v1854 = vadd.f32 %v1822, %v1767
        %v1855 = vadd.f32 %v1823, %v1770
        %v1856 = vadd.f32 %v1824, %v1773
        %v1857 = vadd.f32 %v1825, %v1776
        %v1858 = vadd.f32 %v1826, %v1779
        %v1859 = vadd.f32 %v1827, %v1782
        %v1860 = vadd.f32 %v1828, %v1785
        %v1861 = vadd.f32 %v1829, %v1788
        %v1862 = vadd.f32 %v1830, %v1791
        %v1863 = vadd.f32 %v1831, %v1794
        %v1864 = vadd.f32 %v1832, %v1797
        %v1865 = vadd.f32 %v1833, %v1800
        %1866 = vst [vmem:[#allocation2] sm:$0xff] %v1834
        %1867 = vst [vmem:[#allocation2 + $0x8] sm:$0xff] %v1835
        %1868 = vst [vmem:[#allocation2 + $0x10] sm:$0xff] %v1836
        %1869 = vst [vmem:[#allocation2 + $0x18] sm:$0xff] %v1837
        %1870 = vst [vmem:[#allocation2 + $0x20] sm:$0xff] %v1838
        %1871 = vst [vmem:[#allocation2 + $0x28] sm:$0xff] %v1839
        %1872 = vst [vmem:[#allocation2 + $0x30] sm:$0xff] %v1840
        %1873 = vst [vmem:[#allocation2 + $0x38] sm:$0xff] %v1841
        %1874 = vst [vmem:[#allocation2 + $0x40] sm:$0xff] %v1842
        %1875 = vst [vmem:[#allocation2 + $0x48] sm:$0xff] %v1843
        %1876 = vst [vmem:[#allocation2 + $0x50] sm:$0xff] %v1844
        %1877 = vst [vmem:[#allocation2 + $0x58] sm:$0xff] %v1845
        %1878 = vst [vmem:[#allocation2 + $0x60] sm:$0xff] %v1846
        %1879 = vst [vmem:[#allocation2 + $0x68] sm:$0xff] %v1847
        %1880 = vst [vmem:[#allocation2 + $0x70] sm:$0xff] %v1848
        %1881 = vst [vmem:[#allocation2 + $0x78] sm:$0xff] %v1849
        %1882 = vst [vmem:[#allocation2 + $0x80] sm:$0xff] %v1850
        %1883 = vst [vmem:[#allocation2 + $0x88] sm:$0xff] %v1851
        %1884 = vst [vmem:[#allocation2 + $0x90] sm:$0xff] %v1852
        %1885 = vst [vmem:[#allocation2 + $0x98] sm:$0xff] %v1853
        %1886 = vst [vmem:[#allocation2 + $0xa0] sm:$0xff] %v1854
        %1887 = vst [vmem:[#allocation2 + $0xa8] sm:$0xff] %v1855
        %1888 = vst [vmem:[#allocation2 + $0xb0] sm:$0xff] %v1856
        %1889 = vst [vmem:[#allocation2 + $0xb8] sm:$0xff] %v1857
        %1890 = vst [vmem:[#allocation2 + $0xc0] sm:$0xff] %v1858
        %1891 = vst [vmem:[#allocation2 + $0xc8] sm:$0xff] %v1859
        %1892 = vst [vmem:[#allocation2 + $0xd0] sm:$0xff] %v1860
        %1893 = vst [vmem:[#allocation2 + $0xd8] sm:$0xff] %v1861
        %1894 = vst [vmem:[#allocation2 + $0xe0] sm:$0xff] %v1862
        %1895 = vst [vmem:[#allocation2 + $0xe8] sm:$0xff] %v1863
        %1896 = vst [vmem:[#allocation2 + $0xf0] sm:$0xff] %v1864
        %1897 = vst [vmem:[#allocation2 + $0xf8] sm:$0xff] %v1865
        %s1898 = scalar_lea.vmem %s1, 24
        %v1899 = vld [vmem:[%s1898] sm:$0xf]
        %v1901 = vsel %vm251, %v247, 0
        %v1904 = vsel %vm251, %v248, 0
        %v1907 = vsel %vm348, %v1899, 0
        %1909 = vmatpush.msra.mxu0 0.0
        %1910 = vmatpush.msra.mxu0 0.0
        %1911 = vmatpush.msra.mxu0 0.0
        %1912 = vmatpush.msra.mxu0 0.0
        %1913 = vmatpush.msra.mxu0 0.0
        %1914 = vmatpush.msra.mxu0 0.0
        %1915 = vmatpush.msra.mxu0 0.0
        %1916 = vmatpush.msra.mxu0 0.0
        %1917 = vmatpush.msra.mxu0 0.0
        %1918 = vmatpush.msra.mxu0 0.0
        %1919 = vmatpush.msra.mxu0 0.0
        %1920 = vmatpush.msra.mxu0 0.0
        %1921 = vmatpush.msra.mxu0 0.0
        %1922 = vmatpush.msra.mxu0 0.0
        %1923 = vmatpush.msra.mxu0 0.0
        %1924 = vmatpush.msra.mxu0 %v1907
        %1925 = vmatmul.f32.gmra.mxu0 %v265
        %v1926 = vpop.f32.mrf.mxu0
        %v1927 = vadd.f32 0.0, %v1926
        %1928 = vmatmul.f32.gmra.mxu0 %v268
        %v1929 = vpop.f32.mrf.mxu0
        %v1930 = vadd.f32 0.0, %v1929
        %1931 = vmatmul.f32.gmra.mxu0 %v271
        %v1932 = vpop.f32.mrf.mxu0
        %v1933 = vadd.f32 0.0, %v1932
        %1934 = vmatmul.f32.gmra.mxu0 %v274
        %v1935 = vpop.f32.mrf.mxu0
        %v1936 = vadd.f32 0.0, %v1935
        %1937 = vmatmul.f32.gmra.mxu0 %v277
        %v1938 = vpop.f32.mrf.mxu0
        %v1939 = vadd.f32 0.0, %v1938
        %1940 = vmatmul.f32.gmra.mxu0 %v280
        %v1941 = vpop.f32.mrf.mxu0
        %v1942 = vadd.f32 0.0, %v1941
        %1943 = vmatmul.f32.gmra.mxu0 %v283
        %v1944 = vpop.f32.mrf.mxu0
        %v1945 = vadd.f32 0.0, %v1944
        %1946 = vmatmul.f32.gmra.mxu0 %v286
        %v1947 = vpop.f32.mrf.mxu0
        %v1948 = vadd.f32 0.0, %v1947
        %1949 = vmatmul.f32.gmra.mxu0 %v289
        %v1950 = vpop.f32.mrf.mxu0
        %v1951 = vadd.f32 0.0, %v1950
        %1952 = vmatmul.f32.gmra.mxu0 %v292
        %v1953 = vpop.f32.mrf.mxu0
        %v1954 = vadd.f32 0.0, %v1953
        %1955 = vmatmul.f32.gmra.mxu0 %v295
        %v1956 = vpop.f32.mrf.mxu0
        %v1957 = vadd.f32 0.0, %v1956
        %1958 = vmatmul.f32.gmra.mxu0 %v298
        %v1959 = vpop.f32.mrf.mxu0
        %v1960 = vadd.f32 0.0, %v1959
        %1961 = vmatmul.f32.gmra.mxu0 %v301
        %v1962 = vpop.f32.mrf.mxu0
        %v1963 = vadd.f32 0.0, %v1962
        %1964 = vmatmul.f32.gmra.mxu0 %v304
        %v1965 = vpop.f32.mrf.mxu0
        %v1966 = vadd.f32 0.0, %v1965
        %1967 = vmatmul.f32.gmra.mxu0 %v307
        %v1968 = vpop.f32.mrf.mxu0
        %v1969 = vadd.f32 0.0, %v1968
        %1970 = vmatmul.f32.gmra.mxu0 %v310
        %v1971 = vpop.f32.mrf.mxu0
        %v1972 = vadd.f32 0.0, %v1971
        %1973 = vmatmul.f32.gmra.mxu0 %v313
        %v1974 = vpop.f32.mrf.mxu0
        %v1975 = vadd.f32 0.0, %v1974
        %1976 = vmatmul.f32.gmra.mxu0 %v316
        %v1977 = vpop.f32.mrf.mxu0
        %v1978 = vadd.f32 0.0, %v1977
        %1979 = vmatmul.f32.gmra.mxu0 %v319
        %v1980 = vpop.f32.mrf.mxu0
        %v1981 = vadd.f32 0.0, %v1980
        %1982 = vmatmul.f32.gmra.mxu0 %v322
        %v1983 = vpop.f32.mrf.mxu0
        %v1984 = vadd.f32 0.0, %v1983
        %1985 = vmatmul.f32.gmra.mxu0 %v325
        %v1986 = vpop.f32.mrf.mxu0
        %v1987 = vadd.f32 0.0, %v1986
        %1988 = vmatmul.f32.gmra.mxu0 %v328
        %v1989 = vpop.f32.mrf.mxu0
        %v1990 = vadd.f32 0.0, %v1989
        %1991 = vmatmul.f32.gmra.mxu0 %v331
        %v1992 = vpop.f32.mrf.mxu0
        %v1993 = vadd.f32 0.0, %v1992
        %1994 = vmatmul.f32.gmra.mxu0 %v334
        %v1995 = vpop.f32.mrf.mxu0
        %v1996 = vadd.f32 0.0, %v1995
        %1997 = vmatmul.f32.gmra.mxu0 %v337
        %v1998 = vpop.f32.mrf.mxu0
        %v1999 = vadd.f32 0.0, %v1998
        %2000 = vmatmul.f32.gmra.mxu0 %v340
        %v2001 = vpop.f32.mrf.mxu0
        %v2002 = vadd.f32 0.0, %v2001
        %2003 = vmatmul.f32.gmra.mxu0 %v343
        %v2004 = vpop.f32.mrf.mxu0
        %v2005 = vadd.f32 0.0, %v2004
        %2006 = vmatmul.f32.gmra.mxu0 %v346
        %v2007 = vpop.f32.mrf.mxu0
        %v2008 = vadd.f32 0.0, %v2007
        %2009 = vmatmul.f32.gmra.mxu0 %v1234
        %v2010 = vpop.f32.mrf.mxu0
        %v2011 = vadd.f32 0.0, %v2010
        %2012 = vmatmul.f32.gmra.mxu0 %v1237
        %v2013 = vpop.f32.mrf.mxu0
        %v2014 = vadd.f32 0.0, %v2013
        %2015 = vmatmul.f32.gmra.mxu0 %v1901
        %v2016 = vpop.f32.mrf.mxu0
        %v2017 = vadd.f32 0.0, %v2016
        %2018 = vmatmul.f32.gmra.mxu0 %v1904
        %v2019 = vpop.f32.mrf.mxu0
        %v2020 = vadd.f32 0.0, %v2019
        %2021 = vdwg.mxu0
        %v2022 = vld [vmem:[#allocation2] sm:$0xff]
        %v2023 = vld [vmem:[#allocation2 + $0x8] sm:$0xff]
        %v2024 = vld [vmem:[#allocation2 + $0x10] sm:$0xff]
        %v2025 = vld [vmem:[#allocation2 + $0x18] sm:$0xff]
        %v2026 = vld [vmem:[#allocation2 + $0x20] sm:$0xff]
        %v2027 = vld [vmem:[#allocation2 + $0x28] sm:$0xff]
        %v2028 = vld [vmem:[#allocation2 + $0x30] sm:$0xff]
        %v2029 = vld [vmem:[#allocation2 + $0x38] sm:$0xff]
        %v2030 = vld [vmem:[#allocation2 + $0x40] sm:$0xff]
        %v2031 = vld [vmem:[#allocation2 + $0x48] sm:$0xff]
        %v2032 = vld [vmem:[#allocation2 + $0x50] sm:$0xff]
        %v2033 = vld [vmem:[#allocation2 + $0x58] sm:$0xff]
        %v2034 = vld [vmem:[#allocation2 + $0x60] sm:$0xff]
        %v2035 = vld [vmem:[#allocation2 + $0x68] sm:$0xff]
        %v2036 = vld [vmem:[#allocation2 + $0x70] sm:$0xff]
        %v2037 = vld [vmem:[#allocation2 + $0x78] sm:$0xff]
        %v2038 = vld [vmem:[#allocation2 + $0x80] sm:$0xff]
        %v2039 = vld [vmem:[#allocation2 + $0x88] sm:$0xff]
        %v2040 = vld [vmem:[#allocation2 + $0x90] sm:$0xff]
        %v2041 = vld [vmem:[#allocation2 + $0x98] sm:$0xff]
        %v2042 = vld [vmem:[#allocation2 + $0xa0] sm:$0xff]
        %v2043 = vld [vmem:[#allocation2 + $0xa8] sm:$0xff]
        %v2044 = vld [vmem:[#allocation2 + $0xb0] sm:$0xff]
        %v2045 = vld [vmem:[#allocation2 + $0xb8] sm:$0xff]
        %v2046 = vld [vmem:[#allocation2 + $0xc0] sm:$0xff]
        %v2047 = vld [vmem:[#allocation2 + $0xc8] sm:$0xff]
        %v2048 = vld [vmem:[#allocation2 + $0xd0] sm:$0xff]
        %v2049 = vld [vmem:[#allocation2 + $0xd8] sm:$0xff]
        %v2050 = vld [vmem:[#allocation2 + $0xe0] sm:$0xff]
        %v2051 = vld [vmem:[#allocation2 + $0xe8] sm:$0xff]
        %v2052 = vld [vmem:[#allocation2 + $0xf0] sm:$0xff]
        %v2053 = vld [vmem:[#allocation2 + $0xf8] sm:$0xff]
        %v2054 = vadd.f32 %v2022, %v1927
        %v2055 = vadd.f32 %v2023, %v1930
        %v2056 = vadd.f32 %v2024, %v1933
        %v2057 = vadd.f32 %v2025, %v1936
        %v2058 = vadd.f32 %v2026, %v1939
        %v2059 = vadd.f32 %v2027, %v1942
        %v2060 = vadd.f32 %v2028, %v1945
        %v2061 = vadd.f32 %v2029, %v1948
        %v2062 = vadd.f32 %v2030, %v1951
        %v2063 = vadd.f32 %v2031, %v1954
        %v2064 = vadd.f32 %v2032, %v1957
        %v2065 = vadd.f32 %v2033, %v1960
        %v2066 = vadd.f32 %v2034, %v1963
        %v2067 = vadd.f32 %v2035, %v1966
        %v2068 = vadd.f32 %v2036, %v1969
        %v2069 = vadd.f32 %v2037, %v1972
        %v2070 = vadd.f32 %v2038, %v1975
        %v2071 = vadd.f32 %v2039, %v1978
        %v2072 = vadd.f32 %v2040, %v1981
        %v2073 = vadd.f32 %v2041, %v1984
        %v2074 = vadd.f32 %v2042, %v1987
        %v2075 = vadd.f32 %v2043, %v1990
        %v2076 = vadd.f32 %v2044, %v1993
        %v2077 = vadd.f32 %v2045, %v1996
        %v2078 = vadd.f32 %v2046, %v1999
        %v2079 = vadd.f32 %v2047, %v2002
        %v2080 = vadd.f32 %v2048, %v2005
        %v2081 = vadd.f32 %v2049, %v2008
        %v2082 = vadd.f32 %v2050, %v2011
        %v2083 = vadd.f32 %v2051, %v2014
        %v2084 = vadd.f32 %v2052, %v2017
        %v2085 = vadd.f32 %v2053, %v2020
        %2086 = vst [vmem:[#allocation2] sm:$0xff] %v2054
        %2087 = vst [vmem:[#allocation2 + $0x8] sm:$0xff] %v2055
        %2088 = vst [vmem:[#allocation2 + $0x10] sm:$0xff] %v2056
        %2089 = vst [vmem:[#allocation2 + $0x18] sm:$0xff] %v2057
        %2090 = vst [vmem:[#allocation2 + $0x20] sm:$0xff] %v2058
        %2091 = vst [vmem:[#allocation2 + $0x28] sm:$0xff] %v2059
        %2092 = vst [vmem:[#allocation2 + $0x30] sm:$0xff] %v2060
        %2093 = vst [vmem:[#allocation2 + $0x38] sm:$0xff] %v2061
        %2094 = vst [vmem:[#allocation2 + $0x40] sm:$0xff] %v2062
        %2095 = vst [vmem:[#allocation2 + $0x48] sm:$0xff] %v2063
        %2096 = vst [vmem:[#allocation2 + $0x50] sm:$0xff] %v2064
        %2097 = vst [vmem:[#allocation2 + $0x58] sm:$0xff] %v2065
        %2098 = vst [vmem:[#allocation2 + $0x60] sm:$0xff] %v2066
        %2099 = vst [vmem:[#allocation2 + $0x68] sm:$0xff] %v2067
        %2100 = vst [vmem:[#allocation2 + $0x70] sm:$0xff] %v2068
        %2101 = vst [vmem:[#allocation2 + $0x78] sm:$0xff] %v2069
        %2102 = vst [vmem:[#allocation2 + $0x80] sm:$0xff] %v2070
        %2103 = vst [vmem:[#allocation2 + $0x88] sm:$0xff] %v2071
        %2104 = vst [vmem:[#allocation2 + $0x90] sm:$0xff] %v2072
        %2105 = vst [vmem:[#allocation2 + $0x98] sm:$0xff] %v2073
        %2106 = vst [vmem:[#allocation2 + $0xa0] sm:$0xff] %v2074
        %2107 = vst [vmem:[#allocation2 + $0xa8] sm:$0xff] %v2075
        %2108 = vst [vmem:[#allocation2 + $0xb0] sm:$0xff] %v2076
        %2109 = vst [vmem:[#allocation2 + $0xb8] sm:$0xff] %v2077
        %2110 = vst [vmem:[#allocation2 + $0xc0] sm:$0xff] %v2078
        %2111 = vst [vmem:[#allocation2 + $0xc8] sm:$0xff] %v2079
        %2112 = vst [vmem:[#allocation2 + $0xd0] sm:$0xff] %v2080
        %2113 = vst [vmem:[#allocation2 + $0xd8] sm:$0xff] %v2081
        %2114 = vst [vmem:[#allocation2 + $0xe0] sm:$0xff] %v2082
        %2115 = vst [vmem:[#allocation2 + $0xe8] sm:$0xff] %v2083
        %2116 = vst [vmem:[#allocation2 + $0xf0] sm:$0xff] %v2084
        %2117 = vst [vmem:[#allocation2 + $0xf8] sm:$0xff] %v2085
        %s2118 = scalar_lea.vmem %s1, 28
        %v2119 = vld [vmem:[%s2118] sm:$0xf]
        %v2121 = vrot.slane %v247, 1
        %v2122 = vrot.slane %v248, 1
        %v2123 = vsel %vm515, %v2121, %v2122
        %v2124 = vrot.slane %v249, 1
        %v2125 = vsel %vm515, %v2122, %v2124
        %v2126 = vsel %vm251, %v2123, 0
        %v2128 = vsel %vm251, %v2125, 0
        %v2131 = vsel %vm348, %v2119, 0
        %2133 = vmatpush.msra.mxu0 0.0
        %2134 = vmatpush.msra.mxu0 0.0
        %2135 = vmatpush.msra.mxu0 0.0
        %2136 = vmatpush.msra.mxu0 0.0
        %2137 = vmatpush.msra.mxu0 0.0
        %2138 = vmatpush.msra.mxu0 0.0
        %2139 = vmatpush.msra.mxu0 0.0
        %2140 = vmatpush.msra.mxu0 0.0
        %2141 = vmatpush.msra.mxu0 0.0
        %2142 = vmatpush.msra.mxu0 0.0
        %2143 = vmatpush.msra.mxu0 0.0
        %2144 = vmatpush.msra.mxu0 0.0
        %2145 = vmatpush.msra.mxu0 0.0
        %2146 = vmatpush.msra.mxu0 0.0
        %2147 = vmatpush.msra.mxu0 0.0
        %2148 = vmatpush.msra.mxu0 %v2131
        %2149 = vmatmul.f32.gmra.mxu0 %v604
        %v2150 = vpop.f32.mrf.mxu0
        %v2151 = vadd.f32 0.0, %v2150
        %2152 = vmatmul.f32.gmra.mxu0 %v606
        %v2153 = vpop.f32.mrf.mxu0
        %v2154 = vadd.f32 0.0, %v2153
        %2155 = vmatmul.f32.gmra.mxu0 %v608
        %v2156 = vpop.f32.mrf.mxu0
        %v2157 = vadd.f32 0.0, %v2156
        %2158 = vmatmul.f32.gmra.mxu0 %v610
        %v2159 = vpop.f32.mrf.mxu0
        %v2160 = vadd.f32 0.0, %v2159
        %2161 = vmatmul.f32.gmra.mxu0 %v612
        %v2162 = vpop.f32.mrf.mxu0
        %v2163 = vadd.f32 0.0, %v2162
        %2164 = vmatmul.f32.gmra.mxu0 %v614
        %v2165 = vpop.f32.mrf.mxu0
        %v2166 = vadd.f32 0.0, %v2165
        %2167 = vmatmul.f32.gmra.mxu0 %v616
        %v2168 = vpop.f32.mrf.mxu0
        %v2169 = vadd.f32 0.0, %v2168
        %2170 = vmatmul.f32.gmra.mxu0 %v618
        %v2171 = vpop.f32.mrf.mxu0
        %v2172 = vadd.f32 0.0, %v2171
        %2173 = vmatmul.f32.gmra.mxu0 %v620
        %v2174 = vpop.f32.mrf.mxu0
        %v2175 = vadd.f32 0.0, %v2174
        %2176 = vmatmul.f32.gmra.mxu0 %v622
        %v2177 = vpop.f32.mrf.mxu0
        %v2178 = vadd.f32 0.0, %v2177
        %2179 = vmatmul.f32.gmra.mxu0 %v624
        %v2180 = vpop.f32.mrf.mxu0
        %v2181 = vadd.f32 0.0, %v2180
        %2182 = vmatmul.f32.gmra.mxu0 %v626
        %v2183 = vpop.f32.mrf.mxu0
        %v2184 = vadd.f32 0.0, %v2183
        %2185 = vmatmul.f32.gmra.mxu0 %v628
        %v2186 = vpop.f32.mrf.mxu0
        %v2187 = vadd.f32 0.0, %v2186
        %2188 = vmatmul.f32.gmra.mxu0 %v630
        %v2189 = vpop.f32.mrf.mxu0
        %v2190 = vadd.f32 0.0, %v2189
        %2191 = vmatmul.f32.gmra.mxu0 %v632
        %v2192 = vpop.f32.mrf.mxu0
        %v2193 = vadd.f32 0.0, %v2192
        %2194 = vmatmul.f32.gmra.mxu0 %v634
        %v2195 = vpop.f32.mrf.mxu0
        %v2196 = vadd.f32 0.0, %v2195
        %2197 = vmatmul.f32.gmra.mxu0 %v636
        %v2198 = vpop.f32.mrf.mxu0
        %v2199 = vadd.f32 0.0, %v2198
        %2200 = vmatmul.f32.gmra.mxu0 %v638
        %v2201 = vpop.f32.mrf.mxu0
        %v2202 = vadd.f32 0.0, %v2201
        %2203 = vmatmul.f32.gmra.mxu0 %v640
        %v2204 = vpop.f32.mrf.mxu0
        %v2205 = vadd.f32 0.0, %v2204
        %2206 = vmatmul.f32.gmra.mxu0 %v642
        %v2207 = vpop.f32.mrf.mxu0
        %v2208 = vadd.f32 0.0, %v2207
        %2209 = vmatmul.f32.gmra.mxu0 %v644
        %v2210 = vpop.f32.mrf.mxu0
        %v2211 = vadd.f32 0.0, %v2210
        %2212 = vmatmul.f32.gmra.mxu0 %v646
        %v2213 = vpop.f32.mrf.mxu0
        %v2214 = vadd.f32 0.0, %v2213
        %2215 = vmatmul.f32.gmra.mxu0 %v648
        %v2216 = vpop.f32.mrf.mxu0
        %v2217 = vadd.f32 0.0, %v2216
        %2218 = vmatmul.f32.gmra.mxu0 %v650
        %v2219 = vpop.f32.mrf.mxu0
        %v2220 = vadd.f32 0.0, %v2219
        %2221 = vmatmul.f32.gmra.mxu0 %v652
        %v2222 = vpop.f32.mrf.mxu0
        %v2223 = vadd.f32 0.0, %v2222
        %2224 = vmatmul.f32.gmra.mxu0 %v654
        %v2225 = vpop.f32.mrf.mxu0
        %v2226 = vadd.f32 0.0, %v2225
        %2227 = vmatmul.f32.gmra.mxu0 %v656
        %v2228 = vpop.f32.mrf.mxu0
        %v2229 = vadd.f32 0.0, %v2228
        %2230 = vmatmul.f32.gmra.mxu0 %v658
        %v2231 = vpop.f32.mrf.mxu0
        %v2232 = vadd.f32 0.0, %v2231
        %2233 = vmatmul.f32.gmra.mxu0 %v1459
        %v2234 = vpop.f32.mrf.mxu0
        %v2235 = vadd.f32 0.0, %v2234
        %2236 = vmatmul.f32.gmra.mxu0 %v1461
        %v2237 = vpop.f32.mrf.mxu0
        %v2238 = vadd.f32 0.0, %v2237
        %2239 = vmatmul.f32.gmra.mxu0 %v2126
        %v2240 = vpop.f32.mrf.mxu0
        %v2241 = vadd.f32 0.0, %v2240
        %2242 = vmatmul.f32.gmra.mxu0 %v2128
        %v2243 = vpop.f32.mrf.mxu0
        %v2244 = vadd.f32 0.0, %v2243
        %2245 = vdwg.mxu0
        %v2246 = vld [vmem:[#allocation2] sm:$0xff]
        %v2247 = vld [vmem:[#allocation2 + $0x8] sm:$0xff]
        %v2248 = vld [vmem:[#allocation2 + $0x10] sm:$0xff]
        %v2249 = vld [vmem:[#allocation2 + $0x18] sm:$0xff]
        %v2250 = vld [vmem:[#allocation2 + $0x20] sm:$0xff]
        %v2251 = vld [vmem:[#allocation2 + $0x28] sm:$0xff]
        %v2252 = vld [vmem:[#allocation2 + $0x30] sm:$0xff]
        %v2253 = vld [vmem:[#allocation2 + $0x38] sm:$0xff]
        %v2254 = vld [vmem:[#allocation2 + $0x40] sm:$0xff]
        %v2255 = vld [vmem:[#allocation2 + $0x48] sm:$0xff]
        %v2256 = vld [vmem:[#allocation2 + $0x50] sm:$0xff]
        %v2257 = vld [vmem:[#allocation2 + $0x58] sm:$0xff]
        %v2258 = vld [vmem:[#allocation2 + $0x60] sm:$0xff]
        %v2259 = vld [vmem:[#allocation2 + $0x68] sm:$0xff]
        %v2260 = vld [vmem:[#allocation2 + $0x70] sm:$0xff]
        %v2261 = vld [vmem:[#allocation2 + $0x78] sm:$0xff]
        %v2262 = vld [vmem:[#allocation2 + $0x80] sm:$0xff]
        %v2263 = vld [vmem:[#allocation2 + $0x88] sm:$0xff]
        %v2264 = vld [vmem:[#allocation2 + $0x90] sm:$0xff]
        %v2265 = vld [vmem:[#allocation2 + $0x98] sm:$0xff]
        %v2266 = vld [vmem:[#allocation2 + $0xa0] sm:$0xff]
        %v2267 = vld [vmem:[#allocation2 + $0xa8] sm:$0xff]
        %v2268 = vld [vmem:[#allocation2 + $0xb0] sm:$0xff]
        %v2269 = vld [vmem:[#allocation2 + $0xb8] sm:$0xff]
        %v2270 = vld [vmem:[#allocation2 + $0xc0] sm:$0xff]
        %v2271 = vld [vmem:[#allocation2 + $0xc8] sm:$0xff]
        %v2272 = vld [vmem:[#allocation2 + $0xd0] sm:$0xff]
        %v2273 = vld [vmem:[#allocation2 + $0xd8] sm:$0xff]
        %v2274 = vld [vmem:[#allocation2 + $0xe0] sm:$0xff]
        %v2275 = vld [vmem:[#allocation2 + $0xe8] sm:$0xff]
        %v2276 = vld [vmem:[#allocation2 + $0xf0] sm:$0xff]
        %v2277 = vld [vmem:[#allocation2 + $0xf8] sm:$0xff]
        %v2278 = vadd.f32 %v2246, %v2151
        %v2279 = vadd.f32 %v2247, %v2154
        %v2280 = vadd.f32 %v2248, %v2157
        %v2281 = vadd.f32 %v2249, %v2160
        %v2282 = vadd.f32 %v2250, %v2163
        %v2283 = vadd.f32 %v2251, %v2166
        %v2284 = vadd.f32 %v2252, %v2169
        %v2285 = vadd.f32 %v2253, %v2172
        %v2286 = vadd.f32 %v2254, %v2175
        %v2287 = vadd.f32 %v2255, %v2178
        %v2288 = vadd.f32 %v2256, %v2181
        %v2289 = vadd.f32 %v2257, %v2184
        %v2290 = vadd.f32 %v2258, %v2187
        %v2291 = vadd.f32 %v2259, %v2190
        %v2292 = vadd.f32 %v2260, %v2193
        %v2293 = vadd.f32 %v2261, %v2196
        %v2294 = vadd.f32 %v2262, %v2199
        %v2295 = vadd.f32 %v2263, %v2202
        %v2296 = vadd.f32 %v2264, %v2205
        %v2297 = vadd.f32 %v2265, %v2208
        %v2298 = vadd.f32 %v2266, %v2211
        %v2299 = vadd.f32 %v2267, %v2214
        %v2300 = vadd.f32 %v2268, %v2217
        %v2301 = vadd.f32 %v2269, %v2220
        %v2302 = vadd.f32 %v2270, %v2223
        %v2303 = vadd.f32 %v2271, %v2226
        %v2304 = vadd.f32 %v2272, %v2229
        %v2305 = vadd.f32 %v2273, %v2232
        %v2306 = vadd.f32 %v2274, %v2235
        %v2307 = vadd.f32 %v2275, %v2238
        %v2308 = vadd.f32 %v2276, %v2241
        %v2309 = vadd.f32 %v2277, %v2244
        %2310 = vst [vmem:[#allocation2] sm:$0xff] %v2278
        %2311 = vst [vmem:[#allocation2 + $0x8] sm:$0xff] %v2279
        %2312 = vst [vmem:[#allocation2 + $0x10] sm:$0xff] %v2280
        %2313 = vst [vmem:[#allocation2 + $0x18] sm:$0xff] %v2281
        %2314 = vst [vmem:[#allocation2 + $0x20] sm:$0xff] %v2282
        %2315 = vst [vmem:[#allocation2 + $0x28] sm:$0xff] %v2283
        %2316 = vst [vmem:[#allocation2 + $0x30] sm:$0xff] %v2284
        %2317 = vst [vmem:[#allocation2 + $0x38] sm:$0xff] %v2285
        %2318 = vst [vmem:[#allocation2 + $0x40] sm:$0xff] %v2286
        %2319 = vst [vmem:[#allocation2 + $0x48] sm:$0xff] %v2287
        %2320 = vst [vmem:[#allocation2 + $0x50] sm:$0xff] %v2288
        %2321 = vst [vmem:[#allocation2 + $0x58] sm:$0xff] %v2289
        %2322 = vst [vmem:[#allocation2 + $0x60] sm:$0xff] %v2290
        %2323 = vst [vmem:[#allocation2 + $0x68] sm:$0xff] %v2291
        %2324 = vst [vmem:[#allocation2 + $0x70] sm:$0xff] %v2292
        %2325 = vst [vmem:[#allocation2 + $0x78] sm:$0xff] %v2293
        %2326 = vst [vmem:[#allocation2 + $0x80] sm:$0xff] %v2294
        %2327 = vst [vmem:[#allocation2 + $0x88] sm:$0xff] %v2295
        %2328 = vst [vmem:[#allocation2 + $0x90] sm:$0xff] %v2296
        %2329 = vst [vmem:[#allocation2 + $0x98] sm:$0xff] %v2297
        %2330 = vst [vmem:[#allocation2 + $0xa0] sm:$0xff] %v2298
        %2331 = vst [vmem:[#allocation2 + $0xa8] sm:$0xff] %v2299
        %2332 = vst [vmem:[#allocation2 + $0xb0] sm:$0xff] %v2300
        %2333 = vst [vmem:[#allocation2 + $0xb8] sm:$0xff] %v2301
        %2334 = vst [vmem:[#allocation2 + $0xc0] sm:$0xff] %v2302
        %2335 = vst [vmem:[#allocation2 + $0xc8] sm:$0xff] %v2303
        %2336 = vst [vmem:[#allocation2 + $0xd0] sm:$0xff] %v2304
        %2337 = vst [vmem:[#allocation2 + $0xd8] sm:$0xff] %v2305
        %2338 = vst [vmem:[#allocation2 + $0xe0] sm:$0xff] %v2306
        %2339 = vst [vmem:[#allocation2 + $0xe8] sm:$0xff] %v2307
        %2340 = vst [vmem:[#allocation2 + $0xf0] sm:$0xff] %v2308
        %2341 = vst [vmem:[#allocation2 + $0xf8] sm:$0xff] %v2309
        %s2342 = scalar_lea.vmem %s1, 32
        %v2343 = vld [vmem:[%s2342] sm:$0xf]
        %v2344 = vrot.slane %v247, 2
        %v2345 = vrot.slane %v248, 2
        %v2346 = vsel %vm874, %v2344, %v2345
        %v2347 = vrot.slane %v249, 2
        %v2348 = vsel %vm874, %v2345, %v2347
        %v2349 = vsel %vm251, %v2346, 0
        %v2351 = vsel %vm251, %v2348, 0
        %v2354 = vsel %vm348, %v2343, 0
        %2356 = vmatpush.msra.mxu0 0.0
        %2357 = vmatpush.msra.mxu0 0.0
        %2358 = vmatpush.msra.mxu0 0.0
        %2359 = vmatpush.msra.mxu0 0.0
        %2360 = vmatpush.msra.mxu0 0.0
        %2361 = vmatpush.msra.mxu0 0.0
        %2362 = vmatpush.msra.mxu0 0.0
        %2363 = vmatpush.msra.mxu0 0.0
        %2364 = vmatpush.msra.mxu0 0.0
        %2365 = vmatpush.msra.mxu0 0.0
        %2366 = vmatpush.msra.mxu0 0.0
        %2367 = vmatpush.msra.mxu0 0.0
        %2368 = vmatpush.msra.mxu0 0.0
        %2369 = vmatpush.msra.mxu0 0.0
        %2370 = vmatpush.msra.mxu0 0.0
        %2371 = vmatpush.msra.mxu0 %v2354
        %2372 = vmatmul.f32.gmra.mxu0 %v963
        %v2373 = vpop.f32.mrf.mxu0
        %v2374 = vadd.f32 0.0, %v2373
        %2375 = vmatmul.f32.gmra.mxu0 %v965
        %v2376 = vpop.f32.mrf.mxu0
        %v2377 = vadd.f32 0.0, %v2376
        %2378 = vmatmul.f32.gmra.mxu0 %v967
        %v2379 = vpop.f32.mrf.mxu0
        %v2380 = vadd.f32 0.0, %v2379
        %2381 = vmatmul.f32.gmra.mxu0 %v969
        %v2382 = vpop.f32.mrf.mxu0
        %v2383 = vadd.f32 0.0, %v2382
        %2384 = vmatmul.f32.gmra.mxu0 %v971
        %v2385 = vpop.f32.mrf.mxu0
        %v2386 = vadd.f32 0.0, %v2385
        %2387 = vmatmul.f32.gmra.mxu0 %v973
        %v2388 = vpop.f32.mrf.mxu0
        %v2389 = vadd.f32 0.0, %v2388
        %2390 = vmatmul.f32.gmra.mxu0 %v975
        %v2391 = vpop.f32.mrf.mxu0
        %v2392 = vadd.f32 0.0, %v2391
        %2393 = vmatmul.f32.gmra.mxu0 %v977
        %v2394 = vpop.f32.mrf.mxu0
        %v2395 = vadd.f32 0.0, %v2394
        %2396 = vmatmul.f32.gmra.mxu0 %v979
        %v2397 = vpop.f32.mrf.mxu0
        %v2398 = vadd.f32 0.0, %v2397
        %2399 = vmatmul.f32.gmra.mxu0 %v981
        %v2400 = vpop.f32.mrf.mxu0
        %v2401 = vadd.f32 0.0, %v2400
        %2402 = vmatmul.f32.gmra.mxu0 %v983
        %v2403 = vpop.f32.mrf.mxu0
        %v2404 = vadd.f32 0.0, %v2403
        %2405 = vmatmul.f32.gmra.mxu0 %v985
        %v2406 = vpop.f32.mrf.mxu0
        %v2407 = vadd.f32 0.0, %v2406
        %2408 = vmatmul.f32.gmra.mxu0 %v987
        %v2409 = vpop.f32.mrf.mxu0
        %v2410 = vadd.f32 0.0, %v2409
        %2411 = vmatmul.f32.gmra.mxu0 %v989
        %v2412 = vpop.f32.mrf.mxu0
        %v2413 = vadd.f32 0.0, %v2412
        %2414 = vmatmul.f32.gmra.mxu0 %v991
        %v2415 = vpop.f32.mrf.mxu0
        %v2416 = vadd.f32 0.0, %v2415
        %2417 = vmatmul.f32.gmra.mxu0 %v993
        %v2418 = vpop.f32.mrf.mxu0
        %v2419 = vadd.f32 0.0, %v2418
        %2420 = vmatmul.f32.gmra.mxu0 %v995
        %v2421 = vpop.f32.mrf.mxu0
        %v2422 = vadd.f32 0.0, %v2421
        %2423 = vmatmul.f32.gmra.mxu0 %v997
        %v2424 = vpop.f32.mrf.mxu0
        %v2425 = vadd.f32 0.0, %v2424
        %2426 = vmatmul.f32.gmra.mxu0 %v999
        %v2427 = vpop.f32.mrf.mxu0
        %v2428 = vadd.f32 0.0, %v2427
        %2429 = vmatmul.f32.gmra.mxu0 %v1001
        %v2430 = vpop.f32.mrf.mxu0
        %v2431 = vadd.f32 0.0, %v2430
        %2432 = vmatmul.f32.gmra.mxu0 %v1003
        %v2433 = vpop.f32.mrf.mxu0
        %v2434 = vadd.f32 0.0, %v2433
        %2435 = vmatmul.f32.gmra.mxu0 %v1005
        %v2436 = vpop.f32.mrf.mxu0
        %v2437 = vadd.f32 0.0, %v2436
        %2438 = vmatmul.f32.gmra.mxu0 %v1007
        %v2439 = vpop.f32.mrf.mxu0
        %v2440 = vadd.f32 0.0, %v2439
        %2441 = vmatmul.f32.gmra.mxu0 %v1009
        %v2442 = vpop.f32.mrf.mxu0
        %v2443 = vadd.f32 0.0, %v2442
        %2444 = vmatmul.f32.gmra.mxu0 %v1011
        %v2445 = vpop.f32.mrf.mxu0
        %v2446 = vadd.f32 0.0, %v2445
        %2447 = vmatmul.f32.gmra.mxu0 %v1013
        %v2448 = vpop.f32.mrf.mxu0
        %v2449 = vadd.f32 0.0, %v2448
        %2450 = vmatmul.f32.gmra.mxu0 %v1015
        %v2451 = vpop.f32.mrf.mxu0
        %v2452 = vadd.f32 0.0, %v2451
        %2453 = vmatmul.f32.gmra.mxu0 %v1017
        %v2454 = vpop.f32.mrf.mxu0
        %v2455 = vadd.f32 0.0, %v2454
        %2456 = vmatmul.f32.gmra.mxu0 %v1682
        %v2457 = vpop.f32.mrf.mxu0
        %v2458 = vadd.f32 0.0, %v2457
        %2459 = vmatmul.f32.gmra.mxu0 %v1684
        %v2460 = vpop.f32.mrf.mxu0
        %v2461 = vadd.f32 0.0, %v2460
        %2462 = vmatmul.f32.gmra.mxu0 %v2349
        %v2463 = vpop.f32.mrf.mxu0
        %v2464 = vadd.f32 0.0, %v2463
        %2465 = vmatmul.f32.gmra.mxu0 %v2351
        %v2466 = vpop.f32.mrf.mxu0
        %v2467 = vadd.f32 0.0, %v2466
        %2468 = vdwg.mxu0
        %v2469 = vld [vmem:[#allocation2] sm:$0xff]
        %v2470 = vld [vmem:[#allocation2 + $0x8] sm:$0xff]
        %v2471 = vld [vmem:[#allocation2 + $0x10] sm:$0xff]
        %v2472 = vld [vmem:[#allocation2 + $0x18] sm:$0xff]
        %v2473 = vld [vmem:[#allocation2 + $0x20] sm:$0xff]
        %v2474 = vld [vmem:[#allocation2 + $0x28] sm:$0xff]
        %v2475 = vld [vmem:[#allocation2 + $0x30] sm:$0xff]
        %v2476 = vld [vmem:[#allocation2 + $0x38] sm:$0xff]
        %v2477 = vld [vmem:[#allocation2 + $0x40] sm:$0xff]
        %v2478 = vld [vmem:[#allocation2 + $0x48] sm:$0xff]
        %v2479 = vld [vmem:[#allocation2 + $0x50] sm:$0xff]
        %v2480 = vld [vmem:[#allocation2 + $0x58] sm:$0xff]
        %v2481 = vld [vmem:[#allocation2 + $0x60] sm:$0xff]
        %v2482 = vld [vmem:[#allocation2 + $0x68] sm:$0xff]
        %v2483 = vld [vmem:[#allocation2 + $0x70] sm:$0xff]
        %v2484 = vld [vmem:[#allocation2 + $0x78] sm:$0xff]
        %v2485 = vld [vmem:[#allocation2 + $0x80] sm:$0xff]
        %v2486 = vld [vmem:[#allocation2 + $0x88] sm:$0xff]
        %v2487 = vld [vmem:[#allocation2 + $0x90] sm:$0xff]
        %v2488 = vld [vmem:[#allocation2 + $0x98] sm:$0xff]
        %v2489 = vld [vmem:[#allocation2 + $0xa0] sm:$0xff]
        %v2490 = vld [vmem:[#allocation2 + $0xa8] sm:$0xff]
        %v2491 = vld [vmem:[#allocation2 + $0xb0] sm:$0xff]
        %v2492 = vld [vmem:[#allocation2 + $0xb8] sm:$0xff]
        %v2493 = vld [vmem:[#allocation2 + $0xc0] sm:$0xff]
        %v2494 = vld [vmem:[#allocation2 + $0xc8] sm:$0xff]
        %v2495 = vld [vmem:[#allocation2 + $0xd0] sm:$0xff]
        %v2496 = vld [vmem:[#allocation2 + $0xd8] sm:$0xff]
        %v2497 = vld [vmem:[#allocation2 + $0xe0] sm:$0xff]
        %v2498 = vld [vmem:[#allocation2 + $0xe8] sm:$0xff]
        %v2499 = vld [vmem:[#allocation2 + $0xf0] sm:$0xff]
        %v2500 = vld [vmem:[#allocation2 + $0xf8] sm:$0xff]
        %v2501 = vadd.f32 %v2469, %v2374
        %v2502 = vadd.f32 %v2470, %v2377
        %v2503 = vadd.f32 %v2471, %v2380
        %v2504 = vadd.f32 %v2472, %v2383
        %v2505 = vadd.f32 %v2473, %v2386
        %v2506 = vadd.f32 %v2474, %v2389
        %v2507 = vadd.f32 %v2475, %v2392
        %v2508 = vadd.f32 %v2476, %v2395
        %v2509 = vadd.f32 %v2477, %v2398
        %v2510 = vadd.f32 %v2478, %v2401
        %v2511 = vadd.f32 %v2479, %v2404
        %v2512 = vadd.f32 %v2480, %v2407
        %v2513 = vadd.f32 %v2481, %v2410
        %v2514 = vadd.f32 %v2482, %v2413
        %v2515 = vadd.f32 %v2483, %v2416
        %v2516 = vadd.f32 %v2484, %v2419
        %v2517 = vadd.f32 %v2485, %v2422
        %v2518 = vadd.f32 %v2486, %v2425
        %v2519 = vadd.f32 %v2487, %v2428
        %v2520 = vadd.f32 %v2488, %v2431
        %v2521 = vadd.f32 %v2489, %v2434
        %v2522 = vadd.f32 %v2490, %v2437
        %v2523 = vadd.f32 %v2491, %v2440
        %v2524 = vadd.f32 %v2492, %v2443
        %v2525 = vadd.f32 %v2493, %v2446
        %v2526 = vadd.f32 %v2494, %v2449
        %v2527 = vadd.f32 %v2495, %v2452
        %v2528 = vadd.f32 %v2496, %v2455
        %v2529 = vadd.f32 %v2497, %v2458
        %v2530 = vadd.f32 %v2498, %v2461
        %v2531 = vadd.f32 %v2499, %v2464
        %v2532 = vadd.f32 %v2500, %v2467
        %2533 = vst [vmem:[#allocation2] sm:$0xff] %v2501
        %2534 = vst [vmem:[#allocation2 + $0x8] sm:$0xff] %v2502
        %2535 = vst [vmem:[#allocation2 + $0x10] sm:$0xff] %v2503
        %2536 = vst [vmem:[#allocation2 + $0x18] sm:$0xff] %v2504
        %2537 = vst [vmem:[#allocation2 + $0x20] sm:$0xff] %v2505
        %2538 = vst [vmem:[#allocation2 + $0x28] sm:$0xff] %v2506
        %2539 = vst [vmem:[#allocation2 + $0x30] sm:$0xff] %v2507
        %2540 = vst [vmem:[#allocation2 + $0x38] sm:$0xff] %v2508
        %2541 = vst [vmem:[#allocation2 + $0x40] sm:$0xff] %v2509
        %2542 = vst [vmem:[#allocation2 + $0x48] sm:$0xff] %v2510
        %2543 = vst [vmem:[#allocation2 + $0x50] sm:$0xff] %v2511
        %2544 = vst [vmem:[#allocation2 + $0x58] sm:$0xff] %v2512
        %2545 = vst [vmem:[#allocation2 + $0x60] sm:$0xff] %v2513
        %2546 = vst [vmem:[#allocation2 + $0x68] sm:$0xff] %v2514
        %2547 = vst [vmem:[#allocation2 + $0x70] sm:$0xff] %v2515
        %2548 = vst [vmem:[#allocation2 + $0x78] sm:$0xff] %v2516
        %2549 = vst [vmem:[#allocation2 + $0x80] sm:$0xff] %v2517
        %2550 = vst [vmem:[#allocation2 + $0x88] sm:$0xff] %v2518
        %2551 = vst [vmem:[#allocation2 + $0x90] sm:$0xff] %v2519
        %2552 = vst [vmem:[#allocation2 + $0x98] sm:$0xff] %v2520
        %2553 = vst [vmem:[#allocation2 + $0xa0] sm:$0xff] %v2521
        %2554 = vst [vmem:[#allocation2 + $0xa8] sm:$0xff] %v2522
        %2555 = vst [vmem:[#allocation2 + $0xb0] sm:$0xff] %v2523
        %2556 = vst [vmem:[#allocation2 + $0xb8] sm:$0xff] %v2524
        %2557 = vst [vmem:[#allocation2 + $0xc0] sm:$0xff] %v2525
        %2558 = vst [vmem:[#allocation2 + $0xc8] sm:$0xff] %v2526
        %2559 = vst [vmem:[#allocation2 + $0xd0] sm:$0xff] %v2527
        %2560 = vst [vmem:[#allocation2 + $0xd8] sm:$0xff] %v2528
        %2561 = vst [vmem:[#allocation2 + $0xe0] sm:$0xff] %v2529
        %2562 = vst [vmem:[#allocation2 + $0xe8] sm:$0xff] %v2530
        %2563 = vst [vmem:[#allocation2 + $0xf0] sm:$0xff] %v2531
        %2564 = vst [vmem:[#allocation2 + $0xf8] sm:$0xff] %v2532
        %v2565 = vld [vmem:[#allocation2] sm:$0xff]
        %v2566 = vld [vmem:[#allocation2 + $0x8] sm:$0xff]
        %v2567 = vld [vmem:[#allocation2 + $0x10] sm:$0xff]
        %v2568 = vld [vmem:[#allocation2 + $0x18] sm:$0xff]
        %v2569 = vld [vmem:[#allocation2 + $0x20] sm:$0xff]
        %v2570 = vld [vmem:[#allocation2 + $0x28] sm:$0xff]
        %v2571 = vld [vmem:[#allocation2 + $0x30] sm:$0xff]
        %v2572 = vld [vmem:[#allocation2 + $0x38] sm:$0xff]
        %v2573 = vld [vmem:[#allocation2 + $0x40] sm:$0xff]
        %v2574 = vld [vmem:[#allocation2 + $0x48] sm:$0xff]
        %v2575 = vld [vmem:[#allocation2 + $0x50] sm:$0xff]
        %v2576 = vld [vmem:[#allocation2 + $0x58] sm:$0xff]
        %v2577 = vld [vmem:[#allocation2 + $0x60] sm:$0xff]
        %v2578 = vld [vmem:[#allocation2 + $0x68] sm:$0xff]
        %v2579 = vld [vmem:[#allocation2 + $0x70] sm:$0xff]
        %v2580 = vld [vmem:[#allocation2 + $0x78] sm:$0xff]
        %v2581 = vld [vmem:[#allocation2 + $0x80] sm:$0xff]
        %v2582 = vld [vmem:[#allocation2 + $0x88] sm:$0xff]
        %v2583 = vld [vmem:[#allocation2 + $0x90] sm:$0xff]
        %v2584 = vld [vmem:[#allocation2 + $0x98] sm:$0xff]
        %v2585 = vld [vmem:[#allocation2 + $0xa0] sm:$0xff]
        %v2586 = vld [vmem:[#allocation2 + $0xa8] sm:$0xff]
        %v2587 = vld [vmem:[#allocation2 + $0xb0] sm:$0xff]
        %v2588 = vld [vmem:[#allocation2 + $0xb8] sm:$0xff]
        %v2589 = vld [vmem:[#allocation2 + $0xc0] sm:$0xff]
        %v2590 = vld [vmem:[#allocation2 + $0xc8] sm:$0xff]
        %v2591 = vld [vmem:[#allocation2 + $0xd0] sm:$0xff]
        %v2592 = vld [vmem:[#allocation2 + $0xd8] sm:$0xff]
        %v2593 = vld [vmem:[#allocation2 + $0xe0] sm:$0xff]
        %v2594 = vld [vmem:[#allocation2 + $0xe8] sm:$0xff]
        %v2595 = vld [vmem:[#allocation2 + $0xf0] sm:$0xff]
        %v2596 = vld [vmem:[#allocation2 + $0xf8] sm:$0xff]
        %v2597 = vadd.f32 %v2565, %v2566
        %v2598 = vadd.f32 %v2597, %v2567
        %v2599 = vadd.f32 %v2598, %v2568
        %v2600 = vadd.f32 %v2599, %v2569
        %v2601 = vadd.f32 %v2600, %v2570
        %v2602 = vadd.f32 %v2601, %v2571
        %v2603 = vadd.f32 %v2602, %v2572
        %v2604 = vadd.f32 %v2603, %v2573
        %v2605 = vadd.f32 %v2604, %v2574
        %v2606 = vadd.f32 %v2605, %v2575
        %v2607 = vadd.f32 %v2606, %v2576
        %v2608 = vadd.f32 %v2607, %v2577
        %v2609 = vadd.f32 %v2608, %v2578
        %v2610 = vadd.f32 %v2609, %v2579
        %v2611 = vadd.f32 %v2610, %v2580
        %v2612 = vadd.f32 %v2611, %v2581
        %v2613 = vadd.f32 %v2612, %v2582
        %v2614 = vadd.f32 %v2613, %v2583
        %v2615 = vadd.f32 %v2614, %v2584
        %v2616 = vadd.f32 %v2615, %v2585
        %v2617 = vadd.f32 %v2616, %v2586
        %v2618 = vadd.f32 %v2617, %v2587
        %v2619 = vadd.f32 %v2618, %v2588
        %v2620 = vadd.f32 %v2619, %v2589
        %v2621 = vadd.f32 %v2620, %v2590
        %v2622 = vadd.f32 %v2621, %v2591
        %v2623 = vadd.f32 %v2622, %v2592
        %v2624 = vadd.f32 %v2623, %v2593
        %v2625 = vadd.f32 %v2624, %v2594
        %v2626 = vadd.f32 %v2625, %v2595
        %v2627 = vadd.f32 %v2626, %v2596
        %v2628 = vrot.slane %v2627, 4
        %v2629 = vadd.f32 %v2627, %v2628
        %v2630 = vrot.slane %v2629, 2
        %v2631 = vadd.f32 %v2629, %v2630
        %v2632 = vrot.slane %v2631, 1
        %v2633 = vadd.f32 %v2631, %v2632
        %v2634 = vmul.f32 %v2565, %v2565
        %v2635 = vmul.f32 %v2566, %v2566
        %v2636 = vmul.f32 %v2567, %v2567
        %v2637 = vmul.f32 %v2568, %v2568
        %v2638 = vmul.f32 %v2569, %v2569
        %v2639 = vmul.f32 %v2570, %v2570
        %v2640 = vmul.f32 %v2571, %v2571
        %v2641 = vmul.f32 %v2572, %v2572
        %v2642 = vmul.f32 %v2573, %v2573
        %v2643 = vmul.f32 %v2574, %v2574
        %v2644 = vmul.f32 %v2575, %v2575
        %v2645 = vmul.f32 %v2576, %v2576
        %v2646 = vmul.f32 %v2577, %v2577
        %v2647 = vmul.f32 %v2578, %v2578
        %v2648 = vmul.f32 %v2579, %v2579
        %v2649 = vmul.f32 %v2580, %v2580
        %v2650 = vmul.f32 %v2581, %v2581
        %v2651 = vmul.f32 %v2582, %v2582
        %v2652 = vmul.f32 %v2583, %v2583
        %v2653 = vmul.f32 %v2584, %v2584
        %v2654 = vmul.f32 %v2585, %v2585
        %v2655 = vmul.f32 %v2586, %v2586
        %v2656 = vmul.f32 %v2587, %v2587
        %v2657 = vmul.f32 %v2588, %v2588
        %v2658 = vmul.f32 %v2589, %v2589
        %v2659 = vmul.f32 %v2590, %v2590
        %v2660 = vmul.f32 %v2591, %v2591
        %v2661 = vmul.f32 %v2592, %v2592
        %v2662 = vmul.f32 %v2593, %v2593
        %v2663 = vmul.f32 %v2594, %v2594
        %v2664 = vmul.f32 %v2595, %v2595
        %v2665 = vmul.f32 %v2596, %v2596
        %v2666 = vadd.f32 %v2634, %v2635
        %v2667 = vadd.f32 %v2666, %v2636
        %v2668 = vadd.f32 %v2667, %v2637
        %v2669 = vadd.f32 %v2668, %v2638
        %v2670 = vadd.f32 %v2669, %v2639
        %v2671 = vadd.f32 %v2670, %v2640
        %v2672 = vadd.f32 %v2671, %v2641
        %v2673 = vadd.f32 %v2672, %v2642
        %v2674 = vadd.f32 %v2673, %v2643
        %v2675 = vadd.f32 %v2674, %v2644
        %v2676 = vadd.f32 %v2675, %v2645
        %v2677 = vadd.f32 %v2676, %v2646
        %v2678 = vadd.f32 %v2677, %v2647
        %v2679 = vadd.f32 %v2678, %v2648
        %v2680 = vadd.f32 %v2679, %v2649
        %v2681 = vadd.f32 %v2680, %v2650
        %v2682 = vadd.f32 %v2681, %v2651
        %v2683 = vadd.f32 %v2682, %v2652
        %v2684 = vadd.f32 %v2683, %v2653
        %v2685 = vadd.f32 %v2684, %v2654
        %v2686 = vadd.f32 %v2685, %v2655
        %v2687 = vadd.f32 %v2686, %v2656
        %v2688 = vadd.f32 %v2687, %v2657
        %v2689 = vadd.f32 %v2688, %v2658
        %v2690 = vadd.f32 %v2689, %v2659
        %v2691 = vadd.f32 %v2690, %v2660
        %v2692 = vadd.f32 %v2691, %v2661
        %v2693 = vadd.f32 %v2692, %v2662
        %v2694 = vadd.f32 %v2693, %v2663
        %v2695 = vadd.f32 %v2694, %v2664
        %v2696 = vadd.f32 %v2695, %v2665
        %v2697 = vrot.slane %v2696, 4
        %v2698 = vadd.f32 %v2696, %v2697
        %v2699 = vrot.slane %v2698, 2
        %v2700 = vadd.f32 %v2698, %v2699
        %v2701 = vrot.slane %v2700, 1
        %v2702 = vadd.f32 %v2700, %v2701
        %v2703 = vmul.f32 %v2633, 0.00390625
        %v2704 = vmul.f32 %v2702, 0.00390625
        %v2705 = vmul.f32 %v2703, %v2703
        %v2706 = vsub.f32 %v2704, %v2705
        %v2707 = vld [vmem:[%s2] sm:$0x1]
        %v2708 = vadd.f32 %v2706, 1e-05
        %v2709 = vrsqrt.pop %v2708
        %v2710 = vmul.f32 %v2709, %v2708
        %v2711 = vmul.f32 %v2710, %v2709
        %v2712 = vmul.f32 0.5, %v2711
        %v2713 = vsub.f32 1.5, %v2712
        %v2714 = vmul.f32 %v2709, %v2713
        %vm2715 = vweird.f32 %v2708
        %vm2716 = vweird.f32 %v2709
        %vm2717 = vmor %vm2715, %vm2716
        %v2718 = vsel %vm2717, %v2709, %v2714
        %v2719 = vmul.f32 %v2707, %v2718
        %v2720 = vld [vmem:[%s3] sm:$0x1]
        %v2721 = vmul.f32 %v2703, %v2719
        %v2722 = vsub.f32 %v2720, %v2721
        %v2724 = vperm.slane %v2719, 0
        %v2726 = vmul.f32 %v2565, %v2724
        %v2727 = vmul.f32 %v2566, %v2724
        %v2728 = vmul.f32 %v2567, %v2724
        %v2729 = vmul.f32 %v2568, %v2724
        %v2730 = vmul.f32 %v2569, %v2724
        %v2731 = vmul.f32 %v2570, %v2724
        %v2732 = vmul.f32 %v2571, %v2724
        %v2733 = vmul.f32 %v2572, %v2724
        %v2734 = vmul.f32 %v2573, %v2724
        %v2735 = vmul.f32 %v2574, %v2724
        %v2736 = vmul.f32 %v2575, %v2724
        %v2737 = vmul.f32 %v2576, %v2724
        %v2738 = vmul.f32 %v2577, %v2724
        %v2739 = vmul.f32 %v2578, %v2724
        %v2740 = vmul.f32 %v2579, %v2724
        %v2741 = vmul.f32 %v2580, %v2724
        %v2742 = vmul.f32 %v2581, %v2724
        %v2743 = vmul.f32 %v2582, %v2724
        %v2744 = vmul.f32 %v2583, %v2724
        %v2745 = vmul.f32 %v2584, %v2724
        %v2746 = vmul.f32 %v2585, %v2724
        %v2747 = vmul.f32 %v2586, %v2724
        %v2748 = vmul.f32 %v2587, %v2724
        %v2749 = vmul.f32 %v2588, %v2724
        %v2750 = vmul.f32 %v2589, %v2724
        %v2751 = vmul.f32 %v2590, %v2724
        %v2752 = vmul.f32 %v2591, %v2724
        %v2753 = vmul.f32 %v2592, %v2724
        %v2754 = vmul.f32 %v2593, %v2724
        %v2755 = vmul.f32 %v2594, %v2724
        %v2756 = vmul.f32 %v2595, %v2724
        %v2757 = vmul.f32 %v2596, %v2724
        %v2759 = vperm.slane %v2722, 0
        %v2761 = vadd.f32 %v2726, %v2759
        %v2762 = vadd.f32 %v2727, %v2759
        %v2763 = vadd.f32 %v2728, %v2759
        %v2764 = vadd.f32 %v2729, %v2759
        %v2765 = vadd.f32 %v2730, %v2759
        %v2766 = vadd.f32 %v2731, %v2759
        %v2767 = vadd.f32 %v2732, %v2759
        %v2768 = vadd.f32 %v2733, %v2759
        %v2769 = vadd.f32 %v2734, %v2759
        %v2770 = vadd.f32 %v2735, %v2759
        %v2771 = vadd.f32 %v2736, %v2759
        %v2772 = vadd.f32 %v2737, %v2759
        %v2773 = vadd.f32 %v2738, %v2759
        %v2774 = vadd.f32 %v2739, %v2759
        %v2775 = vadd.f32 %v2740, %v2759
        %v2776 = vadd.f32 %v2741, %v2759
        %v2777 = vadd.f32 %v2742, %v2759
        %v2778 = vadd.f32 %v2743, %v2759
        %v2779 = vadd.f32 %v2744, %v2759
        %v2780 = vadd.f32 %v2745, %v2759
        %v2781 = vadd.f32 %v2746, %v2759
        %v2782 = vadd.f32 %v2747, %v2759
        %v2783 = vadd.f32 %v2748, %v2759
        %v2784 = vadd.f32 %v2749, %v2759
        %v2785 = vadd.f32 %v2750, %v2759
        %v2786 = vadd.f32 %v2751, %v2759
        %v2787 = vadd.f32 %v2752, %v2759
        %v2788 = vadd.f32 %v2753, %v2759
        %v2789 = vadd.f32 %v2754, %v2759
        %v2790 = vadd.f32 %v2755, %v2759
        %v2791 = vadd.f32 %v2756, %v2759
        %v2792 = vadd.f32 %v2757, %v2759
        %vm2793 = vcmp.ge.f32.partialorder %v2761, 0.0
        %vm2794 = vcmp.ge.f32.partialorder %v2762, 0.0
        %vm2795 = vcmp.ge.f32.partialorder %v2763, 0.0
        %vm2796 = vcmp.ge.f32.partialorder %v2764, 0.0
        %vm2797 = vcmp.ge.f32.partialorder %v2765, 0.0
        %vm2798 = vcmp.ge.f32.partialorder %v2766, 0.0
        %vm2799 = vcmp.ge.f32.partialorder %v2767, 0.0
        %vm2800 = vcmp.ge.f32.partialorder %v2768, 0.0
        %vm2801 = vcmp.ge.f32.partialorder %v2769, 0.0
        %vm2802 = vcmp.ge.f32.partialorder %v2770, 0.0
        %vm2803 = vcmp.ge.f32.partialorder %v2771, 0.0
        %vm2804 = vcmp.ge.f32.partialorder %v2772, 0.0
        %vm2805 = vcmp.ge.f32.partialorder %v2773, 0.0
        %vm2806 = vcmp.ge.f32.partialorder %v2774, 0.0
        %vm2807 = vcmp.ge.f32.partialorder %v2775, 0.0
        %vm2808 = vcmp.ge.f32.partialorder %v2776, 0.0
        %vm2809 = vcmp.ge.f32.partialorder %v2777, 0.0
        %vm2810 = vcmp.ge.f32.partialorder %v2778, 0.0
        %vm2811 = vcmp.ge.f32.partialorder %v2779, 0.0
        %vm2812 = vcmp.ge.f32.partialorder %v2780, 0.0
        %vm2813 = vcmp.ge.f32.partialorder %v2781, 0.0
        %vm2814 = vcmp.ge.f32.partialorder %v2782, 0.0
        %vm2815 = vcmp.ge.f32.partialorder %v2783, 0.0
        %vm2816 = vcmp.ge.f32.partialorder %v2784, 0.0
        %vm2817 = vcmp.ge.f32.partialorder %v2785, 0.0
        %vm2818 = vcmp.ge.f32.partialorder %v2786, 0.0
        %vm2819 = vcmp.ge.f32.partialorder %v2787, 0.0
        %vm2820 = vcmp.ge.f32.partialorder %v2788, 0.0
        %vm2821 = vcmp.ge.f32.partialorder %v2789, 0.0
        %vm2822 = vcmp.ge.f32.partialorder %v2790, 0.0
        %vm2823 = vcmp.ge.f32.partialorder %v2791, 0.0
        %vm2824 = vcmp.ge.f32.partialorder %v2792, 0.0
        %v2825 = vmul.f32 %v2761, 0.2
        %v2826 = vmul.f32 %v2762, 0.2
        %v2827 = vmul.f32 %v2763, 0.2
        %v2828 = vmul.f32 %v2764, 0.2
        %v2829 = vmul.f32 %v2765, 0.2
        %v2830 = vmul.f32 %v2766, 0.2
        %v2831 = vmul.f32 %v2767, 0.2
        %v2832 = vmul.f32 %v2768, 0.2
        %v2833 = vmul.f32 %v2769, 0.2
        %v2834 = vmul.f32 %v2770, 0.2
        %v2835 = vmul.f32 %v2771, 0.2
        %v2836 = vmul.f32 %v2772, 0.2
        %v2837 = vmul.f32 %v2773, 0.2
        %v2838 = vmul.f32 %v2774, 0.2
        %v2839 = vmul.f32 %v2775, 0.2
        %v2840 = vmul.f32 %v2776, 0.2
        %v2841 = vmul.f32 %v2777, 0.2
        %v2842 = vmul.f32 %v2778, 0.2
        %v2843 = vmul.f32 %v2779, 0.2
        %v2844 = vmul.f32 %v2780, 0.2
        %v2845 = vmul.f32 %v2781, 0.2
        %v2846 = vmul.f32 %v2782, 0.2
        %v2847 = vmul.f32 %v2783, 0.2
        %v2848 = vmul.f32 %v2784, 0.2
        %v2849 = vmul.f32 %v2785, 0.2
        %v2850 = vmul.f32 %v2786, 0.2
        %v2851 = vmul.f32 %v2787, 0.2
        %v2852 = vmul.f32 %v2788, 0.2
        %v2853 = vmul.f32 %v2789, 0.2
        %v2854 = vmul.f32 %v2790, 0.2
        %v2855 = vmul.f32 %v2791, 0.2
        %v2856 = vmul.f32 %v2792, 0.2
        %v2857 = vsel %vm2793, %v2761, %v2825
        %v2858 = vsel %vm2794, %v2762, %v2826
        %v2859 = vsel %vm2795, %v2763, %v2827
        %v2860 = vsel %vm2796, %v2764, %v2828
        %v2861 = vsel %vm2797, %v2765, %v2829
        %v2862 = vsel %vm2798, %v2766, %v2830
        %v2863 = vsel %vm2799, %v2767, %v2831
        %v2864 = vsel %vm2800, %v2768, %v2832
        %v2865 = vsel %vm2801, %v2769, %v2833
        %v2866 = vsel %vm2802, %v2770, %v2834
        %v2867 = vsel %vm2803, %v2771, %v2835
        %v2868 = vsel %vm2804, %v2772, %v2836
        %v2869 = vsel %vm2805, %v2773, %v2837
        %v2870 = vsel %vm2806, %v2774, %v2838
        %v2871 = vsel %vm2807, %v2775, %v2839
        %v2872 = vsel %vm2808, %v2776, %v2840
        %v2873 = vsel %vm2809, %v2777, %v2841
        %v2874 = vsel %vm2810, %v2778, %v2842
        %v2875 = vsel %vm2811, %v2779, %v2843
        %v2876 = vsel %vm2812, %v2780, %v2844
        %v2877 = vsel %vm2813, %v2781, %v2845
        %v2878 = vsel %vm2814, %v2782, %v2846
        %v2879 = vsel %vm2815, %v2783, %v2847
        %v2880 = vsel %vm2816, %v2784, %v2848
        %v2881 = vsel %vm2817, %v2785, %v2849
        %v2882 = vsel %vm2818, %v2786, %v2850
        %v2883 = vsel %vm2819, %v2787, %v2851
        %v2884 = vsel %vm2820, %v2788, %v2852
        %v2885 = vsel %vm2821, %v2789, %v2853
        %v2886 = vsel %vm2822, %v2790, %v2854
        %v2887 = vsel %vm2823, %v2791, %v2855
        %v2888 = vsel %vm2824, %v2792, %v2856
        %2889 = vst [vmem:[%s190] sm:$0xff] %v2857
        %2890 = vst [vmem:[%s190 + $0x8] sm:$0xff] %v2858
        %2891 = vst [vmem:[%s190 + $0x10] sm:$0xff] %v2859
        %2892 = vst [vmem:[%s190 + $0x18] sm:$0xff] %v2860
        %2893 = vst [vmem:[%s190 + $0x20] sm:$0xff] %v2861
        %2894 = vst [vmem:[%s190 + $0x28] sm:$0xff] %v2862
        %2895 = vst [vmem:[%s190 + $0x30] sm:$0xff] %v2863
        %2896 = vst [vmem:[%s190 + $0x38] sm:$0xff] %v2864
        %2897 = vst [vmem:[%s190 + $0x40] sm:$0xff] %v2865
        %2898 = vst [vmem:[%s190 + $0x48] sm:$0xff] %v2866
        %2899 = vst [vmem:[%s190 + $0x50] sm:$0xff] %v2867
        %2900 = vst [vmem:[%s190 + $0x58] sm:$0xff] %v2868
        %2901 = vst [vmem:[%s190 + $0x60] sm:$0xff] %v2869
        %2902 = vst [vmem:[%s190 + $0x68] sm:$0xff] %v2870
        %2903 = vst [vmem:[%s190 + $0x70] sm:$0xff] %v2871
        %2904 = vst [vmem:[%s190 + $0x78] sm:$0xff] %v2872
        %2905 = vst [vmem:[%s190 + $0x80] sm:$0xff] %v2873
        %2906 = vst [vmem:[%s190 + $0x88] sm:$0xff] %v2874
        %2907 = vst [vmem:[%s190 + $0x90] sm:$0xff] %v2875
        %2908 = vst [vmem:[%s190 + $0x98] sm:$0xff] %v2876
        %2909 = vst [vmem:[%s190 + $0xa0] sm:$0xff] %v2877
        %2910 = vst [vmem:[%s190 + $0xa8] sm:$0xff] %v2878
        %2911 = vst [vmem:[%s190 + $0xb0] sm:$0xff] %v2879
        %2912 = vst [vmem:[%s190 + $0xb8] sm:$0xff] %v2880
        %2913 = vst [vmem:[%s190 + $0xc0] sm:$0xff] %v2881
        %2914 = vst [vmem:[%s190 + $0xc8] sm:$0xff] %v2882
        %2915 = vst [vmem:[%s190 + $0xd0] sm:$0xff] %v2883
        %2916 = vst [vmem:[%s190 + $0xd8] sm:$0xff] %v2884
        %2917 = vst [vmem:[%s190 + $0xe0] sm:$0xff] %v2885
        %2918 = vst [vmem:[%s190 + $0xe8] sm:$0xff] %v2886
        %2919 = vst [vmem:[%s190 + $0xf0] sm:$0xff] %v2887
        %2920 = vst [vmem:[%s190 + $0xf8] sm:$0xff] %v2888
        %s2921 = sand.u32 %s115, 1
        %s2922 = scalar_lea.sflag [#allocation4], %s2921
        %s2923 = sand.u32 %s115, 1
        %s2924 = smul.addr %s2923, 256
        %s2925 = scalar_lea.vmem [#allocation3], %s2924
        // Predicated region
        $region37: #{tpu_custom_call.1} parent=35 // pred_check
          %p2926 = pneg %p125
        $region38: #{tpu_custom_call.1} parent=35 // pred_check_branch
          %2928 = sbr.rel (%p2926) target = $region40
        $region39: #{tpu_custom_call.1} parent=35 // pred_region
          %2930 = vsyncadd %s2922, 0
          %s2931 = smul.addr %s18, 32
          %s2932 = smul.addr %s2931, 8
          %s2933 = scalar_lea.hbm %s4, %s2932
          %s2934 = sshll.u32 %s2925, 4
          %s2935 = int_to_ptr.vmem [resolvable:$true] %s2934
          %s2936 = sshll.u32 %s2933, 4
          %s2937 = int_to_ptr.hbm [resolvable:$true] %s2936
          %2942 = dma.vmem_to_hbm [thread:$0]  %s2935, 4096, %s2937, %s2922, 128, 128, 8
        $region40: #{tpu_custom_call.1} parent=35 // pred_fallthru
          _
      $region36: #{tpu_custom_call.1} parent=5 // pred_fallthru
        _
      %p2943 = scmp.le.s32.totalorder 2, %s13
      // Predicated region
      $region41: #{tpu_custom_call.1} parent=5 // pred_check
        %p2944 = pneg %p2943
      $region42: #{tpu_custom_call.1} parent=5 // pred_check_branch
        %2946 = sbr.rel (%p2944) target = $region44
      $region43: #{tpu_custom_call.1} parent=5 // pred_region
        %s2947 = ssub.s32 %s13, 2
        // Predicated region
        $region45: #{tpu_custom_call.1} parent=43 // pred_check
          %p2948 = pneg %p131
        $region46: #{tpu_custom_call.1} parent=43 // pred_check_branch
          %2950 = sbr.rel (%p2948) target = $region48
        $region47: #{tpu_custom_call.1} parent=43 // pred_region
          %s2951 = sand.u32 %s116, 1
          %s2952 = scalar_lea.sflag [#allocation4], %s2951
          %s2953 = sand.u32 %s116, 1
          %s2954 = smul.addr %s2953, 256
          %s2955 = scalar_lea.vmem [#allocation3], %s2954
          %2957 = dma.done %s2952, 4096
        $region48: #{tpu_custom_call.1} parent=43 // pred_fallthru
          _
      $region44: #{tpu_custom_call.1} parent=5 // pred_fallthru
        _
    $region6: #{tpu_custom_call.1} parent=1 // loop_footer
      %s17 = sadd.s32 1, %s13
    $region7: #{tpu_custom_call.1} parent=1 // loop_footer_branch
      %12 = sbr.rel target = $region3
    $region8: #{tpu_custom_call.1} parent=1 // loop_exit
      _
    %2958 = vsyncpa [#allocation4], 1
    %s2959 = scalar_lea.sflag [#allocation4], 1
    %2960 = vsyncpa %s2959, 1

</llo_original>
